<compile_context>
chip_gen: v7x
topology: tpu7x:2x2x1
jax: 0.10.0
libtpu: 0.0.40
codegen_flags: <defaults>
</compile_context>

<pallas_src>
import jax
import jax.numpy as jnp
from jax.experimental import pallas as pl
from jax.experimental.pallas import tpu as pltpu

INPUT_SIZE = 32
HIDDEN_SIZE = 64
NUM_LAYERS = 2          # hard-coded as two explicit stacked layers in the kernel
NUM_CLASSES = 11
HP = 128                # hidden size zero-padded per gate to one full lane tile
GP = 4 * HP             # padded gate width, layout [i | f | o | g]
C_PAD = 128             # FC output padded to a full lane tile (sliced in wrapper)


def _lstm_fc_kernel(x_ref,                         # (T, Bp, I)    f32
                    wih0_ref,                      # (I,  GP)
                    whh0_ref,                      # (HP, GP)
                    b0_ref,                        # (1,  GP)   folded b_ih0+b_hh0
                    wih1_ref,                      # (HP, GP)
                    whh1_ref,                      # (HP, GP)
                    b1_ref,                        # (1,  GP)   folded b_ih1+b_hh1
                    wfc_ref,                       # (HP, C_PAD)
                    bfc_ref,                       # (1,  C_PAD)
                    out_ref,                       # (Bp, C_PAD)
                    gx_ref):                       # scratch (T*Bp, GP)
    T, B, I = x_ref.shape
    hp = whh0_ref.shape[0]

    # ---- layer-0 bulk input projection (independent of the serial chain) -----
    x_flat = x_ref[...].reshape(T * B, I)
    gx_ref[...] = (jnp.dot(x_flat, wih0_ref[...], preferred_element_type=jnp.float32)
                   + b0_ref[...])

    whh0 = whh0_ref[...]
    wih1 = wih1_ref[...]
    whh1 = whh1_ref[...]
    b1 = b1_ref[...]

    def cell(gates, c):
        # gate layout [i | f | o | g], each hp lanes wide -> vreg-aligned slices.
        # sigmoid(x) == 0.5*tanh(0.5*x)+0.5 : one EUP slab for i,f,o.
        sig = 0.5 * jnp.tanh(0.5 * gates[:, :3 * hp]) + 0.5
        g_g = jnp.tanh(gates[:, 3 * hp:])
        i_g = sig[:, :hp]
        f_g = sig[:, hp:2 * hp]
        o_g = sig[:, 2 * hp:]
        c_new = f_g * c + i_g * g_g
        h_new = o_g * jnp.tanh(c_new)
        return h_new, c_new

    h0 = jnp.zeros((B, hp), jnp.float32)
    c0 = jnp.zeros((B, hp), jnp.float32)
    h1 = jnp.zeros((B, hp), jnp.float32)
    c1 = jnp.zeros((B, hp), jnp.float32)

    # ---- wavefront recurrence: layer-0 step t, then layer-1 step t ------------
    # T is static & small -> full Python unroll (LLO sees across steps).
    for t in range(T):
        g0 = gx_ref[pl.ds(t * B, B), :] + jnp.dot(
            h0, whh0, preferred_element_type=jnp.float32)
        h0, c0 = cell(g0, c0)
        g1 = (jnp.dot(h0, wih1, preferred_element_type=jnp.float32)
              + jnp.dot(h1, whh1, preferred_element_type=jnp.float32)
              + b1)
        h1, c1 = cell(g1, c1)

    # ---- fc on the last timestep's top-layer hidden state (lane-padded) ------
    out_ref[...] = (jnp.dot(h1, wfc_ref[...], preferred_element_type=jnp.float32)
                    + bfc_ref[...])


@jax.jit
def eeg_lstm_forward(x, kp):
    """x: (B, T, input_size) float32  ->  (B, num_classes) float32."""
    B, T, _ = x.shape
    B_pad = ((B + 7) // 8) * 8                              # sublane-aligned batch
    x_tm = jnp.transpose(x, (1, 0, 2)).astype(jnp.float32)  # (T, B, I) time-major
    if B_pad != B:
        x_tm = jnp.pad(x_tm, ((0, 0), (0, B_pad - B), (0, 0)))

    vmem_spec = pl.BlockSpec(memory_space=pltpu.MemorySpace.VMEM)
    out = pl.pallas_call(
        _lstm_fc_kernel,
        out_shape=jax.ShapeDtypeStruct((B_pad, C_PAD), jnp.float32),
        in_specs=[vmem_spec] * 9,
        out_specs=vmem_spec,
        scratch_shapes=[
            pltpu.VMEM((T * B_pad, GP), jnp.float32),   # layer-0 gate pre-acts
        ],
    )(x_tm,
      kp["w_ih0_t"], kp["w_hh0_t"], kp["b0"],
      kp["w_ih1_t"], kp["w_hh1_t"], kp["b1"],
      kp["w_fc_t"], kp["b_fc"])
    return out[:B, :NUM_CLASSES]


# ----------------------------- parameter plumbing -----------------------------

def init_raw_params(key):
    """PyTorch-shaped params with torch-default-like uniform init."""
    bound = 1.0 / jnp.sqrt(jnp.float32(HIDDEN_SIZE))
    ks = jax.random.split(key, 10)

    def u(k, shape):
        return jax.random.uniform(k, shape, jnp.float32, -bound, bound)

    return {
        "w_ih0": u(ks[0], (4 * HIDDEN_SIZE, INPUT_SIZE)),
        "w_hh0": u(ks[1], (4 * HIDDEN_SIZE, HIDDEN_SIZE)),
        "b_ih0": u(ks[2], (4 * HIDDEN_SIZE,)),
        "b_hh0": u(ks[3], (4 * HIDDEN_SIZE,)),
        "w_ih1": u(ks[4], (4 * HIDDEN_SIZE, HIDDEN_SIZE)),
        "w_hh1": u(ks[5], (4 * HIDDEN_SIZE, HIDDEN_SIZE)),
        "b_ih1": u(ks[6], (4 * HIDDEN_SIZE,)),
        "b_hh1": u(ks[7], (4 * HIDDEN_SIZE,)),
        "w_fc": u(ks[8], (NUM_CLASSES, HIDDEN_SIZE)),
        "b_fc": u(ks[9], (NUM_CLASSES,)),
    }


def _perm_pad_gate_rows(w):
    """(4H, K) torch order [i|f|g|o] -> (4*HP, K) order [i|f|o|g], each gate 0-padded H->HP."""
    H = HIDDEN_SIZE
    K = w.shape[1]
    w4 = w.reshape(4, H, K)
    w4 = jnp.stack([w4[0], w4[1], w4[3], w4[2]])           # i, f, o, g
    w4 = jnp.pad(w4, ((0, 0), (0, HP - H), (0, 0)))
    return w4.reshape(4 * HP, K)


def _perm_pad_gate_bias(b):
    """(4H,) torch order -> (1, 4*HP) [i|f|o|g] with per-gate zero padding."""
    H = HIDDEN_SIZE
    b4 = b.reshape(4, H)
    b4 = jnp.stack([b4[0], b4[1], b4[3], b4[2]])
    b4 = jnp.pad(b4, ((0, 0), (0, HP - H)))
    return b4.reshape(1, 4 * HP)


def _pad_contraction_rows(w_t, rows):
    """Zero-pad the contraction (row) dim of an activation@W weight."""
    return jnp.pad(w_t, ((0, rows - w_t.shape[0]), (0, 0)))


def prepare_kernel_params(raw):
    """Transpose to activation@W form, reorder gates, pad to vreg-aligned lanes,
    fold biases, pad FC lanes.  All padding is zeros, so padded c/h lanes stay 0."""
    H = HIDDEN_SIZE
    w_fc_t = jnp.pad(raw["w_fc"].T, ((0, HP - H), (0, C_PAD - NUM_CLASSES)))   # (HP, C_PAD)
    b_fc = jnp.pad(raw["b_fc"], (0, C_PAD - NUM_CLASSES)).reshape(1, -1)       # (1, C_PAD)
    return {
        "w_ih0_t": _perm_pad_gate_rows(raw["w_ih0"]).T,                               # (I,  GP)
        "w_hh0_t": _pad_contraction_rows(_perm_pad_gate_rows(raw["w_hh0"]).T, HP),    # (HP, GP)
        "b0": _perm_pad_gate_bias(raw["b_ih0"] + raw["b_hh0"]),                       # (1,  GP)
        "w_ih1_t": _pad_contraction_rows(_perm_pad_gate_rows(raw["w_ih1"]).T, HP),    # (HP, GP)
        "w_hh1_t": _pad_contraction_rows(_perm_pad_gate_rows(raw["w_hh1"]).T, HP),    # (HP, GP)
        "b1": _perm_pad_gate_bias(raw["b_ih1"] + raw["b_hh1"]),                       # (1,  GP)
        "w_fc_t": w_fc_t,
        "b_fc": b_fc,
    }


def reference_forward(x, raw):
    """Pure-JAX reference mirroring torch.nn.LSTM(batch_first) + Linear (PyTorch gate order)."""
    B, T, _ = x.shape
    H = HIDDEN_SIZE

    def cell(x_t, h, c, w_ih, w_hh, b_ih, b_hh):
        g = x_t @ w_ih.T + h @ w_hh.T + b_ih + b_hh
        i = jax.nn.sigmoid(g[:, 0 * H:1 * H])
        f = jax.nn.sigmoid(g[:, 1 * H:2 * H])
        gg = jnp.tanh(g[:, 2 * H:3 * H])
        o = jax.nn.sigmoid(g[:, 3 * H:4 * H])
        c = f * c + i * gg
        h = o * jnp.tanh(c)
        return h, c

    h0 = c0 = h1 = c1 = jnp.zeros((B, H), jnp.float32)
    for t in range(T):
        h0, c0 = cell(x[:, t, :], h0, c0, raw["w_ih0"], raw["w_hh0"], raw["b_ih0"], raw["b_hh0"])
        h1, c1 = cell(h0, h1, c1, raw["w_ih1"], raw["w_hh1"], raw["b_ih1"], raw["b_hh1"])
    return h1 @ raw["w_fc"].T + raw["b_fc"]


if __name__ == "__main__":
    key = jax.random.PRNGKey(0)
    k_param, k_x = jax.random.split(key)

    B, T = 2, 8
    x = jax.random.normal(k_x, (B, T, INPUT_SIZE), jnp.float32)

    raw = init_raw_params(k_param)
    kparams = prepare_kernel_params(raw)

    out = eeg_lstm_forward(x, kparams)
    out = jax.block_until_ready(out)

    ref = reference_forward(x, raw)
    assert out.shape == (B, NUM_CLASSES)
    assert jnp.allclose(out, ref, atol=1e-4, rtol=1e-4), "mismatch vs JAX reference"

    print("KERNEL_OK")
</pallas_src>

<mosaic_0001>
module attributes {stable_mosaic.version = 11 : i64} {
  func.func @_lstm_fc_kernel(%arg0: memref<8x8x32xf32, #tpu.memory_space<vmem>>, %arg1: memref<32x512xf32, #tpu.memory_space<vmem>>, %arg2: memref<128x512xf32, #tpu.memory_space<vmem>>, %arg3: memref<1x512xf32, #tpu.memory_space<vmem>>, %arg4: memref<128x512xf32, #tpu.memory_space<vmem>>, %arg5: memref<128x512xf32, #tpu.memory_space<vmem>>, %arg6: memref<1x512xf32, #tpu.memory_space<vmem>>, %arg7: memref<128x128xf32, #tpu.memory_space<vmem>>, %arg8: memref<1x128xf32, #tpu.memory_space<vmem>>, %arg9: memref<8x128xf32, #tpu.memory_space<vmem>>, %arg10: memref<64x512xf32, #tpu.memory_space<vmem>>) attributes {dimension_semantics = [], scalar_prefetch = 0 : i64, scratch_operands = 1 : i64, tpu.core_type = #tpu.core_type<tc>} {
    %c0 = arith.constant 0 : index
    %c0_0 = arith.constant 0 : index
    %c0_1 = arith.constant 0 : index
    %0 = vector.load %arg0[%c0, %c0_0, %c0_1] : memref<8x8x32xf32, #tpu.memory_space<vmem>>, vector<8x8x32xf32>
    %1 = vector.shape_cast %0 : vector<8x8x32xf32> to vector<64x32xf32>
    %c0_2 = arith.constant 0 : index
    %c0_3 = arith.constant 0 : index
    %2 = vector.load %arg1[%c0_2, %c0_3] : memref<32x512xf32, #tpu.memory_space<vmem>>, vector<32x512xf32>
    %cst = arith.constant dense<0.000000e+00> : vector<64x512xf32>
    %3 = tpu.matmul %1, %2, %cst {dimension_numbers = #tpu.dot_dimension_numbers<[1], [0], [0], [1], [0, 0, 1, 1], [], []>} : vector<64x32xf32>, vector<32x512xf32>, vector<64x512xf32> -> vector<64x512xf32>
    %c0_4 = arith.constant 0 : index
    %c0_5 = arith.constant 0 : index
    %4 = vector.load %arg3[%c0_4, %c0_5] : memref<1x512xf32, #tpu.memory_space<vmem>>, vector<1x512xf32>
    %5 = vector.broadcast %4 : vector<1x512xf32> to vector<64x512xf32>
    %6 = arith.addf %3, %5 : vector<64x512xf32>
    %c0_6 = arith.constant 0 : index
    %c0_7 = arith.constant 0 : index
    %7 = vector.load %arg10[%c0_6, %c0_7] : memref<64x512xf32, #tpu.memory_space<vmem>>, vector<64x512xf32>
    tpu.vector_store %arg10[%c0_6, %c0_7], %6 {strides = array<i32>} : memref<64x512xf32, #tpu.memory_space<vmem>>, vector<64x512xf32>,
    %c0_8 = arith.constant 0 : index
    %c0_9 = arith.constant 0 : index
    %8 = vector.load %arg2[%c0_8, %c0_9] : memref<128x512xf32, #tpu.memory_space<vmem>>, vector<128x512xf32>
    %c0_10 = arith.constant 0 : index
    %c0_11 = arith.constant 0 : index
    %9 = vector.load %arg4[%c0_10, %c0_11] : memref<128x512xf32, #tpu.memory_space<vmem>>, vector<128x512xf32>
    %c0_12 = arith.constant 0 : index
    %c0_13 = arith.constant 0 : index
    %10 = vector.load %arg5[%c0_12, %c0_13] : memref<128x512xf32, #tpu.memory_space<vmem>>, vector<128x512xf32>
    %c0_14 = arith.constant 0 : index
    %c0_15 = arith.constant 0 : index
    %11 = vector.load %arg6[%c0_14, %c0_15] : memref<1x512xf32, #tpu.memory_space<vmem>>, vector<1x512xf32>
    %cst_16 = arith.constant 0.000000e+00 : f32
    %12 = vector.broadcast %cst_16 : f32 to vector<8x128xf32>
    %cst_17 = arith.constant 0.000000e+00 : f32
    %13 = vector.broadcast %cst_17 : f32 to vector<8x128xf32>
    %cst_18 = arith.constant 0.000000e+00 : f32
    %14 = vector.broadcast %cst_18 : f32 to vector<8x128xf32>
    %cst_19 = arith.constant 0.000000e+00 : f32
    %15 = vector.broadcast %cst_19 : f32 to vector<8x128xf32>
    %c0_20 = arith.constant 0 : index
    %c0_21 = arith.constant 0 : index
    %16 = vector.load %arg10[%c0_20, %c0_21] : memref<64x512xf32, #tpu.memory_space<vmem>>, vector<8x512xf32>
    %cst_22 = arith.constant dense<0.000000e+00> : vector<8x512xf32>
    %17 = tpu.matmul %12, %8, %cst_22 {dimension_numbers = #tpu.dot_dimension_numbers<[1], [0], [0], [1], [0, 0, 1, 1], [], []>} : vector<8x128xf32>, vector<128x512xf32>, vector<8x512xf32> -> vector<8x512xf32>
    %18 = arith.addf %16, %17 : vector<8x512xf32>
    %19 = vector.extract_strided_slice %18 {offsets = [0, 0], sizes = [8, 384], strides = [1, 1]} : vector<8x512xf32> to vector<8x384xf32>
    %cst_23 = arith.constant 5.000000e-01 : f32
    %20 = vector.broadcast %cst_23 : f32 to vector<8x384xf32>
    %21 = arith.mulf %20, %19 : vector<8x384xf32>
    %22 = math.tanh %21 : vector<8x384xf32>
    %cst_24 = arith.constant 5.000000e-01 : f32
    %23 = vector.broadcast %cst_24 : f32 to vector<8x384xf32>
    %24 = arith.mulf %23, %22 : vector<8x384xf32>
    %cst_25 = arith.constant 5.000000e-01 : f32
    %25 = vector.broadcast %cst_25 : f32 to vector<8x384xf32>
    %26 = arith.addf %24, %25 : vector<8x384xf32>
    %27 = vector.extract_strided_slice %18 {offsets = [0, 384], sizes = [8, 128], strides = [1, 1]} : vector<8x512xf32> to vector<8x128xf32>
    %28 = math.tanh %27 : vector<8x128xf32>
    %29 = vector.extract_strided_slice %26 {offsets = [0, 0], sizes = [8, 128], strides = [1, 1]} : vector<8x384xf32> to vector<8x128xf32>
    %30 = vector.extract_strided_slice %26 {offsets = [0, 128], sizes = [8, 128], strides = [1, 1]} : vector<8x384xf32> to vector<8x128xf32>
    %31 = vector.extract_strided_slice %26 {offsets = [0, 256], sizes = [8, 128], strides = [1, 1]} : vector<8x384xf32> to vector<8x128xf32>
    %32 = arith.mulf %30, %13 : vector<8x128xf32>
    %33 = arith.mulf %29, %28 : vector<8x128xf32>
    %34 = arith.addf %32, %33 : vector<8x128xf32>
    %35 = math.tanh %34 : vector<8x128xf32>
    %36 = arith.mulf %31, %35 : vector<8x128xf32>
    %cst_26 = arith.constant dense<0.000000e+00> : vector<8x512xf32>
    %37 = tpu.matmul %36, %9, %cst_26 {dimension_numbers = #tpu.dot_dimension_numbers<[1], [0], [0], [1], [0, 0, 1, 1], [], []>} : vector<8x128xf32>, vector<128x512xf32>, vector<8x512xf32> -> vector<8x512xf32>
    %cst_27 = arith.constant dense<0.000000e+00> : vector<8x512xf32>
    %38 = tpu.matmul %14, %10, %cst_27 {dimension_numbers = #tpu.dot_dimension_numbers<[1], [0], [0], [1], [0, 0, 1, 1], [], []>} : vector<8x128xf32>, vector<128x512xf32>, vector<8x512xf32> -> vector<8x512xf32>
    %39 = arith.addf %37, %38 : vector<8x512xf32>
    %40 = vector.broadcast %11 : vector<1x512xf32> to vector<8x512xf32>
    %41 = arith.addf %39, %40 : vector<8x512xf32>
    %42 = vector.extract_strided_slice %41 {offsets = [0, 0], sizes = [8, 384], strides = [1, 1]} : vector<8x512xf32> to vector<8x384xf32>
    %cst_28 = arith.constant 5.000000e-01 : f32
    %43 = vector.broadcast %cst_28 : f32 to vector<8x384xf32>
    %44 = arith.mulf %43, %42 : vector<8x384xf32>
    %45 = math.tanh %44 : vector<8x384xf32>
    %cst_29 = arith.constant 5.000000e-01 : f32
    %46 = vector.broadcast %cst_29 : f32 to vector<8x384xf32>
    %47 = arith.mulf %46, %45 : vector<8x384xf32>
    %cst_30 = arith.constant 5.000000e-01 : f32
    %48 = vector.broadcast %cst_30 : f32 to vector<8x384xf32>
    %49 = arith.addf %47, %48 : vector<8x384xf32>
    %50 = vector.extract_strided_slice %41 {offsets = [0, 384], sizes = [8, 128], strides = [1, 1]} : vector<8x512xf32> to vector<8x128xf32>
    %51 = math.tanh %50 : vector<8x128xf32>
    %52 = vector.extract_strided_slice %49 {offsets = [0, 0], sizes = [8, 128], strides = [1, 1]} : vector<8x384xf32> to vector<8x128xf32>
    %53 = vector.extract_strided_slice %49 {offsets = [0, 128], sizes = [8, 128], strides = [1, 1]} : vector<8x384xf32> to vector<8x128xf32>
    %54 = vector.extract_strided_slice %49 {offsets = [0, 256], sizes = [8, 128], strides = [1, 1]} : vector<8x384xf32> to vector<8x128xf32>
    %55 = arith.mulf %53, %15 : vector<8x128xf32>
    %56 = arith.mulf %52, %51 : vector<8x128xf32>
    %57 = arith.addf %55, %56 : vector<8x128xf32>
    %58 = math.tanh %57 : vector<8x128xf32>
    %59 = arith.mulf %54, %58 : vector<8x128xf32>
    %c8 = arith.constant 8 : index
    %c0_31 = arith.constant 0 : index
    %60 = vector.load %arg10[%c8, %c0_31] : memref<64x512xf32, #tpu.memory_space<vmem>>, vector<8x512xf32>
    %cst_32 = arith.constant dense<0.000000e+00> : vector<8x512xf32>
    %61 = tpu.matmul %36, %8, %cst_32 {dimension_numbers = #tpu.dot_dimension_numbers<[1], [0], [0], [1], [0, 0, 1, 1], [], []>} : vector<8x128xf32>, vector<128x512xf32>, vector<8x512xf32> -> vector<8x512xf32>
    %62 = arith.addf %60, %61 : vector<8x512xf32>
    %63 = vector.extract_strided_slice %62 {offsets = [0, 0], sizes = [8, 384], strides = [1, 1]} : vector<8x512xf32> to vector<8x384xf32>
    %cst_33 = arith.constant 5.000000e-01 : f32
    %64 = vector.broadcast %cst_33 : f32 to vector<8x384xf32>
    %65 = arith.mulf %64, %63 : vector<8x384xf32>
    %66 = math.tanh %65 : vector<8x384xf32>
    %cst_34 = arith.constant 5.000000e-01 : f32
    %67 = vector.broadcast %cst_34 : f32 to vector<8x384xf32>
    %68 = arith.mulf %67, %66 : vector<8x384xf32>
    %cst_35 = arith.constant 5.000000e-01 : f32
    %69 = vector.broadcast %cst_35 : f32 to vector<8x384xf32>
    %70 = arith.addf %68, %69 : vector<8x384xf32>
    %71 = vector.extract_strided_slice %62 {offsets = [0, 384], sizes = [8, 128], strides = [1, 1]} : vector<8x512xf32> to vector<8x128xf32>
    %72 = math.tanh %71 : vector<8x128xf32>
    %73 = vector.extract_strided_slice %70 {offsets = [0, 0], sizes = [8, 128], strides = [1, 1]} : vector<8x384xf32> to vector<8x128xf32>
    %74 = vector.extract_strided_slice %70 {offsets = [0, 128], sizes = [8, 128], strides = [1, 1]} : vector<8x384xf32> to vector<8x128xf32>
    %75 = vector.extract_strided_slice %70 {offsets = [0, 256], sizes = [8, 128], strides = [1, 1]} : vector<8x384xf32> to vector<8x128xf32>
    %76 = arith.mulf %74, %34 : vector<8x128xf32>
    %77 = arith.mulf %73, %72 : vector<8x128xf32>
    %78 = arith.addf %76, %77 : vector<8x128xf32>
    %79 = math.tanh %78 : vector<8x128xf32>
    %80 = arith.mulf %75, %79 : vector<8x128xf32>
    %cst_36 = arith.constant dense<0.000000e+00> : vector<8x512xf32>
    %81 = tpu.matmul %80, %9, %cst_36 {dimension_numbers = #tpu.dot_dimension_numbers<[1], [0], [0], [1], [0, 0, 1, 1], [], []>} : vector<8x128xf32>, vector<128x512xf32>, vector<8x512xf32> -> vector<8x512xf32>
    %cst_37 = arith.constant dense<0.000000e+00> : vector<8x512xf32>
    %82 = tpu.matmul %59, %10, %cst_37 {dimension_numbers = #tpu.dot_dimension_numbers<[1], [0], [0], [1], [0, 0, 1, 1], [], []>} : vector<8x128xf32>, vector<128x512xf32>, vector<8x512xf32> -> vector<8x512xf32>
    %83 = arith.addf %81, %82 : vector<8x512xf32>
    %84 = vector.broadcast %11 : vector<1x512xf32> to vector<8x512xf32>
    %85 = arith.addf %83, %84 : vector<8x512xf32>
    %86 = vector.extract_strided_slice %85 {offsets = [0, 0], sizes = [8, 384], strides = [1, 1]} : vector<8x512xf32> to vector<8x384xf32>
    %cst_38 = arith.constant 5.000000e-01 : f32
    %87 = vector.broadcast %cst_38 : f32 to vector<8x384xf32>
    %88 = arith.mulf %87, %86 : vector<8x384xf32>
    %89 = math.tanh %88 : vector<8x384xf32>
    %cst_39 = arith.constant 5.000000e-01 : f32
    %90 = vector.broadcast %cst_39 : f32 to vector<8x384xf32>
    %91 = arith.mulf %90, %89 : vector<8x384xf32>
    %cst_40 = arith.constant 5.000000e-01 : f32
    %92 = vector.broadcast %cst_40 : f32 to vector<8x384xf32>
    %93 = arith.addf %91, %92 : vector<8x384xf32>
    %94 = vector.extract_strided_slice %85 {offsets = [0, 384], sizes = [8, 128], strides = [1, 1]} : vector<8x512xf32> to vector<8x128xf32>
    %95 = math.tanh %94 : vector<8x128xf32>
    %96 = vector.extract_strided_slice %93 {offsets = [0, 0], sizes = [8, 128], strides = [1, 1]} : vector<8x384xf32> to vector<8x128xf32>
    %97 = vector.extract_strided_slice %93 {offsets = [0, 128], sizes = [8, 128], strides = [1, 1]} : vector<8x384xf32> to vector<8x128xf32>
    %98 = vector.extract_strided_slice %93 {offsets = [0, 256], sizes = [8, 128], strides = [1, 1]} : vector<8x384xf32> to vector<8x128xf32>
    %99 = arith.mulf %97, %57 : vector<8x128xf32>
    %100 = arith.mulf %96, %95 : vector<8x128xf32>
    %101 = arith.addf %99, %100 : vector<8x128xf32>
    %102 = math.tanh %101 : vector<8x128xf32>
    %103 = arith.mulf %98, %102 : vector<8x128xf32>
    %c16 = arith.constant 16 : index
    %c0_41 = arith.constant 0 : index
    %104 = vector.load %arg10[%c16, %c0_41] : memref<64x512xf32, #tpu.memory_space<vmem>>, vector<8x512xf32>
    %cst_42 = arith.constant dense<0.000000e+00> : vector<8x512xf32>
    %105 = tpu.matmul %80, %8, %cst_42 {dimension_numbers = #tpu.dot_dimension_numbers<[1], [0], [0], [1], [0, 0, 1, 1], [], []>} : vector<8x128xf32>, vector<128x512xf32>, vector<8x512xf32> -> vector<8x512xf32>
    %106 = arith.addf %104, %105 : vector<8x512xf32>
    %107 = vector.extract_strided_slice %106 {offsets = [0, 0], sizes = [8, 384], strides = [1, 1]} : vector<8x512xf32> to vector<8x384xf32>
    %cst_43 = arith.constant 5.000000e-01 : f32
    %108 = vector.broadcast %cst_43 : f32 to vector<8x384xf32>
    %109 = arith.mulf %108, %107 : vector<8x384xf32>
    %110 = math.tanh %109 : vector<8x384xf32>
    %cst_44 = arith.constant 5.000000e-01 : f32
    %111 = vector.broadcast %cst_44 : f32 to vector<8x384xf32>
    %112 = arith.mulf %111, %110 : vector<8x384xf32>
    %cst_45 = arith.constant 5.000000e-01 : f32
    %113 = vector.broadcast %cst_45 : f32 to vector<8x384xf32>
    %114 = arith.addf %112, %113 : vector<8x384xf32>
    %115 = vector.extract_strided_slice %106 {offsets = [0, 384], sizes = [8, 128], strides = [1, 1]} : vector<8x512xf32> to vector<8x128xf32>
    %116 = math.tanh %115 : vector<8x128xf32>
    %117 = vector.extract_strided_slice %114 {offsets = [0, 0], sizes = [8, 128], strides = [1, 1]} : vector<8x384xf32> to vector<8x128xf32>
    %118 = vector.extract_strided_slice %114 {offsets = [0, 128], sizes = [8, 128], strides = [1, 1]} : vector<8x384xf32> to vector<8x128xf32>
    %119 = vector.extract_strided_slice %114 {offsets = [0, 256], sizes = [8, 128], strides = [1, 1]} : vector<8x384xf32> to vector<8x128xf32>
    %120 = arith.mulf %118, %78 : vector<8x128xf32>
    %121 = arith.mulf %117, %116 : vector<8x128xf32>
    %122 = arith.addf %120, %121 : vector<8x128xf32>
    %123 = math.tanh %122 : vector<8x128xf32>
    %124 = arith.mulf %119, %123 : vector<8x128xf32>
    %cst_46 = arith.constant dense<0.000000e+00> : vector<8x512xf32>
    %125 = tpu.matmul %124, %9, %cst_46 {dimension_numbers = #tpu.dot_dimension_numbers<[1], [0], [0], [1], [0, 0, 1, 1], [], []>} : vector<8x128xf32>, vector<128x512xf32>, vector<8x512xf32> -> vector<8x512xf32>
    %cst_47 = arith.constant dense<0.000000e+00> : vector<8x512xf32>
    %126 = tpu.matmul %103, %10, %cst_47 {dimension_numbers = #tpu.dot_dimension_numbers<[1], [0], [0], [1], [0, 0, 1, 1], [], []>} : vector<8x128xf32>, vector<128x512xf32>, vector<8x512xf32> -> vector<8x512xf32>
    %127 = arith.addf %125, %126 : vector<8x512xf32>
    %128 = vector.broadcast %11 : vector<1x512xf32> to vector<8x512xf32>
    %129 = arith.addf %127, %128 : vector<8x512xf32>
    %130 = vector.extract_strided_slice %129 {offsets = [0, 0], sizes = [8, 384], strides = [1, 1]} : vector<8x512xf32> to vector<8x384xf32>
    %cst_48 = arith.constant 5.000000e-01 : f32
    %131 = vector.broadcast %cst_48 : f32 to vector<8x384xf32>
    %132 = arith.mulf %131, %130 : vector<8x384xf32>
    %133 = math.tanh %132 : vector<8x384xf32>
    %cst_49 = arith.constant 5.000000e-01 : f32
    %134 = vector.broadcast %cst_49 : f32 to vector<8x384xf32>
    %135 = arith.mulf %134, %133 : vector<8x384xf32>
    %cst_50 = arith.constant 5.000000e-01 : f32
    %136 = vector.broadcast %cst_50 : f32 to vector<8x384xf32>
    %137 = arith.addf %135, %136 : vector<8x384xf32>
    %138 = vector.extract_strided_slice %129 {offsets = [0, 384], sizes = [8, 128], strides = [1, 1]} : vector<8x512xf32> to vector<8x128xf32>
    %139 = math.tanh %138 : vector<8x128xf32>
    %140 = vector.extract_strided_slice %137 {offsets = [0, 0], sizes = [8, 128], strides = [1, 1]} : vector<8x384xf32> to vector<8x128xf32>
    %141 = vector.extract_strided_slice %137 {offsets = [0, 128], sizes = [8, 128], strides = [1, 1]} : vector<8x384xf32> to vector<8x128xf32>
    %142 = vector.extract_strided_slice %137 {offsets = [0, 256], sizes = [8, 128], strides = [1, 1]} : vector<8x384xf32> to vector<8x128xf32>
    %143 = arith.mulf %141, %101 : vector<8x128xf32>
    %144 = arith.mulf %140, %139 : vector<8x128xf32>
    %145 = arith.addf %143, %144 : vector<8x128xf32>
    %146 = math.tanh %145 : vector<8x128xf32>
    %147 = arith.mulf %142, %146 : vector<8x128xf32>
    %c24 = arith.constant 24 : index
    %c0_51 = arith.constant 0 : index
    %148 = vector.load %arg10[%c24, %c0_51] : memref<64x512xf32, #tpu.memory_space<vmem>>, vector<8x512xf32>
    %cst_52 = arith.constant dense<0.000000e+00> : vector<8x512xf32>
    %149 = tpu.matmul %124, %8, %cst_52 {dimension_numbers = #tpu.dot_dimension_numbers<[1], [0], [0], [1], [0, 0, 1, 1], [], []>} : vector<8x128xf32>, vector<128x512xf32>, vector<8x512xf32> -> vector<8x512xf32>
    %150 = arith.addf %148, %149 : vector<8x512xf32>
    %151 = vector.extract_strided_slice %150 {offsets = [0, 0], sizes = [8, 384], strides = [1, 1]} : vector<8x512xf32> to vector<8x384xf32>
    %cst_53 = arith.constant 5.000000e-01 : f32
    %152 = vector.broadcast %cst_53 : f32 to vector<8x384xf32>
    %153 = arith.mulf %152, %151 : vector<8x384xf32>
    %154 = math.tanh %153 : vector<8x384xf32>
    %cst_54 = arith.constant 5.000000e-01 : f32
    %155 = vector.broadcast %cst_54 : f32 to vector<8x384xf32>
    %156 = arith.mulf %155, %154 : vector<8x384xf32>
    %cst_55 = arith.constant 5.000000e-01 : f32
    %157 = vector.broadcast %cst_55 : f32 to vector<8x384xf32>
    %158 = arith.addf %156, %157 : vector<8x384xf32>
    %159 = vector.extract_strided_slice %150 {offsets = [0, 384], sizes = [8, 128], strides = [1, 1]} : vector<8x512xf32> to vector<8x128xf32>
    %160 = math.tanh %159 : vector<8x128xf32>
    %161 = vector.extract_strided_slice %158 {offsets = [0, 0], sizes = [8, 128], strides = [1, 1]} : vector<8x384xf32> to vector<8x128xf32>
    %162 = vector.extract_strided_slice %158 {offsets = [0, 128], sizes = [8, 128], strides = [1, 1]} : vector<8x384xf32> to vector<8x128xf32>
    %163 = vector.extract_strided_slice %158 {offsets = [0, 256], sizes = [8, 128], strides = [1, 1]} : vector<8x384xf32> to vector<8x128xf32>
    %164 = arith.mulf %162, %122 : vector<8x128xf32>
    %165 = arith.mulf %161, %160 : vector<8x128xf32>
    %166 = arith.addf %164, %165 : vector<8x128xf32>
    %167 = math.tanh %166 : vector<8x128xf32>
    %168 = arith.mulf %163, %167 : vector<8x128xf32>
    %cst_56 = arith.constant dense<0.000000e+00> : vector<8x512xf32>
    %169 = tpu.matmul %168, %9, %cst_56 {dimension_numbers = #tpu.dot_dimension_numbers<[1], [0], [0], [1], [0, 0, 1, 1], [], []>} : vector<8x128xf32>, vector<128x512xf32>, vector<8x512xf32> -> vector<8x512xf32>
    %cst_57 = arith.constant dense<0.000000e+00> : vector<8x512xf32>
    %170 = tpu.matmul %147, %10, %cst_57 {dimension_numbers = #tpu.dot_dimension_numbers<[1], [0], [0], [1], [0, 0, 1, 1], [], []>} : vector<8x128xf32>, vector<128x512xf32>, vector<8x512xf32> -> vector<8x512xf32>
    %171 = arith.addf %169, %170 : vector<8x512xf32>
    %172 = vector.broadcast %11 : vector<1x512xf32> to vector<8x512xf32>
    %173 = arith.addf %171, %172 : vector<8x512xf32>
    %174 = vector.extract_strided_slice %173 {offsets = [0, 0], sizes = [8, 384], strides = [1, 1]} : vector<8x512xf32> to vector<8x384xf32>
    %cst_58 = arith.constant 5.000000e-01 : f32
    %175 = vector.broadcast %cst_58 : f32 to vector<8x384xf32>
    %176 = arith.mulf %175, %174 : vector<8x384xf32>
    %177 = math.tanh %176 : vector<8x384xf32>
    %cst_59 = arith.constant 5.000000e-01 : f32
    %178 = vector.broadcast %cst_59 : f32 to vector<8x384xf32>
    %179 = arith.mulf %178, %177 : vector<8x384xf32>
    %cst_60 = arith.constant 5.000000e-01 : f32
    %180 = vector.broadcast %cst_60 : f32 to vector<8x384xf32>
    %181 = arith.addf %179, %180 : vector<8x384xf32>
    %182 = vector.extract_strided_slice %173 {offsets = [0, 384], sizes = [8, 128], strides = [1, 1]} : vector<8x512xf32> to vector<8x128xf32>
    %183 = math.tanh %182 : vector<8x128xf32>
    %184 = vector.extract_strided_slice %181 {offsets = [0, 0], sizes = [8, 128], strides = [1, 1]} : vector<8x384xf32> to vector<8x128xf32>
    %185 = vector.extract_strided_slice %181 {offsets = [0, 128], sizes = [8, 128], strides = [1, 1]} : vector<8x384xf32> to vector<8x128xf32>
    %186 = vector.extract_strided_slice %181 {offsets = [0, 256], sizes = [8, 128], strides = [1, 1]} : vector<8x384xf32> to vector<8x128xf32>
    %187 = arith.mulf %185, %145 : vector<8x128xf32>
    %188 = arith.mulf %184, %183 : vector<8x128xf32>
    %189 = arith.addf %187, %188 : vector<8x128xf32>
    %190 = math.tanh %189 : vector<8x128xf32>
    %191 = arith.mulf %186, %190 : vector<8x128xf32>
    %c32 = arith.constant 32 : index
    %c0_61 = arith.constant 0 : index
    %192 = vector.load %arg10[%c32, %c0_61] : memref<64x512xf32, #tpu.memory_space<vmem>>, vector<8x512xf32>
    %cst_62 = arith.constant dense<0.000000e+00> : vector<8x512xf32>
    %193 = tpu.matmul %168, %8, %cst_62 {dimension_numbers = #tpu.dot_dimension_numbers<[1], [0], [0], [1], [0, 0, 1, 1], [], []>} : vector<8x128xf32>, vector<128x512xf32>, vector<8x512xf32> -> vector<8x512xf32>
    %194 = arith.addf %192, %193 : vector<8x512xf32>
    %195 = vector.extract_strided_slice %194 {offsets = [0, 0], sizes = [8, 384], strides = [1, 1]} : vector<8x512xf32> to vector<8x384xf32>
    %cst_63 = arith.constant 5.000000e-01 : f32
    %196 = vector.broadcast %cst_63 : f32 to vector<8x384xf32>
    %197 = arith.mulf %196, %195 : vector<8x384xf32>
    %198 = math.tanh %197 : vector<8x384xf32>
    %cst_64 = arith.constant 5.000000e-01 : f32
    %199 = vector.broadcast %cst_64 : f32 to vector<8x384xf32>
    %200 = arith.mulf %199, %198 : vector<8x384xf32>
    %cst_65 = arith.constant 5.000000e-01 : f32
    %201 = vector.broadcast %cst_65 : f32 to vector<8x384xf32>
    %202 = arith.addf %200, %201 : vector<8x384xf32>
    %203 = vector.extract_strided_slice %194 {offsets = [0, 384], sizes = [8, 128], strides = [1, 1]} : vector<8x512xf32> to vector<8x128xf32>
    %204 = math.tanh %203 : vector<8x128xf32>
    %205 = vector.extract_strided_slice %202 {offsets = [0, 0], sizes = [8, 128], strides = [1, 1]} : vector<8x384xf32> to vector<8x128xf32>
    %206 = vector.extract_strided_slice %202 {offsets = [0, 128], sizes = [8, 128], strides = [1, 1]} : vector<8x384xf32> to vector<8x128xf32>
    %207 = vector.extract_strided_slice %202 {offsets = [0, 256], sizes = [8, 128], strides = [1, 1]} : vector<8x384xf32> to vector<8x128xf32>
    %208 = arith.mulf %206, %166 : vector<8x128xf32>
    %209 = arith.mulf %205, %204 : vector<8x128xf32>
    %210 = arith.addf %208, %209 : vector<8x128xf32>
    %211 = math.tanh %210 : vector<8x128xf32>
    %212 = arith.mulf %207, %211 : vector<8x128xf32>
    %cst_66 = arith.constant dense<0.000000e+00> : vector<8x512xf32>
    %213 = tpu.matmul %212, %9, %cst_66 {dimension_numbers = #tpu.dot_dimension_numbers<[1], [0], [0], [1], [0, 0, 1, 1], [], []>} : vector<8x128xf32>, vector<128x512xf32>, vector<8x512xf32> -> vector<8x512xf32>
    %cst_67 = arith.constant dense<0.000000e+00> : vector<8x512xf32>
    %214 = tpu.matmul %191, %10, %cst_67 {dimension_numbers = #tpu.dot_dimension_numbers<[1], [0], [0], [1], [0, 0, 1, 1], [], []>} : vector<8x128xf32>, vector<128x512xf32>, vector<8x512xf32> -> vector<8x512xf32>
    %215 = arith.addf %213, %214 : vector<8x512xf32>
    %216 = vector.broadcast %11 : vector<1x512xf32> to vector<8x512xf32>
    %217 = arith.addf %215, %216 : vector<8x512xf32>
    %218 = vector.extract_strided_slice %217 {offsets = [0, 0], sizes = [8, 384], strides = [1, 1]} : vector<8x512xf32> to vector<8x384xf32>
    %cst_68 = arith.constant 5.000000e-01 : f32
    %219 = vector.broadcast %cst_68 : f32 to vector<8x384xf32>
    %220 = arith.mulf %219, %218 : vector<8x384xf32>
    %221 = math.tanh %220 : vector<8x384xf32>
    %cst_69 = arith.constant 5.000000e-01 : f32
    %222 = vector.broadcast %cst_69 : f32 to vector<8x384xf32>
    %223 = arith.mulf %222, %221 : vector<8x384xf32>
    %cst_70 = arith.constant 5.000000e-01 : f32
    %224 = vector.broadcast %cst_70 : f32 to vector<8x384xf32>
    %225 = arith.addf %223, %224 : vector<8x384xf32>
    %226 = vector.extract_strided_slice %217 {offsets = [0, 384], sizes = [8, 128], strides = [1, 1]} : vector<8x512xf32> to vector<8x128xf32>
    %227 = math.tanh %226 : vector<8x128xf32>
    %228 = vector.extract_strided_slice %225 {offsets = [0, 0], sizes = [8, 128], strides = [1, 1]} : vector<8x384xf32> to vector<8x128xf32>
    %229 = vector.extract_strided_slice %225 {offsets = [0, 128], sizes = [8, 128], strides = [1, 1]} : vector<8x384xf32> to vector<8x128xf32>
    %230 = vector.extract_strided_slice %225 {offsets = [0, 256], sizes = [8, 128], strides = [1, 1]} : vector<8x384xf32> to vector<8x128xf32>
    %231 = arith.mulf %229, %189 : vector<8x128xf32>
    %232 = arith.mulf %228, %227 : vector<8x128xf32>
    %233 = arith.addf %231, %232 : vector<8x128xf32>
    %234 = math.tanh %233 : vector<8x128xf32>
    %235 = arith.mulf %230, %234 : vector<8x128xf32>
    %c40 = arith.constant 40 : index
    %c0_71 = arith.constant 0 : index
    %236 = vector.load %arg10[%c40, %c0_71] : memref<64x512xf32, #tpu.memory_space<vmem>>, vector<8x512xf32>
    %cst_72 = arith.constant dense<0.000000e+00> : vector<8x512xf32>
    %237 = tpu.matmul %212, %8, %cst_72 {dimension_numbers = #tpu.dot_dimension_numbers<[1], [0], [0], [1], [0, 0, 1, 1], [], []>} : vector<8x128xf32>, vector<128x512xf32>, vector<8x512xf32> -> vector<8x512xf32>
    %238 = arith.addf %236, %237 : vector<8x512xf32>
    %239 = vector.extract_strided_slice %238 {offsets = [0, 0], sizes = [8, 384], strides = [1, 1]} : vector<8x512xf32> to vector<8x384xf32>
    %cst_73 = arith.constant 5.000000e-01 : f32
    %240 = vector.broadcast %cst_73 : f32 to vector<8x384xf32>
    %241 = arith.mulf %240, %239 : vector<8x384xf32>
    %242 = math.tanh %241 : vector<8x384xf32>
    %cst_74 = arith.constant 5.000000e-01 : f32
    %243 = vector.broadcast %cst_74 : f32 to vector<8x384xf32>
    %244 = arith.mulf %243, %242 : vector<8x384xf32>
    %cst_75 = arith.constant 5.000000e-01 : f32
    %245 = vector.broadcast %cst_75 : f32 to vector<8x384xf32>
    %246 = arith.addf %244, %245 : vector<8x384xf32>
    %247 = vector.extract_strided_slice %238 {offsets = [0, 384], sizes = [8, 128], strides = [1, 1]} : vector<8x512xf32> to vector<8x128xf32>
    %248 = math.tanh %247 : vector<8x128xf32>
    %249 = vector.extract_strided_slice %246 {offsets = [0, 0], sizes = [8, 128], strides = [1, 1]} : vector<8x384xf32> to vector<8x128xf32>
    %250 = vector.extract_strided_slice %246 {offsets = [0, 128], sizes = [8, 128], strides = [1, 1]} : vector<8x384xf32> to vector<8x128xf32>
    %251 = vector.extract_strided_slice %246 {offsets = [0, 256], sizes = [8, 128], strides = [1, 1]} : vector<8x384xf32> to vector<8x128xf32>
    %252 = arith.mulf %250, %210 : vector<8x128xf32>
    %253 = arith.mulf %249, %248 : vector<8x128xf32>
    %254 = arith.addf %252, %253 : vector<8x128xf32>
    %255 = math.tanh %254 : vector<8x128xf32>
    %256 = arith.mulf %251, %255 : vector<8x128xf32>
    %cst_76 = arith.constant dense<0.000000e+00> : vector<8x512xf32>
    %257 = tpu.matmul %256, %9, %cst_76 {dimension_numbers = #tpu.dot_dimension_numbers<[1], [0], [0], [1], [0, 0, 1, 1], [], []>} : vector<8x128xf32>, vector<128x512xf32>, vector<8x512xf32> -> vector<8x512xf32>
    %cst_77 = arith.constant dense<0.000000e+00> : vector<8x512xf32>
    %258 = tpu.matmul %235, %10, %cst_77 {dimension_numbers = #tpu.dot_dimension_numbers<[1], [0], [0], [1], [0, 0, 1, 1], [], []>} : vector<8x128xf32>, vector<128x512xf32>, vector<8x512xf32> -> vector<8x512xf32>
    %259 = arith.addf %257, %258 : vector<8x512xf32>
    %260 = vector.broadcast %11 : vector<1x512xf32> to vector<8x512xf32>
    %261 = arith.addf %259, %260 : vector<8x512xf32>
    %262 = vector.extract_strided_slice %261 {offsets = [0, 0], sizes = [8, 384], strides = [1, 1]} : vector<8x512xf32> to vector<8x384xf32>
    %cst_78 = arith.constant 5.000000e-01 : f32
    %263 = vector.broadcast %cst_78 : f32 to vector<8x384xf32>
    %264 = arith.mulf %263, %262 : vector<8x384xf32>
    %265 = math.tanh %264 : vector<8x384xf32>
    %cst_79 = arith.constant 5.000000e-01 : f32
    %266 = vector.broadcast %cst_79 : f32 to vector<8x384xf32>
    %267 = arith.mulf %266, %265 : vector<8x384xf32>
    %cst_80 = arith.constant 5.000000e-01 : f32
    %268 = vector.broadcast %cst_80 : f32 to vector<8x384xf32>
    %269 = arith.addf %267, %268 : vector<8x384xf32>
    %270 = vector.extract_strided_slice %261 {offsets = [0, 384], sizes = [8, 128], strides = [1, 1]} : vector<8x512xf32> to vector<8x128xf32>
    %271 = math.tanh %270 : vector<8x128xf32>
    %272 = vector.extract_strided_slice %269 {offsets = [0, 0], sizes = [8, 128], strides = [1, 1]} : vector<8x384xf32> to vector<8x128xf32>
    %273 = vector.extract_strided_slice %269 {offsets = [0, 128], sizes = [8, 128], strides = [1, 1]} : vector<8x384xf32> to vector<8x128xf32>
    %274 = vector.extract_strided_slice %269 {offsets = [0, 256], sizes = [8, 128], strides = [1, 1]} : vector<8x384xf32> to vector<8x128xf32>
    %275 = arith.mulf %273, %233 : vector<8x128xf32>
    %276 = arith.mulf %272, %271 : vector<8x128xf32>
    %277 = arith.addf %275, %276 : vector<8x128xf32>
    %278 = math.tanh %277 : vector<8x128xf32>
    %279 = arith.mulf %274, %278 : vector<8x128xf32>
    %c48 = arith.constant 48 : index
    %c0_81 = arith.constant 0 : index
    %280 = vector.load %arg10[%c48, %c0_81] : memref<64x512xf32, #tpu.memory_space<vmem>>, vector<8x512xf32>
    %cst_82 = arith.constant dense<0.000000e+00> : vector<8x512xf32>
    %281 = tpu.matmul %256, %8, %cst_82 {dimension_numbers = #tpu.dot_dimension_numbers<[1], [0], [0], [1], [0, 0, 1, 1], [], []>} : vector<8x128xf32>, vector<128x512xf32>, vector<8x512xf32> -> vector<8x512xf32>
    %282 = arith.addf %280, %281 : vector<8x512xf32>
    %283 = vector.extract_strided_slice %282 {offsets = [0, 0], sizes = [8, 384], strides = [1, 1]} : vector<8x512xf32> to vector<8x384xf32>
    %cst_83 = arith.constant 5.000000e-01 : f32
    %284 = vector.broadcast %cst_83 : f32 to vector<8x384xf32>
    %285 = arith.mulf %284, %283 : vector<8x384xf32>
    %286 = math.tanh %285 : vector<8x384xf32>
    %cst_84 = arith.constant 5.000000e-01 : f32
    %287 = vector.broadcast %cst_84 : f32 to vector<8x384xf32>
    %288 = arith.mulf %287, %286 : vector<8x384xf32>
    %cst_85 = arith.constant 5.000000e-01 : f32
    %289 = vector.broadcast %cst_85 : f32 to vector<8x384xf32>
    %290 = arith.addf %288, %289 : vector<8x384xf32>
    %291 = vector.extract_strided_slice %282 {offsets = [0, 384], sizes = [8, 128], strides = [1, 1]} : vector<8x512xf32> to vector<8x128xf32>
    %292 = math.tanh %291 : vector<8x128xf32>
    %293 = vector.extract_strided_slice %290 {offsets = [0, 0], sizes = [8, 128], strides = [1, 1]} : vector<8x384xf32> to vector<8x128xf32>
    %294 = vector.extract_strided_slice %290 {offsets = [0, 128], sizes = [8, 128], strides = [1, 1]} : vector<8x384xf32> to vector<8x128xf32>
    %295 = vector.extract_strided_slice %290 {offsets = [0, 256], sizes = [8, 128], strides = [1, 1]} : vector<8x384xf32> to vector<8x128xf32>
    %296 = arith.mulf %294, %254 : vector<8x128xf32>
    %297 = arith.mulf %293, %292 : vector<8x128xf32>
    %298 = arith.addf %296, %297 : vector<8x128xf32>
    %299 = math.tanh %298 : vector<8x128xf32>
    %300 = arith.mulf %295, %299 : vector<8x128xf32>
    %cst_86 = arith.constant dense<0.000000e+00> : vector<8x512xf32>
    %301 = tpu.matmul %300, %9, %cst_86 {dimension_numbers = #tpu.dot_dimension_numbers<[1], [0], [0], [1], [0, 0, 1, 1], [], []>} : vector<8x128xf32>, vector<128x512xf32>, vector<8x512xf32> -> vector<8x512xf32>
    %cst_87 = arith.constant dense<0.000000e+00> : vector<8x512xf32>
    %302 = tpu.matmul %279, %10, %cst_87 {dimension_numbers = #tpu.dot_dimension_numbers<[1], [0], [0], [1], [0, 0, 1, 1], [], []>} : vector<8x128xf32>, vector<128x512xf32>, vector<8x512xf32> -> vector<8x512xf32>
    %303 = arith.addf %301, %302 : vector<8x512xf32>
    %304 = vector.broadcast %11 : vector<1x512xf32> to vector<8x512xf32>
    %305 = arith.addf %303, %304 : vector<8x512xf32>
    %306 = vector.extract_strided_slice %305 {offsets = [0, 0], sizes = [8, 384], strides = [1, 1]} : vector<8x512xf32> to vector<8x384xf32>
    %cst_88 = arith.constant 5.000000e-01 : f32
    %307 = vector.broadcast %cst_88 : f32 to vector<8x384xf32>
    %308 = arith.mulf %307, %306 : vector<8x384xf32>
    %309 = math.tanh %308 : vector<8x384xf32>
    %cst_89 = arith.constant 5.000000e-01 : f32
    %310 = vector.broadcast %cst_89 : f32 to vector<8x384xf32>
    %311 = arith.mulf %310, %309 : vector<8x384xf32>
    %cst_90 = arith.constant 5.000000e-01 : f32
    %312 = vector.broadcast %cst_90 : f32 to vector<8x384xf32>
    %313 = arith.addf %311, %312 : vector<8x384xf32>
    %314 = vector.extract_strided_slice %305 {offsets = [0, 384], sizes = [8, 128], strides = [1, 1]} : vector<8x512xf32> to vector<8x128xf32>
    %315 = math.tanh %314 : vector<8x128xf32>
    %316 = vector.extract_strided_slice %313 {offsets = [0, 0], sizes = [8, 128], strides = [1, 1]} : vector<8x384xf32> to vector<8x128xf32>
    %317 = vector.extract_strided_slice %313 {offsets = [0, 128], sizes = [8, 128], strides = [1, 1]} : vector<8x384xf32> to vector<8x128xf32>
    %318 = vector.extract_strided_slice %313 {offsets = [0, 256], sizes = [8, 128], strides = [1, 1]} : vector<8x384xf32> to vector<8x128xf32>
    %319 = arith.mulf %317, %277 : vector<8x128xf32>
    %320 = arith.mulf %316, %315 : vector<8x128xf32>
    %321 = arith.addf %319, %320 : vector<8x128xf32>
    %322 = math.tanh %321 : vector<8x128xf32>
    %323 = arith.mulf %318, %322 : vector<8x128xf32>
    %c56 = arith.constant 56 : index
    %c0_91 = arith.constant 0 : index
    %324 = vector.load %arg10[%c56, %c0_91] : memref<64x512xf32, #tpu.memory_space<vmem>>, vector<8x512xf32>
    %cst_92 = arith.constant dense<0.000000e+00> : vector<8x512xf32>
    %325 = tpu.matmul %300, %8, %cst_92 {dimension_numbers = #tpu.dot_dimension_numbers<[1], [0], [0], [1], [0, 0, 1, 1], [], []>} : vector<8x128xf32>, vector<128x512xf32>, vector<8x512xf32> -> vector<8x512xf32>
    %326 = arith.addf %324, %325 : vector<8x512xf32>
    %327 = vector.extract_strided_slice %326 {offsets = [0, 0], sizes = [8, 384], strides = [1, 1]} : vector<8x512xf32> to vector<8x384xf32>
    %cst_93 = arith.constant 5.000000e-01 : f32
    %328 = vector.broadcast %cst_93 : f32 to vector<8x384xf32>
    %329 = arith.mulf %328, %327 : vector<8x384xf32>
    %330 = math.tanh %329 : vector<8x384xf32>
    %cst_94 = arith.constant 5.000000e-01 : f32
    %331 = vector.broadcast %cst_94 : f32 to vector<8x384xf32>
    %332 = arith.mulf %331, %330 : vector<8x384xf32>
    %cst_95 = arith.constant 5.000000e-01 : f32
    %333 = vector.broadcast %cst_95 : f32 to vector<8x384xf32>
    %334 = arith.addf %332, %333 : vector<8x384xf32>
    %335 = vector.extract_strided_slice %326 {offsets = [0, 384], sizes = [8, 128], strides = [1, 1]} : vector<8x512xf32> to vector<8x128xf32>
    %336 = math.tanh %335 : vector<8x128xf32>
    %337 = vector.extract_strided_slice %334 {offsets = [0, 0], sizes = [8, 128], strides = [1, 1]} : vector<8x384xf32> to vector<8x128xf32>
    %338 = vector.extract_strided_slice %334 {offsets = [0, 128], sizes = [8, 128], strides = [1, 1]} : vector<8x384xf32> to vector<8x128xf32>
    %339 = vector.extract_strided_slice %334 {offsets = [0, 256], sizes = [8, 128], strides = [1, 1]} : vector<8x384xf32> to vector<8x128xf32>
    %340 = arith.mulf %338, %298 : vector<8x128xf32>
    %341 = arith.mulf %337, %336 : vector<8x128xf32>
    %342 = arith.addf %340, %341 : vector<8x128xf32>
    %343 = math.tanh %342 : vector<8x128xf32>
    %344 = arith.mulf %339, %343 : vector<8x128xf32>
    %cst_96 = arith.constant dense<0.000000e+00> : vector<8x512xf32>
    %345 = tpu.matmul %344, %9, %cst_96 {dimension_numbers = #tpu.dot_dimension_numbers<[1], [0], [0], [1], [0, 0, 1, 1], [], []>} : vector<8x128xf32>, vector<128x512xf32>, vector<8x512xf32> -> vector<8x512xf32>
    %cst_97 = arith.constant dense<0.000000e+00> : vector<8x512xf32>
    %346 = tpu.matmul %323, %10, %cst_97 {dimension_numbers = #tpu.dot_dimension_numbers<[1], [0], [0], [1], [0, 0, 1, 1], [], []>} : vector<8x128xf32>, vector<128x512xf32>, vector<8x512xf32> -> vector<8x512xf32>
    %347 = arith.addf %345, %346 : vector<8x512xf32>
    %348 = vector.broadcast %11 : vector<1x512xf32> to vector<8x512xf32>
    %349 = arith.addf %347, %348 : vector<8x512xf32>
    %350 = vector.extract_strided_slice %349 {offsets = [0, 0], sizes = [8, 384], strides = [1, 1]} : vector<8x512xf32> to vector<8x384xf32>
    %cst_98 = arith.constant 5.000000e-01 : f32
    %351 = vector.broadcast %cst_98 : f32 to vector<8x384xf32>
    %352 = arith.mulf %351, %350 : vector<8x384xf32>
    %353 = math.tanh %352 : vector<8x384xf32>
    %cst_99 = arith.constant 5.000000e-01 : f32
    %354 = vector.broadcast %cst_99 : f32 to vector<8x384xf32>
    %355 = arith.mulf %354, %353 : vector<8x384xf32>
    %cst_100 = arith.constant 5.000000e-01 : f32
    %356 = vector.broadcast %cst_100 : f32 to vector<8x384xf32>
    %357 = arith.addf %355, %356 : vector<8x384xf32>
    %358 = vector.extract_strided_slice %349 {offsets = [0, 384], sizes = [8, 128], strides = [1, 1]} : vector<8x512xf32> to vector<8x128xf32>
    %359 = math.tanh %358 : vector<8x128xf32>
    %360 = vector.extract_strided_slice %357 {offsets = [0, 0], sizes = [8, 128], strides = [1, 1]} : vector<8x384xf32> to vector<8x128xf32>
    %361 = vector.extract_strided_slice %357 {offsets = [0, 128], sizes = [8, 128], strides = [1, 1]} : vector<8x384xf32> to vector<8x128xf32>
    %362 = vector.extract_strided_slice %357 {offsets = [0, 256], sizes = [8, 128], strides = [1, 1]} : vector<8x384xf32> to vector<8x128xf32>
    %363 = arith.mulf %361, %321 : vector<8x128xf32>
    %364 = arith.mulf %360, %359 : vector<8x128xf32>
    %365 = arith.addf %363, %364 : vector<8x128xf32>
    %366 = math.tanh %365 : vector<8x128xf32>
    %367 = arith.mulf %362, %366 : vector<8x128xf32>
    %c0_101 = arith.constant 0 : index
    %c0_102 = arith.constant 0 : index
    %368 = vector.load %arg7[%c0_101, %c0_102] : memref<128x128xf32, #tpu.memory_space<vmem>>, vector<128x128xf32>
    %cst_103 = arith.constant dense<0.000000e+00> : vector<8x128xf32>
    %369 = tpu.matmul %367, %368, %cst_103 {dimension_numbers = #tpu.dot_dimension_numbers<[1], [0], [0], [1], [0, 0, 1, 1], [], []>} : vector<8x128xf32>, vector<128x128xf32>, vector<8x128xf32> -> vector<8x128xf32>
    %c0_104 = arith.constant 0 : index
    %c0_105 = arith.constant 0 : index
    %370 = vector.load %arg8[%c0_104, %c0_105] : memref<1x128xf32, #tpu.memory_space<vmem>>, vector<1x128xf32>
    %371 = vector.broadcast %370 : vector<1x128xf32> to vector<8x128xf32>
    %372 = arith.addf %369, %371 : vector<8x128xf32>
    %c0_106 = arith.constant 0 : index
    %c0_107 = arith.constant 0 : index
    %373 = vector.load %arg9[%c0_106, %c0_107] : memref<8x128xf32, #tpu.memory_space<vmem>>, vector<8x128xf32>
    tpu.vector_store %arg9[%c0_106, %c0_107], %372 {strides = array<i32>} : memref<8x128xf32, #tpu.memory_space<vmem>>, vector<8x128xf32>,
    return
  }
}

</mosaic_0001>

<llo_original>
// kernel: eeg_lstm_forward.1
$region0: #{eeg_lstm_forward.1}
  #allocation0 [shape = 'u32[]', space=smem, size = 0x4, offset = 0x4, fixed_abs, tag = 'smem constant byte address 0x4 - core index']
  #allocation1 [shape = 'u32[144,128]{1,0:T(1,128)}', space=vmem, size = 0x12000, scoped, tag = 'internal scratch']
  #allocation2 [shape = 'f32[64,512]{1,0:T(8,128)}', space=vmem, size = 0x20000, scoped, tag = 'scratch operand']
  %s0 = inlined_call_operand.vmem [shape: f32[8,8,32], index: 0, kind: input, shape index: {}]
  %s1 = inlined_call_operand.vmem [shape: f32[32,512], index: 1, kind: input, shape index: {}]
  %s2 = inlined_call_operand.hbm [shape: f32[128,512], index: 2, kind: input, shape index: {}]
  %s3 = inlined_call_operand.vmem [shape: f32[1,512], index: 3, kind: input, shape index: {}]
  %s4 = inlined_call_operand.hbm [shape: f32[128,512], index: 4, kind: input, shape index: {}]
  %s5 = inlined_call_operand.hbm [shape: f32[128,512], index: 5, kind: input, shape index: {}]
  %s6 = inlined_call_operand.vmem [shape: f32[1,512], index: 6, kind: input, shape index: {}]
  %s7 = inlined_call_operand.hbm [shape: f32[128,128], index: 7, kind: input, shape index: {}]
  %s8 = inlined_call_operand.vmem [shape: f32[1,128], index: 8, kind: input, shape index: {}]
  %s9 = inlined_call_operand.vmem [shape: f32[8,128], index: 9, kind: output, shape index: {}]
  %s10 = sld [smem:[#allocation0]]
  $region62: #{eeg_lstm_forward.1} parent=0
    _
  %s12 = ssub.s32 1, %s10
  %s13 = scalar_select 0, %s12, %s10
  $region1: #{eeg_lstm_forward.1} parent=0
    #allocation3 [shape = 'u8[262144]{0}', space=vmem, size = 0x40000, scoped, tag = 'input window, operand 2, single buffered']
    #allocation4 [shape = 's32[1]{0}', space=sflag, size = 0x4, scoped, tag = 'scoped memory for eeg_lstm_forward.1']
    #allocation5 [shape = 'u8[262144]{0}', space=vmem, size = 0x40000, scoped, tag = 'input window, operand 4, single buffered']
    #allocation6 [shape = 's32[1]{0}', space=sflag, size = 0x4, scoped, tag = 'scoped memory for eeg_lstm_forward.1']
    #allocation7 [shape = 'u8[262144]{0}', space=vmem, size = 0x40000, scoped, tag = 'input window, operand 5, single buffered']
    #allocation8 [shape = 'u8[65536]{0}', space=vmem, size = 0x10000, scoped, tag = 'input window, operand 7, single buffered']
    #allocation9 [shape = 's32[1]{0}', space=sflag, size = 0x4, scoped, tag = 'scoped memory for eeg_lstm_forward.1']
    %14 = vsyncpa [#allocation4], 0
    %15 = vsyncpa [#allocation6], 0
    %16 = vsyncpa [#allocation9], 0
    // Predicated region
    $region2: #{eeg_lstm_forward.1} parent=1 // pred_check
      _
    $region3: #{eeg_lstm_forward.1} parent=1 // pred_check_branch
      %18 = sbr.rel (0) target = $region5
    $region4: #{eeg_lstm_forward.1} parent=1 // pred_region
      _
    $region5: #{eeg_lstm_forward.1} parent=1 // pred_fallthru
      _
    // Predicated region
    $region6: #{eeg_lstm_forward.1} parent=1 // pred_check
      _
    $region7: #{eeg_lstm_forward.1} parent=1 // pred_check_branch
      %20 = sbr.rel (0) target = $region9
    $region8: #{eeg_lstm_forward.1} parent=1 // pred_region
      _
    $region9: #{eeg_lstm_forward.1} parent=1 // pred_fallthru
      _
    // Predicated region
    $region10: #{eeg_lstm_forward.1} parent=1 // pred_check
      _
    $region11: #{eeg_lstm_forward.1} parent=1 // pred_check_branch
      %22 = sbr.rel (0) target = $region13
    $region12: #{eeg_lstm_forward.1} parent=1 // pred_region
      %s24 = ssub.s32 8192, 8192
      %25 = vsyncadd [#allocation4], %s24
      %s26 = sshll.u32 [#allocation3], 4
      %s27 = int_to_ptr.vmem [resolvable:$true] %s26
      %32 = dma.hbm_to_vmem [thread:$0]  %s2, 8192, %s27, [#allocation4], 512, 512, 32
    $region13: #{eeg_lstm_forward.1} parent=1 // pred_fallthru
      _
    // Predicated region
    $region14: #{eeg_lstm_forward.1} parent=1 // pred_check
      _
    $region15: #{eeg_lstm_forward.1} parent=1 // pred_check_branch
      %34 = sbr.rel (0) target = $region17
    $region16: #{eeg_lstm_forward.1} parent=1 // pred_region
      _
    $region17: #{eeg_lstm_forward.1} parent=1 // pred_fallthru
      _
    // Predicated region
    $region18: #{eeg_lstm_forward.1} parent=1 // pred_check
      _
    $region19: #{eeg_lstm_forward.1} parent=1 // pred_check_branch
      %36 = sbr.rel (0) target = $region21
    $region20: #{eeg_lstm_forward.1} parent=1 // pred_region
      %s38 = ssub.s32 8192, 8192
      %39 = vsyncadd [#allocation6], %s38
      %s40 = sshll.u32 [#allocation5], 4
      %s41 = int_to_ptr.vmem [resolvable:$true] %s40
      %46 = dma.hbm_to_vmem [thread:$0]  %s4, 8192, %s41, [#allocation6], 512, 512, 32
    $region21: #{eeg_lstm_forward.1} parent=1 // pred_fallthru
      _
    // Predicated region
    $region22: #{eeg_lstm_forward.1} parent=1 // pred_check
      _
    $region23: #{eeg_lstm_forward.1} parent=1 // pred_check_branch
      %48 = sbr.rel (0) target = $region25
    $region24: #{eeg_lstm_forward.1} parent=1 // pred_region
      %s50 = ssub.s32 8192, 8192
      %51 = vsyncadd [#allocation6], %s50
      %s52 = sshll.u32 [#allocation7], 4
      %s53 = int_to_ptr.vmem [resolvable:$true] %s52
      %58 = dma.hbm_to_vmem [thread:$0]  %s5, 8192, %s53, [#allocation6], 512, 512, 32
    $region25: #{eeg_lstm_forward.1} parent=1 // pred_fallthru
      _
    // Predicated region
    $region26: #{eeg_lstm_forward.1} parent=1 // pred_check
      _
    $region27: #{eeg_lstm_forward.1} parent=1 // pred_check_branch
      %60 = sbr.rel (0) target = $region29
    $region28: #{eeg_lstm_forward.1} parent=1 // pred_region
      _
    $region29: #{eeg_lstm_forward.1} parent=1 // pred_fallthru
      _
    // Predicated region
    $region30: #{eeg_lstm_forward.1} parent=1 // pred_check
      _
    $region31: #{eeg_lstm_forward.1} parent=1 // pred_check_branch
      %62 = sbr.rel (0) target = $region33
    $region32: #{eeg_lstm_forward.1} parent=1 // pred_region
      %s64 = ssub.s32 2048, 2048
      %65 = vsyncadd [#allocation9], %s64
      %s66 = sshll.u32 [#allocation8], 4
      %s67 = int_to_ptr.vmem [resolvable:$true] %s66
      %72 = dma.hbm_to_vmem [thread:$0]  %s7, 2048, %s67, [#allocation9], 128, 128, 8
    $region33: #{eeg_lstm_forward.1} parent=1 // pred_fallthru
      _
    // Predicated region
    $region34: #{eeg_lstm_forward.1} parent=1 // pred_check
      _
    $region35: #{eeg_lstm_forward.1} parent=1 // pred_check_branch
      %74 = sbr.rel (0) target = $region37
    $region36: #{eeg_lstm_forward.1} parent=1 // pred_region
      _
    $region37: #{eeg_lstm_forward.1} parent=1 // pred_fallthru
      _
    // Predicated region
    $region38: #{eeg_lstm_forward.1} parent=1 // pred_check
      _
    $region39: #{eeg_lstm_forward.1} parent=1 // pred_check_branch
      %76 = sbr.rel (0) target = $region41
    $region40: #{eeg_lstm_forward.1} parent=1 // pred_region
      %77 = dma.done [#allocation4], 8192
    $region41: #{eeg_lstm_forward.1} parent=1 // pred_fallthru
      _
    // Predicated region
    $region42: #{eeg_lstm_forward.1} parent=1 // pred_check
      _
    $region43: #{eeg_lstm_forward.1} parent=1 // pred_check_branch
      %79 = sbr.rel (0) target = $region45
    $region44: #{eeg_lstm_forward.1} parent=1 // pred_region
      %80 = dma.done [#allocation6], 8192
    $region45: #{eeg_lstm_forward.1} parent=1 // pred_fallthru
      _
    // Predicated region
    $region46: #{eeg_lstm_forward.1} parent=1 // pred_check
      _
    $region47: #{eeg_lstm_forward.1} parent=1 // pred_check_branch
      %82 = sbr.rel (0) target = $region49
    $region48: #{eeg_lstm_forward.1} parent=1 // pred_region
      %83 = dma.done [#allocation6], 8192
    $region49: #{eeg_lstm_forward.1} parent=1 // pred_fallthru
      _
    // Predicated region
    $region50: #{eeg_lstm_forward.1} parent=1 // pred_check
      _
    $region51: #{eeg_lstm_forward.1} parent=1 // pred_check_branch
      %85 = sbr.rel (0) target = $region53
    $region52: #{eeg_lstm_forward.1} parent=1 // pred_region
      %86 = dma.done [#allocation9], 2048
    $region53: #{eeg_lstm_forward.1} parent=1 // pred_fallthru
      _
    %v87 = vld [vmem:[%s0] sm:$0xff]
    %v88 = vld [vmem:[%s0 + $0x8] sm:$0xff]
    %v89 = vld [vmem:[%s0 + $0x10] sm:$0xff]
    %v90 = vld [vmem:[%s0 + $0x18] sm:$0xff]
    %v91 = vld [vmem:[%s0 + $0x20] sm:$0xff]
    %v92 = vld [vmem:[%s0 + $0x28] sm:$0xff]
    %v93 = vld [vmem:[%s0 + $0x30] sm:$0xff]
    %v94 = vld [vmem:[%s0 + $0x38] sm:$0xff]
    %v95 = vld [vmem:[%s1] sm:$0xff]
    %v96 = vld [vmem:[%s1 + $0x8] sm:$0xff]
    %v97 = vld [vmem:[%s1 + $0x10] sm:$0xff]
    %v98 = vld [vmem:[%s1 + $0x18] sm:$0xff]
    %v99 = vld [vmem:[%s1 + $0x20] sm:$0xff]
    %v100 = vld [vmem:[%s1 + $0x28] sm:$0xff]
    %v101 = vld [vmem:[%s1 + $0x30] sm:$0xff]
    %v102 = vld [vmem:[%s1 + $0x38] sm:$0xff]
    %v103 = vld [vmem:[%s1 + $0x40] sm:$0xff]
    %v104 = vld [vmem:[%s1 + $0x48] sm:$0xff]
    %v105 = vld [vmem:[%s1 + $0x50] sm:$0xff]
    %v106 = vld [vmem:[%s1 + $0x58] sm:$0xff]
    %v107 = vld [vmem:[%s1 + $0x60] sm:$0xff]
    %v108 = vld [vmem:[%s1 + $0x68] sm:$0xff]
    %v109 = vld [vmem:[%s1 + $0x70] sm:$0xff]
    %v110 = vld [vmem:[%s1 + $0x78] sm:$0xff]
    %v111 = vld [vmem:[%s3] sm:$0xf]
    %v113 = vlaneseq
    %v114 = vshrl.u32 %v113, 7
    %v115 = vsub.s32 0, %v114
    %v116 = vrot.slane %v111, %v115
    %v117 = vlaneseq
    %v118 = vshrl.u32 %v117, 7
    %v119 = vsub.s32 1, %v118
    %v120 = vrot.slane %v111, %v119
    %v121 = vlaneseq
    %v122 = vshrl.u32 %v121, 7
    %v123 = vsub.s32 2, %v122
    %v124 = vrot.slane %v111, %v123
    %v125 = vlaneseq
    %v126 = vshrl.u32 %v125, 7
    %v127 = vsub.s32 3, %v126
    %v128 = vrot.slane %v111, %v127
    %vm133 = vcmask 261120
    %v135 = vsel %vm133, %v87, 0
    %v138 = vsel %vm133, %v88, 0
    %v141 = vsel %vm133, %v89, 0
    %v144 = vsel %vm133, %v90, 0
    %v147 = vsel %vm133, %v91, 0
    %v150 = vsel %vm133, %v92, 0
    %v153 = vsel %vm133, %v93, 0
    %v156 = vsel %vm133, %v94, 0
    %158 = vmatprep.subr.mxu0 %v96
    %159 = vmatpush1.msra.mxu0 %v95
    %160 = vmatprep.subr.mxu0 %v100
    %161 = vmatpush1.msra.mxu0 %v99
    %162 = vmatprep.subr.mxu0 %v104
    %163 = vmatpush1.msra.mxu0 %v103
    %164 = vmatprep.subr.mxu0 %v108
    %165 = vmatpush1.msra.mxu0 %v107
    %166 = vmatprep.subr.mxu0 0.0
    %167 = vmatpush1.msra.mxu0 0.0
    %168 = vmatprep.subr.mxu0 0.0
    %169 = vmatpush1.msra.mxu0 0.0
    %170 = vmatprep.subr.mxu0 0.0
    %171 = vmatpush1.msra.mxu0 0.0
    %172 = vmatprep.subr.mxu0 0.0
    %173 = vmatpush1.msra.mxu0 0.0
    %174 = vmatprep.subr.mxu0 0.0
    %175 = vmatpush1.msra.mxu0 0.0
    %176 = vmatprep.subr.mxu0 0.0
    %177 = vmatpush1.msra.mxu0 0.0
    %178 = vmatprep.subr.mxu0 0.0
    %179 = vmatpush1.msra.mxu0 0.0
    %180 = vmatprep.subr.mxu0 0.0
    %181 = vmatpush1.msra.mxu0 0.0
    %182 = vmatprep.subr.mxu0 0.0
    %183 = vmatpush1.msra.mxu0 0.0
    %184 = vmatprep.subr.mxu0 0.0
    %185 = vmatpush1.msra.mxu0 0.0
    %186 = vmatprep.subr.mxu0 0.0
    %187 = vmatpush1.msra.mxu0 0.0
    %188 = vmatprep.subr.mxu0 0.0
    %189 = vmatpush1.msra.mxu0 0.0
    %190 = vmatprep.subr.mxu0 0.0
    %191 = vmatpush1.msra.mxu0 0.0
    %192 = vmatprep.subr.mxu0 0.0
    %193 = vmatpush1.msra.mxu0 0.0
    %194 = vmatprep.subr.mxu0 0.0
    %195 = vmatpush1.msra.mxu0 0.0
    %196 = vmatprep.subr.mxu0 0.0
    %197 = vmatpush1.msra.mxu0 0.0
    %198 = vmatprep.subr.mxu0 0.0
    %199 = vmatpush1.msra.mxu0 0.0
    %200 = vmatprep.subr.mxu0 0.0
    %201 = vmatpush1.msra.mxu0 0.0
    %202 = vmatprep.subr.mxu0 0.0
    %203 = vmatpush1.msra.mxu0 0.0
    %204 = vmatprep.subr.mxu0 0.0
    %205 = vmatpush1.msra.mxu0 0.0
    %206 = vmatprep.subr.mxu0 0.0
    %207 = vmatpush1.msra.mxu0 0.0
    %208 = vmatprep.subr.mxu0 0.0
    %209 = vmatpush1.msra.mxu0 0.0
    %210 = vmatprep.subr.mxu0 0.0
    %211 = vmatpush1.msra.mxu0 0.0
    %212 = vmatprep.subr.mxu0 0.0
    %213 = vmatpush1.msra.mxu0 0.0
    %214 = vmatprep.subr.mxu0 0.0
    %215 = vmatpush1.msra.mxu0 0.0
    %216 = vmatprep.subr.mxu0 0.0
    %217 = vmatpush1.msra.mxu0 0.0
    %218 = vmatprep.subr.mxu0 0.0
    %219 = vmatpush1.msra.mxu0 0.0
    %220 = vmatprep.subr.mxu0 0.0
    %221 = vmatpush1.msra.mxu0 0.0
    %222 = vmatprep.mubr.f32.mxu0 0.0
    %223 = vmatmul.mubr.f32.gmra.mrb[0].mxu0 %v135
    %v224 = vpop.f32.mrb[0].mxu0
    %v225 = vadd.f32 %v116, %v224
    %v226 = vpop.f32.mrb[0].mxu0
    %v227 = vadd.f32 %v120, %v226
    %228 = vmatprep.mubr.f32.mxu0 0.0
    %229 = vmatmul.mubr.f32.gmra.mrb[0].mxu0 %v138
    %v230 = vpop.f32.mrb[0].mxu0
    %v231 = vadd.f32 %v116, %v230
    %v232 = vpop.f32.mrb[0].mxu0
    %v233 = vadd.f32 %v120, %v232
    %234 = vmatprep.mubr.f32.mxu0 0.0
    %235 = vmatmul.mubr.f32.gmra.mrb[0].mxu0 %v141
    %v236 = vpop.f32.mrb[0].mxu0
    %v237 = vadd.f32 %v116, %v236
    %v238 = vpop.f32.mrb[0].mxu0
    %v239 = vadd.f32 %v120, %v238
    %240 = vmatprep.mubr.f32.mxu0 0.0
    %241 = vmatmul.mubr.f32.gmra.mrb[0].mxu0 %v144
    %v242 = vpop.f32.mrb[0].mxu0
    %v243 = vadd.f32 %v116, %v242
    %v244 = vpop.f32.mrb[0].mxu0
    %v245 = vadd.f32 %v120, %v244
    %246 = vmatprep.mubr.f32.mxu0 0.0
    %247 = vmatmul.mubr.f32.gmra.mrb[0].mxu0 %v147
    %v248 = vpop.f32.mrb[0].mxu0
    %v249 = vadd.f32 %v116, %v248
    %v250 = vpop.f32.mrb[0].mxu0
    %v251 = vadd.f32 %v120, %v250
    %252 = vmatprep.mubr.f32.mxu0 0.0
    %253 = vmatmul.mubr.f32.gmra.mrb[0].mxu0 %v150
    %v254 = vpop.f32.mrb[0].mxu0
    %v255 = vadd.f32 %v116, %v254
    %v256 = vpop.f32.mrb[0].mxu0
    %v257 = vadd.f32 %v120, %v256
    %258 = vmatprep.mubr.f32.mxu0 0.0
    %259 = vmatmul.mubr.f32.gmra.mrb[0].mxu0 %v153
    %v260 = vpop.f32.mrb[0].mxu0
    %v261 = vadd.f32 %v116, %v260
    %v262 = vpop.f32.mrb[0].mxu0
    %v263 = vadd.f32 %v120, %v262
    %264 = vmatprep.mubr.f32.mxu0 0.0
    %265 = vmatmul.mubr.f32.gmra.mrb[0].mxu0 %v156
    %v266 = vpop.f32.mrb[0].mxu0
    %v267 = vadd.f32 %v116, %v266
    %v268 = vpop.f32.mrb[0].mxu0
    %v269 = vadd.f32 %v120, %v268
    %270 = vdwg.mxu0
    %271 = vmatprep.subr.mxu0 %v98
    %272 = vmatpush1.msra.mxu0 %v97
    %273 = vmatprep.subr.mxu0 %v102
    %274 = vmatpush1.msra.mxu0 %v101
    %275 = vmatprep.subr.mxu0 %v106
    %276 = vmatpush1.msra.mxu0 %v105
    %277 = vmatprep.subr.mxu0 %v110
    %278 = vmatpush1.msra.mxu0 %v109
    %279 = vmatprep.subr.mxu0 0.0
    %280 = vmatpush1.msra.mxu0 0.0
    %281 = vmatprep.subr.mxu0 0.0
    %282 = vmatpush1.msra.mxu0 0.0
    %283 = vmatprep.subr.mxu0 0.0
    %284 = vmatpush1.msra.mxu0 0.0
    %285 = vmatprep.subr.mxu0 0.0
    %286 = vmatpush1.msra.mxu0 0.0
    %287 = vmatprep.subr.mxu0 0.0
    %288 = vmatpush1.msra.mxu0 0.0
    %289 = vmatprep.subr.mxu0 0.0
    %290 = vmatpush1.msra.mxu0 0.0
    %291 = vmatprep.subr.mxu0 0.0
    %292 = vmatpush1.msra.mxu0 0.0
    %293 = vmatprep.subr.mxu0 0.0
    %294 = vmatpush1.msra.mxu0 0.0
    %295 = vmatprep.subr.mxu0 0.0
    %296 = vmatpush1.msra.mxu0 0.0
    %297 = vmatprep.subr.mxu0 0.0
    %298 = vmatpush1.msra.mxu0 0.0
    %299 = vmatprep.subr.mxu0 0.0
    %300 = vmatpush1.msra.mxu0 0.0
    %301 = vmatprep.subr.mxu0 0.0
    %302 = vmatpush1.msra.mxu0 0.0
    %303 = vmatprep.subr.mxu0 0.0
    %304 = vmatpush1.msra.mxu0 0.0
    %305 = vmatprep.subr.mxu0 0.0
    %306 = vmatpush1.msra.mxu0 0.0
    %307 = vmatprep.subr.mxu0 0.0
    %308 = vmatpush1.msra.mxu0 0.0
    %309 = vmatprep.subr.mxu0 0.0
    %310 = vmatpush1.msra.mxu0 0.0
    %311 = vmatprep.subr.mxu0 0.0
    %312 = vmatpush1.msra.mxu0 0.0
    %313 = vmatprep.subr.mxu0 0.0
    %314 = vmatpush1.msra.mxu0 0.0
    %315 = vmatprep.subr.mxu0 0.0
    %316 = vmatpush1.msra.mxu0 0.0
    %317 = vmatprep.subr.mxu0 0.0
    %318 = vmatpush1.msra.mxu0 0.0
    %319 = vmatprep.subr.mxu0 0.0
    %320 = vmatpush1.msra.mxu0 0.0
    %321 = vmatprep.subr.mxu0 0.0
    %322 = vmatpush1.msra.mxu0 0.0
    %323 = vmatprep.subr.mxu0 0.0
    %324 = vmatpush1.msra.mxu0 0.0
    %325 = vmatprep.subr.mxu0 0.0
    %326 = vmatpush1.msra.mxu0 0.0
    %327 = vmatprep.subr.mxu0 0.0
    %328 = vmatpush1.msra.mxu0 0.0
    %329 = vmatprep.subr.mxu0 0.0
    %330 = vmatpush1.msra.mxu0 0.0
    %331 = vmatprep.subr.mxu0 0.0
    %332 = vmatpush1.msra.mxu0 0.0
    %333 = vmatprep.subr.mxu0 0.0
    %334 = vmatpush1.msra.mxu0 0.0
    %335 = vmatprep.mubr.f32.mxu0 0.0
    %336 = vmatmul.mubr.f32.gmra.mrb[0].mxu0 %v135
    %v337 = vpop.f32.mrb[0].mxu0
    %v338 = vadd.f32 %v124, %v337
    %v339 = vpop.f32.mrb[0].mxu0
    %v340 = vadd.f32 %v128, %v339
    %341 = vmatprep.mubr.f32.mxu0 0.0
    %342 = vmatmul.mubr.f32.gmra.mrb[0].mxu0 %v138
    %v343 = vpop.f32.mrb[0].mxu0
    %v344 = vadd.f32 %v124, %v343
    %v345 = vpop.f32.mrb[0].mxu0
    %v346 = vadd.f32 %v128, %v345
    %347 = vmatprep.mubr.f32.mxu0 0.0
    %348 = vmatmul.mubr.f32.gmra.mrb[0].mxu0 %v141
    %v349 = vpop.f32.mrb[0].mxu0
    %v350 = vadd.f32 %v124, %v349
    %v351 = vpop.f32.mrb[0].mxu0
    %v352 = vadd.f32 %v128, %v351
    %353 = vmatprep.mubr.f32.mxu0 0.0
    %354 = vmatmul.mubr.f32.gmra.mrb[0].mxu0 %v144
    %v355 = vpop.f32.mrb[0].mxu0
    %v356 = vadd.f32 %v124, %v355
    %v357 = vpop.f32.mrb[0].mxu0
    %v358 = vadd.f32 %v128, %v357
    %359 = vmatprep.mubr.f32.mxu0 0.0
    %360 = vmatmul.mubr.f32.gmra.mrb[0].mxu0 %v147
    %v361 = vpop.f32.mrb[0].mxu0
    %v362 = vadd.f32 %v124, %v361
    %v363 = vpop.f32.mrb[0].mxu0
    %v364 = vadd.f32 %v128, %v363
    %365 = vmatprep.mubr.f32.mxu0 0.0
    %366 = vmatmul.mubr.f32.gmra.mrb[0].mxu0 %v150
    %v367 = vpop.f32.mrb[0].mxu0
    %v368 = vadd.f32 %v124, %v367
    %v369 = vpop.f32.mrb[0].mxu0
    %v370 = vadd.f32 %v128, %v369
    %371 = vmatprep.mubr.f32.mxu0 0.0
    %372 = vmatmul.mubr.f32.gmra.mrb[0].mxu0 %v153
    %v373 = vpop.f32.mrb[0].mxu0
    %v374 = vadd.f32 %v124, %v373
    %v375 = vpop.f32.mrb[0].mxu0
    %v376 = vadd.f32 %v128, %v375
    %377 = vmatprep.mubr.f32.mxu0 0.0
    %378 = vmatmul.mubr.f32.gmra.mrb[0].mxu0 %v156
    %v379 = vpop.f32.mrb[0].mxu0
    %v380 = vadd.f32 %v124, %v379
    %v381 = vpop.f32.mrb[0].mxu0
    %v382 = vadd.f32 %v128, %v381
    %383 = vdwg.mxu0
    %384 = vst [vmem:[#allocation2] sm:$0xff] %v225
    %385 = vst [vmem:[#allocation2 + $0x8] sm:$0xff] %v227
    %386 = vst [vmem:[#allocation2 + $0x10] sm:$0xff] %v338
    %387 = vst [vmem:[#allocation2 + $0x18] sm:$0xff] %v340
    %388 = vst [vmem:[#allocation2 + $0x20] sm:$0xff] %v231
    %389 = vst [vmem:[#allocation2 + $0x28] sm:$0xff] %v233
    %390 = vst [vmem:[#allocation2 + $0x30] sm:$0xff] %v344
    %391 = vst [vmem:[#allocation2 + $0x38] sm:$0xff] %v346
    %392 = vst [vmem:[#allocation2 + $0x40] sm:$0xff] %v237
    %393 = vst [vmem:[#allocation2 + $0x48] sm:$0xff] %v239
    %394 = vst [vmem:[#allocation2 + $0x50] sm:$0xff] %v350
    %395 = vst [vmem:[#allocation2 + $0x58] sm:$0xff] %v352
    %396 = vst [vmem:[#allocation2 + $0x60] sm:$0xff] %v243
    %397 = vst [vmem:[#allocation2 + $0x68] sm:$0xff] %v245
    %398 = vst [vmem:[#allocation2 + $0x70] sm:$0xff] %v356
    %399 = vst [vmem:[#allocation2 + $0x78] sm:$0xff] %v358
    %400 = vst [vmem:[#allocation2 + $0x80] sm:$0xff] %v249
    %401 = vst [vmem:[#allocation2 + $0x88] sm:$0xff] %v251
    %402 = vst [vmem:[#allocation2 + $0x90] sm:$0xff] %v362
    %403 = vst [vmem:[#allocation2 + $0x98] sm:$0xff] %v364
    %404 = vst [vmem:[#allocation2 + $0xa0] sm:$0xff] %v255
    %405 = vst [vmem:[#allocation2 + $0xa8] sm:$0xff] %v257
    %406 = vst [vmem:[#allocation2 + $0xb0] sm:$0xff] %v368
    %407 = vst [vmem:[#allocation2 + $0xb8] sm:$0xff] %v370
    %408 = vst [vmem:[#allocation2 + $0xc0] sm:$0xff] %v261
    %409 = vst [vmem:[#allocation2 + $0xc8] sm:$0xff] %v263
    %410 = vst [vmem:[#allocation2 + $0xd0] sm:$0xff] %v374
    %411 = vst [vmem:[#allocation2 + $0xd8] sm:$0xff] %v376
    %412 = vst [vmem:[#allocation2 + $0xe0] sm:$0xff] %v267
    %413 = vst [vmem:[#allocation2 + $0xe8] sm:$0xff] %v269
    %414 = vst [vmem:[#allocation2 + $0xf0] sm:$0xff] %v380
    %415 = vst [vmem:[#allocation2 + $0xf8] sm:$0xff] %v382
    %v416 = vld [vmem:[#allocation3] sm:$0xff]
    %v417 = vld [vmem:[#allocation3 + $0x8] sm:$0xff]
    %v418 = vld [vmem:[#allocation3 + $0x10] sm:$0xff]
    %v419 = vld [vmem:[#allocation3 + $0x18] sm:$0xff]
    %v420 = vld [vmem:[#allocation3 + $0x20] sm:$0xff]
    %v421 = vld [vmem:[#allocation3 + $0x28] sm:$0xff]
    %v422 = vld [vmem:[#allocation3 + $0x30] sm:$0xff]
    %v423 = vld [vmem:[#allocation3 + $0x38] sm:$0xff]
    %v424 = vld [vmem:[#allocation3 + $0x40] sm:$0xff]
    %v425 = vld [vmem:[#allocation3 + $0x48] sm:$0xff]
    %v426 = vld [vmem:[#allocation3 + $0x50] sm:$0xff]
    %v427 = vld [vmem:[#allocation3 + $0x58] sm:$0xff]
    %v428 = vld [vmem:[#allocation3 + $0x60] sm:$0xff]
    %v429 = vld [vmem:[#allocation3 + $0x68] sm:$0xff]
    %v430 = vld [vmem:[#allocation3 + $0x70] sm:$0xff]
    %v431 = vld [vmem:[#allocation3 + $0x78] sm:$0xff]
    %v432 = vld [vmem:[#allocation3 + $0x80] sm:$0xff]
    %v433 = vld [vmem:[#allocation3 + $0x88] sm:$0xff]
    %v434 = vld [vmem:[#allocation3 + $0x90] sm:$0xff]
    %v435 = vld [vmem:[#allocation3 + $0x98] sm:$0xff]
    %v436 = vld [vmem:[#allocation3 + $0xa0] sm:$0xff]
    %v437 = vld [vmem:[#allocation3 + $0xa8] sm:$0xff]
    %v438 = vld [vmem:[#allocation3 + $0xb0] sm:$0xff]
    %v439 = vld [vmem:[#allocation3 + $0xb8] sm:$0xff]
    %v440 = vld [vmem:[#allocation3 + $0xc0] sm:$0xff]
    %v441 = vld [vmem:[#allocation3 + $0xc8] sm:$0xff]
    %v442 = vld [vmem:[#allocation3 + $0xd0] sm:$0xff]
    %v443 = vld [vmem:[#allocation3 + $0xd8] sm:$0xff]
    %v444 = vld [vmem:[#allocation3 + $0xe0] sm:$0xff]
    %v445 = vld [vmem:[#allocation3 + $0xe8] sm:$0xff]
    %v446 = vld [vmem:[#allocation3 + $0xf0] sm:$0xff]
    %v447 = vld [vmem:[#allocation3 + $0xf8] sm:$0xff]
    %v448 = vld [vmem:[#allocation3 + $0x100] sm:$0xff]
    %v449 = vld [vmem:[#allocation3 + $0x108] sm:$0xff]
    %v450 = vld [vmem:[#allocation3 + $0x110] sm:$0xff]
    %v451 = vld [vmem:[#allocation3 + $0x118] sm:$0xff]
    %v452 = vld [vmem:[#allocation3 + $0x120] sm:$0xff]
    %v453 = vld [vmem:[#allocation3 + $0x128] sm:$0xff]
    %v454 = vld [vmem:[#allocation3 + $0x130] sm:$0xff]
    %v455 = vld [vmem:[#allocation3 + $0x138] sm:$0xff]
    %v456 = vld [vmem:[#allocation3 + $0x140] sm:$0xff]
    %v457 = vld [vmem:[#allocation3 + $0x148] sm:$0xff]
    %v458 = vld [vmem:[#allocation3 + $0x150] sm:$0xff]
    %v459 = vld [vmem:[#allocation3 + $0x158] sm:$0xff]
    %v460 = vld [vmem:[#allocation3 + $0x160] sm:$0xff]
    %v461 = vld [vmem:[#allocation3 + $0x168] sm:$0xff]
    %v462 = vld [vmem:[#allocation3 + $0x170] sm:$0xff]
    %v463 = vld [vmem:[#allocation3 + $0x178] sm:$0xff]
    %v464 = vld [vmem:[#allocation3 + $0x180] sm:$0xff]
    %v465 = vld [vmem:[#allocation3 + $0x188] sm:$0xff]
    %v466 = vld [vmem:[#allocation3 + $0x190] sm:$0xff]
    %v467 = vld [vmem:[#allocation3 + $0x198] sm:$0xff]
    %v468 = vld [vmem:[#allocation3 + $0x1a0] sm:$0xff]
    %v469 = vld [vmem:[#allocation3 + $0x1a8] sm:$0xff]
    %v470 = vld [vmem:[#allocation3 + $0x1b0] sm:$0xff]
    %v471 = vld [vmem:[#allocation3 + $0x1b8] sm:$0xff]
    %v472 = vld [vmem:[#allocation3 + $0x1c0] sm:$0xff]
    %v473 = vld [vmem:[#allocation3 + $0x1c8] sm:$0xff]
    %v474 = vld [vmem:[#allocation3 + $0x1d0] sm:$0xff]
    %v475 = vld [vmem:[#allocation3 + $0x1d8] sm:$0xff]
    %v476 = vld [vmem:[#allocation3 + $0x1e0] sm:$0xff]
    %v477 = vld [vmem:[#allocation3 + $0x1e8] sm:$0xff]
    %v478 = vld [vmem:[#allocation3 + $0x1f0] sm:$0xff]
    %v479 = vld [vmem:[#allocation3 + $0x1f8] sm:$0xff]
    %v480 = vld [vmem:[#allocation5] sm:$0xff]
    %v481 = vld [vmem:[#allocation5 + $0x8] sm:$0xff]
    %v482 = vld [vmem:[#allocation5 + $0x10] sm:$0xff]
    %v483 = vld [vmem:[#allocation5 + $0x18] sm:$0xff]
    %v484 = vld [vmem:[#allocation5 + $0x20] sm:$0xff]
    %v485 = vld [vmem:[#allocation5 + $0x28] sm:$0xff]
    %v486 = vld [vmem:[#allocation5 + $0x30] sm:$0xff]
    %v487 = vld [vmem:[#allocation5 + $0x38] sm:$0xff]
    %v488 = vld [vmem:[#allocation5 + $0x40] sm:$0xff]
    %v489 = vld [vmem:[#allocation5 + $0x48] sm:$0xff]
    %v490 = vld [vmem:[#allocation5 + $0x50] sm:$0xff]
    %v491 = vld [vmem:[#allocation5 + $0x58] sm:$0xff]
    %v492 = vld [vmem:[#allocation5 + $0x60] sm:$0xff]
    %v493 = vld [vmem:[#allocation5 + $0x68] sm:$0xff]
    %v494 = vld [vmem:[#allocation5 + $0x70] sm:$0xff]
    %v495 = vld [vmem:[#allocation5 + $0x78] sm:$0xff]
    %v496 = vld [vmem:[#allocation5 + $0x80] sm:$0xff]
    %v497 = vld [vmem:[#allocation5 + $0x88] sm:$0xff]
    %v498 = vld [vmem:[#allocation5 + $0x90] sm:$0xff]
    %v499 = vld [vmem:[#allocation5 + $0x98] sm:$0xff]
    %v500 = vld [vmem:[#allocation5 + $0xa0] sm:$0xff]
    %v501 = vld [vmem:[#allocation5 + $0xa8] sm:$0xff]
    %v502 = vld [vmem:[#allocation5 + $0xb0] sm:$0xff]
    %v503 = vld [vmem:[#allocation5 + $0xb8] sm:$0xff]
    %v504 = vld [vmem:[#allocation5 + $0xc0] sm:$0xff]
    %v505 = vld [vmem:[#allocation5 + $0xc8] sm:$0xff]
    %v506 = vld [vmem:[#allocation5 + $0xd0] sm:$0xff]
    %v507 = vld [vmem:[#allocation5 + $0xd8] sm:$0xff]
    %v508 = vld [vmem:[#allocation5 + $0xe0] sm:$0xff]
    %v509 = vld [vmem:[#allocation5 + $0xe8] sm:$0xff]
    %v510 = vld [vmem:[#allocation5 + $0xf0] sm:$0xff]
    %v511 = vld [vmem:[#allocation5 + $0xf8] sm:$0xff]
    %v512 = vld [vmem:[#allocation5 + $0x100] sm:$0xff]
    %v513 = vld [vmem:[#allocation5 + $0x108] sm:$0xff]
    %v514 = vld [vmem:[#allocation5 + $0x110] sm:$0xff]
    %v515 = vld [vmem:[#allocation5 + $0x118] sm:$0xff]
    %v516 = vld [vmem:[#allocation5 + $0x120] sm:$0xff]
    %v517 = vld [vmem:[#allocation5 + $0x128] sm:$0xff]
    %v518 = vld [vmem:[#allocation5 + $0x130] sm:$0xff]
    %v519 = vld [vmem:[#allocation5 + $0x138] sm:$0xff]
    %v520 = vld [vmem:[#allocation5 + $0x140] sm:$0xff]
    %v521 = vld [vmem:[#allocation5 + $0x148] sm:$0xff]
    %v522 = vld [vmem:[#allocation5 + $0x150] sm:$0xff]
    %v523 = vld [vmem:[#allocation5 + $0x158] sm:$0xff]
    %v524 = vld [vmem:[#allocation5 + $0x160] sm:$0xff]
    %v525 = vld [vmem:[#allocation5 + $0x168] sm:$0xff]
    %v526 = vld [vmem:[#allocation5 + $0x170] sm:$0xff]
    %v527 = vld [vmem:[#allocation5 + $0x178] sm:$0xff]
    %v528 = vld [vmem:[#allocation5 + $0x180] sm:$0xff]
    %v529 = vld [vmem:[#allocation5 + $0x188] sm:$0xff]
    %v530 = vld [vmem:[#allocation5 + $0x190] sm:$0xff]
    %v531 = vld [vmem:[#allocation5 + $0x198] sm:$0xff]
    %v532 = vld [vmem:[#allocation5 + $0x1a0] sm:$0xff]
    %v533 = vld [vmem:[#allocation5 + $0x1a8] sm:$0xff]
    %v534 = vld [vmem:[#allocation5 + $0x1b0] sm:$0xff]
    %v535 = vld [vmem:[#allocation5 + $0x1b8] sm:$0xff]
    %v536 = vld [vmem:[#allocation5 + $0x1c0] sm:$0xff]
    %v537 = vld [vmem:[#allocation5 + $0x1c8] sm:$0xff]
    %v538 = vld [vmem:[#allocation5 + $0x1d0] sm:$0xff]
    %v539 = vld [vmem:[#allocation5 + $0x1d8] sm:$0xff]
    %v540 = vld [vmem:[#allocation5 + $0x1e0] sm:$0xff]
    %v541 = vld [vmem:[#allocation5 + $0x1e8] sm:$0xff]
    %v542 = vld [vmem:[#allocation5 + $0x1f0] sm:$0xff]
    %v543 = vld [vmem:[#allocation5 + $0x1f8] sm:$0xff]
    %v544 = vld [vmem:[#allocation7] sm:$0xff]
    %v545 = vld [vmem:[#allocation7 + $0x8] sm:$0xff]
    %v546 = vld [vmem:[#allocation7 + $0x10] sm:$0xff]
    %v547 = vld [vmem:[#allocation7 + $0x18] sm:$0xff]
    %v548 = vld [vmem:[#allocation7 + $0x20] sm:$0xff]
    %v549 = vld [vmem:[#allocation7 + $0x28] sm:$0xff]
    %v550 = vld [vmem:[#allocation7 + $0x30] sm:$0xff]
    %v551 = vld [vmem:[#allocation7 + $0x38] sm:$0xff]
    %v552 = vld [vmem:[#allocation7 + $0x40] sm:$0xff]
    %v553 = vld [vmem:[#allocation7 + $0x48] sm:$0xff]
    %v554 = vld [vmem:[#allocation7 + $0x50] sm:$0xff]
    %v555 = vld [vmem:[#allocation7 + $0x58] sm:$0xff]
    %v556 = vld [vmem:[#allocation7 + $0x60] sm:$0xff]
    %v557 = vld [vmem:[#allocation7 + $0x68] sm:$0xff]
    %v558 = vld [vmem:[#allocation7 + $0x70] sm:$0xff]
    %v559 = vld [vmem:[#allocation7 + $0x78] sm:$0xff]
    %v560 = vld [vmem:[#allocation7 + $0x80] sm:$0xff]
    %v561 = vld [vmem:[#allocation7 + $0x88] sm:$0xff]
    %v562 = vld [vmem:[#allocation7 + $0x90] sm:$0xff]
    %v563 = vld [vmem:[#allocation7 + $0x98] sm:$0xff]
    %v564 = vld [vmem:[#allocation7 + $0xa0] sm:$0xff]
    %v565 = vld [vmem:[#allocation7 + $0xa8] sm:$0xff]
    %v566 = vld [vmem:[#allocation7 + $0xb0] sm:$0xff]
    %v567 = vld [vmem:[#allocation7 + $0xb8] sm:$0xff]
    %v568 = vld [vmem:[#allocation7 + $0xc0] sm:$0xff]
    %v569 = vld [vmem:[#allocation7 + $0xc8] sm:$0xff]
    %v570 = vld [vmem:[#allocation7 + $0xd0] sm:$0xff]
    %v571 = vld [vmem:[#allocation7 + $0xd8] sm:$0xff]
    %v572 = vld [vmem:[#allocation7 + $0xe0] sm:$0xff]
    %v573 = vld [vmem:[#allocation7 + $0xe8] sm:$0xff]
    %v574 = vld [vmem:[#allocation7 + $0xf0] sm:$0xff]
    %v575 = vld [vmem:[#allocation7 + $0xf8] sm:$0xff]
    %v576 = vld [vmem:[#allocation7 + $0x100] sm:$0xff]
    %v577 = vld [vmem:[#allocation7 + $0x108] sm:$0xff]
    %v578 = vld [vmem:[#allocation7 + $0x110] sm:$0xff]
    %v579 = vld [vmem:[#allocation7 + $0x118] sm:$0xff]
    %v580 = vld [vmem:[#allocation7 + $0x120] sm:$0xff]
    %v581 = vld [vmem:[#allocation7 + $0x128] sm:$0xff]
    %v582 = vld [vmem:[#allocation7 + $0x130] sm:$0xff]
    %v583 = vld [vmem:[#allocation7 + $0x138] sm:$0xff]
    %v584 = vld [vmem:[#allocation7 + $0x140] sm:$0xff]
    %v585 = vld [vmem:[#allocation7 + $0x148] sm:$0xff]
    %v586 = vld [vmem:[#allocation7 + $0x150] sm:$0xff]
    %v587 = vld [vmem:[#allocation7 + $0x158] sm:$0xff]
    %v588 = vld [vmem:[#allocation7 + $0x160] sm:$0xff]
    %v589 = vld [vmem:[#allocation7 + $0x168] sm:$0xff]
    %v590 = vld [vmem:[#allocation7 + $0x170] sm:$0xff]
    %v591 = vld [vmem:[#allocation7 + $0x178] sm:$0xff]
    %v592 = vld [vmem:[#allocation7 + $0x180] sm:$0xff]
    %v593 = vld [vmem:[#allocation7 + $0x188] sm:$0xff]
    %v594 = vld [vmem:[#allocation7 + $0x190] sm:$0xff]
    %v595 = vld [vmem:[#allocation7 + $0x198] sm:$0xff]
    %v596 = vld [vmem:[#allocation7 + $0x1a0] sm:$0xff]
    %v597 = vld [vmem:[#allocation7 + $0x1a8] sm:$0xff]
    %v598 = vld [vmem:[#allocation7 + $0x1b0] sm:$0xff]
    %v599 = vld [vmem:[#allocation7 + $0x1b8] sm:$0xff]
    %v600 = vld [vmem:[#allocation7 + $0x1c0] sm:$0xff]
    %v601 = vld [vmem:[#allocation7 + $0x1c8] sm:$0xff]
    %v602 = vld [vmem:[#allocation7 + $0x1d0] sm:$0xff]
    %v603 = vld [vmem:[#allocation7 + $0x1d8] sm:$0xff]
    %v604 = vld [vmem:[#allocation7 + $0x1e0] sm:$0xff]
    %v605 = vld [vmem:[#allocation7 + $0x1e8] sm:$0xff]
    %v606 = vld [vmem:[#allocation7 + $0x1f0] sm:$0xff]
    %v607 = vld [vmem:[#allocation7 + $0x1f8] sm:$0xff]
    %v608 = vld [vmem:[%s6] sm:$0xf]
    %v609 = vld [vmem:[#allocation2] sm:$0xff]
    %v610 = vld [vmem:[#allocation2 + $0x8] sm:$0xff]
    %v611 = vld [vmem:[#allocation2 + $0x10] sm:$0xff]
    %v612 = vld [vmem:[#allocation2 + $0x18] sm:$0xff]
    %613 = vmatprep.subr.mxu0 %v417
    %614 = vmatpush1.msra.mxu0 %v416
    %615 = vmatprep.subr.mxu0 %v421
    %616 = vmatpush1.msra.mxu0 %v420
    %617 = vmatprep.subr.mxu0 %v425
    %618 = vmatpush1.msra.mxu0 %v424
    %619 = vmatprep.subr.mxu0 %v429
    %620 = vmatpush1.msra.mxu0 %v428
    %621 = vmatprep.subr.mxu0 %v433
    %622 = vmatpush1.msra.mxu0 %v432
    %623 = vmatprep.subr.mxu0 %v437
    %624 = vmatpush1.msra.mxu0 %v436
    %625 = vmatprep.subr.mxu0 %v441
    %626 = vmatpush1.msra.mxu0 %v440
    %627 = vmatprep.subr.mxu0 %v445
    %628 = vmatpush1.msra.mxu0 %v444
    %629 = vmatprep.subr.mxu0 %v449
    %630 = vmatpush1.msra.mxu0 %v448
    %631 = vmatprep.subr.mxu0 %v453
    %632 = vmatpush1.msra.mxu0 %v452
    %633 = vmatprep.subr.mxu0 %v457
    %634 = vmatpush1.msra.mxu0 %v456
    %635 = vmatprep.subr.mxu0 %v461
    %636 = vmatpush1.msra.mxu0 %v460
    %637 = vmatprep.subr.mxu0 %v465
    %638 = vmatpush1.msra.mxu0 %v464
    %639 = vmatprep.subr.mxu0 %v469
    %640 = vmatpush1.msra.mxu0 %v468
    %641 = vmatprep.subr.mxu0 %v473
    %642 = vmatpush1.msra.mxu0 %v472
    %643 = vmatprep.subr.mxu0 %v477
    %644 = vmatpush1.msra.mxu0 %v476
    %645 = vmatprep.subr.mxu0 0.0
    %646 = vmatpush1.msra.mxu0 0.0
    %647 = vmatprep.subr.mxu0 0.0
    %648 = vmatpush1.msra.mxu0 0.0
    %649 = vmatprep.subr.mxu0 0.0
    %650 = vmatpush1.msra.mxu0 0.0
    %651 = vmatprep.subr.mxu0 0.0
    %652 = vmatpush1.msra.mxu0 0.0
    %653 = vmatprep.subr.mxu0 0.0
    %654 = vmatpush1.msra.mxu0 0.0
    %655 = vmatprep.subr.mxu0 0.0
    %656 = vmatpush1.msra.mxu0 0.0
    %657 = vmatprep.subr.mxu0 0.0
    %658 = vmatpush1.msra.mxu0 0.0
    %659 = vmatprep.subr.mxu0 0.0
    %660 = vmatpush1.msra.mxu0 0.0
    %661 = vmatprep.subr.mxu0 0.0
    %662 = vmatpush1.msra.mxu0 0.0
    %663 = vmatprep.subr.mxu0 0.0
    %664 = vmatpush1.msra.mxu0 0.0
    %665 = vmatprep.subr.mxu0 0.0
    %666 = vmatpush1.msra.mxu0 0.0
    %667 = vmatprep.subr.mxu0 0.0
    %668 = vmatpush1.msra.mxu0 0.0
    %669 = vmatprep.subr.mxu0 0.0
    %670 = vmatpush1.msra.mxu0 0.0
    %671 = vmatprep.subr.mxu0 0.0
    %672 = vmatpush1.msra.mxu0 0.0
    %673 = vmatprep.subr.mxu0 0.0
    %674 = vmatpush1.msra.mxu0 0.0
    %675 = vmatprep.subr.mxu0 0.0
    %676 = vmatpush1.msra.mxu0 0.0
    %677 = vmatprep.mubr.f32.mxu0 0.0
    %678 = vmatmul.mubr.f32.gmra.mrb[0].mxu0 0.0
    %v679 = vpop.f32.mrb[0].mxu0
    %v680 = vadd.f32 0.0, %v679
    %v681 = vpop.f32.mrb[0].mxu0
    %v682 = vadd.f32 0.0, %v681
    %683 = vdwg.mxu0
    %684 = vmatprep.subr.mxu0 %v419
    %685 = vmatpush1.msra.mxu0 %v418
    %686 = vmatprep.subr.mxu0 %v423
    %687 = vmatpush1.msra.mxu0 %v422
    %688 = vmatprep.subr.mxu0 %v427
    %689 = vmatpush1.msra.mxu0 %v426
    %690 = vmatprep.subr.mxu0 %v431
    %691 = vmatpush1.msra.mxu0 %v430
    %692 = vmatprep.subr.mxu0 %v435
    %693 = vmatpush1.msra.mxu0 %v434
    %694 = vmatprep.subr.mxu0 %v439
    %695 = vmatpush1.msra.mxu0 %v438
    %696 = vmatprep.subr.mxu0 %v443
    %697 = vmatpush1.msra.mxu0 %v442
    %698 = vmatprep.subr.mxu0 %v447
    %699 = vmatpush1.msra.mxu0 %v446
    %700 = vmatprep.subr.mxu0 %v451
    %701 = vmatpush1.msra.mxu0 %v450
    %702 = vmatprep.subr.mxu0 %v455
    %703 = vmatpush1.msra.mxu0 %v454
    %704 = vmatprep.subr.mxu0 %v459
    %705 = vmatpush1.msra.mxu0 %v458
    %706 = vmatprep.subr.mxu0 %v463
    %707 = vmatpush1.msra.mxu0 %v462
    %708 = vmatprep.subr.mxu0 %v467
    %709 = vmatpush1.msra.mxu0 %v466
    %710 = vmatprep.subr.mxu0 %v471
    %711 = vmatpush1.msra.mxu0 %v470
    %712 = vmatprep.subr.mxu0 %v475
    %713 = vmatpush1.msra.mxu0 %v474
    %714 = vmatprep.subr.mxu0 %v479
    %715 = vmatpush1.msra.mxu0 %v478
    %716 = vmatprep.subr.mxu0 0.0
    %717 = vmatpush1.msra.mxu0 0.0
    %718 = vmatprep.subr.mxu0 0.0
    %719 = vmatpush1.msra.mxu0 0.0
    %720 = vmatprep.subr.mxu0 0.0
    %721 = vmatpush1.msra.mxu0 0.0
    %722 = vmatprep.subr.mxu0 0.0
    %723 = vmatpush1.msra.mxu0 0.0
    %724 = vmatprep.subr.mxu0 0.0
    %725 = vmatpush1.msra.mxu0 0.0
    %726 = vmatprep.subr.mxu0 0.0
    %727 = vmatpush1.msra.mxu0 0.0
    %728 = vmatprep.subr.mxu0 0.0
    %729 = vmatpush1.msra.mxu0 0.0
    %730 = vmatprep.subr.mxu0 0.0
    %731 = vmatpush1.msra.mxu0 0.0
    %732 = vmatprep.subr.mxu0 0.0
    %733 = vmatpush1.msra.mxu0 0.0
    %734 = vmatprep.subr.mxu0 0.0
    %735 = vmatpush1.msra.mxu0 0.0
    %736 = vmatprep.subr.mxu0 0.0
    %737 = vmatpush1.msra.mxu0 0.0
    %738 = vmatprep.subr.mxu0 0.0
    %739 = vmatpush1.msra.mxu0 0.0
    %740 = vmatprep.subr.mxu0 0.0
    %741 = vmatpush1.msra.mxu0 0.0
    %742 = vmatprep.subr.mxu0 0.0
    %743 = vmatpush1.msra.mxu0 0.0
    %744 = vmatprep.subr.mxu0 0.0
    %745 = vmatpush1.msra.mxu0 0.0
    %746 = vmatprep.subr.mxu0 0.0
    %747 = vmatpush1.msra.mxu0 0.0
    %748 = vmatprep.mubr.f32.mxu0 0.0
    %749 = vmatmul.mubr.f32.gmra.mrb[0].mxu0 0.0
    %v750 = vpop.f32.mrb[0].mxu0
    %v751 = vadd.f32 0.0, %v750
    %v752 = vpop.f32.mrb[0].mxu0
    %v753 = vadd.f32 0.0, %v752
    %754 = vdwg.mxu0
    %v755 = vadd.f32 %v609, %v680
    %v756 = vadd.f32 %v610, %v682
    %v757 = vadd.f32 %v611, %v751
    %v758 = vadd.f32 %v612, %v753
    %v759 = vmul.f32 %v755, 0.5
    %v760 = vmul.f32 %v756, 0.5
    %v761 = vmul.f32 %v757, 0.5
    %v762 = vtanh.pop %v759
    %v763 = vtanh.pop %v760
    %v764 = vtanh.pop %v761
    %v765 = vmul.f32 %v762, 0.5
    %v766 = vmul.f32 %v763, 0.5
    %v767 = vmul.f32 %v764, 0.5
    %v768 = vadd.f32 %v765, 0.5
    %v769 = vadd.f32 %v766, 0.5
    %v770 = vadd.f32 %v767, 0.5
    %v771 = vtanh.pop %v758
    %v772 = vmul.f32 %v769, 0.0
    %v773 = vmul.f32 %v768, %v771
    %v774 = vadd.f32 %v772, %v773
    %v775 = vtanh.pop %v774
    %v776 = vmul.f32 %v770, %v775
    %777 = vmatprep.subr.mxu0 %v545
    %778 = vmatpush1.msra.mxu0 %v544
    %779 = vmatprep.subr.mxu0 %v549
    %780 = vmatpush1.msra.mxu0 %v548
    %781 = vmatprep.subr.mxu0 %v553
    %782 = vmatpush1.msra.mxu0 %v552
    %783 = vmatprep.subr.mxu0 %v557
    %784 = vmatpush1.msra.mxu0 %v556
    %785 = vmatprep.subr.mxu0 %v561
    %786 = vmatpush1.msra.mxu0 %v560
    %787 = vmatprep.subr.mxu0 %v565
    %788 = vmatpush1.msra.mxu0 %v564
    %789 = vmatprep.subr.mxu0 %v569
    %790 = vmatpush1.msra.mxu0 %v568
    %791 = vmatprep.subr.mxu0 %v573
    %792 = vmatpush1.msra.mxu0 %v572
    %793 = vmatprep.subr.mxu0 %v577
    %794 = vmatpush1.msra.mxu0 %v576
    %795 = vmatprep.subr.mxu0 %v581
    %796 = vmatpush1.msra.mxu0 %v580
    %797 = vmatprep.subr.mxu0 %v585
    %798 = vmatpush1.msra.mxu0 %v584
    %799 = vmatprep.subr.mxu0 %v589
    %800 = vmatpush1.msra.mxu0 %v588
    %801 = vmatprep.subr.mxu0 %v593
    %802 = vmatpush1.msra.mxu0 %v592
    %803 = vmatprep.subr.mxu0 %v597
    %804 = vmatpush1.msra.mxu0 %v596
    %805 = vmatprep.subr.mxu0 %v601
    %806 = vmatpush1.msra.mxu0 %v600
    %807 = vmatprep.subr.mxu0 %v605
    %808 = vmatpush1.msra.mxu0 %v604
    %809 = vmatprep.subr.mxu0 0.0
    %810 = vmatpush1.msra.mxu0 0.0
    %811 = vmatprep.subr.mxu0 0.0
    %812 = vmatpush1.msra.mxu0 0.0
    %813 = vmatprep.subr.mxu0 0.0
    %814 = vmatpush1.msra.mxu0 0.0
    %815 = vmatprep.subr.mxu0 0.0
    %816 = vmatpush1.msra.mxu0 0.0
    %817 = vmatprep.subr.mxu0 0.0
    %818 = vmatpush1.msra.mxu0 0.0
    %819 = vmatprep.subr.mxu0 0.0
    %820 = vmatpush1.msra.mxu0 0.0
    %821 = vmatprep.subr.mxu0 0.0
    %822 = vmatpush1.msra.mxu0 0.0
    %823 = vmatprep.subr.mxu0 0.0
    %824 = vmatpush1.msra.mxu0 0.0
    %825 = vmatprep.subr.mxu0 0.0
    %826 = vmatpush1.msra.mxu0 0.0
    %827 = vmatprep.subr.mxu0 0.0
    %828 = vmatpush1.msra.mxu0 0.0
    %829 = vmatprep.subr.mxu0 0.0
    %830 = vmatpush1.msra.mxu0 0.0
    %831 = vmatprep.subr.mxu0 0.0
    %832 = vmatpush1.msra.mxu0 0.0
    %833 = vmatprep.subr.mxu0 0.0
    %834 = vmatpush1.msra.mxu0 0.0
    %835 = vmatprep.subr.mxu0 0.0
    %836 = vmatpush1.msra.mxu0 0.0
    %837 = vmatprep.subr.mxu0 0.0
    %838 = vmatpush1.msra.mxu0 0.0
    %839 = vmatprep.subr.mxu0 0.0
    %840 = vmatpush1.msra.mxu0 0.0
    %841 = vmatprep.mubr.f32.mxu0 0.0
    %842 = vmatmul.mubr.f32.gmra.mrb[0].mxu0 0.0
    %v843 = vpop.f32.mrb[0].mxu0
    %v844 = vadd.f32 0.0, %v843
    %v845 = vpop.f32.mrb[0].mxu0
    %v846 = vadd.f32 0.0, %v845
    %847 = vdwg.mxu0
    %848 = vmatprep.subr.mxu0 %v547
    %849 = vmatpush1.msra.mxu0 %v546
    %850 = vmatprep.subr.mxu0 %v551
    %851 = vmatpush1.msra.mxu0 %v550
    %852 = vmatprep.subr.mxu0 %v555
    %853 = vmatpush1.msra.mxu0 %v554
    %854 = vmatprep.subr.mxu0 %v559
    %855 = vmatpush1.msra.mxu0 %v558
    %856 = vmatprep.subr.mxu0 %v563
    %857 = vmatpush1.msra.mxu0 %v562
    %858 = vmatprep.subr.mxu0 %v567
    %859 = vmatpush1.msra.mxu0 %v566
    %860 = vmatprep.subr.mxu0 %v571
    %861 = vmatpush1.msra.mxu0 %v570
    %862 = vmatprep.subr.mxu0 %v575
    %863 = vmatpush1.msra.mxu0 %v574
    %864 = vmatprep.subr.mxu0 %v579
    %865 = vmatpush1.msra.mxu0 %v578
    %866 = vmatprep.subr.mxu0 %v583
    %867 = vmatpush1.msra.mxu0 %v582
    %868 = vmatprep.subr.mxu0 %v587
    %869 = vmatpush1.msra.mxu0 %v586
    %870 = vmatprep.subr.mxu0 %v591
    %871 = vmatpush1.msra.mxu0 %v590
    %872 = vmatprep.subr.mxu0 %v595
    %873 = vmatpush1.msra.mxu0 %v594
    %874 = vmatprep.subr.mxu0 %v599
    %875 = vmatpush1.msra.mxu0 %v598
    %876 = vmatprep.subr.mxu0 %v603
    %877 = vmatpush1.msra.mxu0 %v602
    %878 = vmatprep.subr.mxu0 %v607
    %879 = vmatpush1.msra.mxu0 %v606
    %880 = vmatprep.subr.mxu0 0.0
    %881 = vmatpush1.msra.mxu0 0.0
    %882 = vmatprep.subr.mxu0 0.0
    %883 = vmatpush1.msra.mxu0 0.0
    %884 = vmatprep.subr.mxu0 0.0
    %885 = vmatpush1.msra.mxu0 0.0
    %886 = vmatprep.subr.mxu0 0.0
    %887 = vmatpush1.msra.mxu0 0.0
    %888 = vmatprep.subr.mxu0 0.0
    %889 = vmatpush1.msra.mxu0 0.0
    %890 = vmatprep.subr.mxu0 0.0
    %891 = vmatpush1.msra.mxu0 0.0
    %892 = vmatprep.subr.mxu0 0.0
    %893 = vmatpush1.msra.mxu0 0.0
    %894 = vmatprep.subr.mxu0 0.0
    %895 = vmatpush1.msra.mxu0 0.0
    %896 = vmatprep.subr.mxu0 0.0
    %897 = vmatpush1.msra.mxu0 0.0
    %898 = vmatprep.subr.mxu0 0.0
    %899 = vmatpush1.msra.mxu0 0.0
    %900 = vmatprep.subr.mxu0 0.0
    %901 = vmatpush1.msra.mxu0 0.0
    %902 = vmatprep.subr.mxu0 0.0
    %903 = vmatpush1.msra.mxu0 0.0
    %904 = vmatprep.subr.mxu0 0.0
    %905 = vmatpush1.msra.mxu0 0.0
    %906 = vmatprep.subr.mxu0 0.0
    %907 = vmatpush1.msra.mxu0 0.0
    %908 = vmatprep.subr.mxu0 0.0
    %909 = vmatpush1.msra.mxu0 0.0
    %910 = vmatprep.subr.mxu0 0.0
    %911 = vmatpush1.msra.mxu0 0.0
    %912 = vmatprep.mubr.f32.mxu0 0.0
    %913 = vmatmul.mubr.f32.gmra.mrb[0].mxu0 0.0
    %v914 = vpop.f32.mrb[0].mxu0
    %v915 = vadd.f32 0.0, %v914
    %v916 = vpop.f32.mrb[0].mxu0
    %v917 = vadd.f32 0.0, %v916
    %918 = vdwg.mxu0
    %919 = vmatprep.subr.mxu0 %v481
    %920 = vmatpush1.msra.mxu0 %v480
    %921 = vmatprep.subr.mxu0 %v485
    %922 = vmatpush1.msra.mxu0 %v484
    %923 = vmatprep.subr.mxu0 %v489
    %924 = vmatpush1.msra.mxu0 %v488
    %925 = vmatprep.subr.mxu0 %v493
    %926 = vmatpush1.msra.mxu0 %v492
    %927 = vmatprep.subr.mxu0 %v497
    %928 = vmatpush1.msra.mxu0 %v496
    %929 = vmatprep.subr.mxu0 %v501
    %930 = vmatpush1.msra.mxu0 %v500
    %931 = vmatprep.subr.mxu0 %v505
    %932 = vmatpush1.msra.mxu0 %v504
    %933 = vmatprep.subr.mxu0 %v509
    %934 = vmatpush1.msra.mxu0 %v508
    %935 = vmatprep.subr.mxu0 %v513
    %936 = vmatpush1.msra.mxu0 %v512
    %937 = vmatprep.subr.mxu0 %v517
    %938 = vmatpush1.msra.mxu0 %v516
    %939 = vmatprep.subr.mxu0 %v521
    %940 = vmatpush1.msra.mxu0 %v520
    %941 = vmatprep.subr.mxu0 %v525
    %942 = vmatpush1.msra.mxu0 %v524
    %943 = vmatprep.subr.mxu0 %v529
    %944 = vmatpush1.msra.mxu0 %v528
    %945 = vmatprep.subr.mxu0 %v533
    %946 = vmatpush1.msra.mxu0 %v532
    %947 = vmatprep.subr.mxu0 %v537
    %948 = vmatpush1.msra.mxu0 %v536
    %949 = vmatprep.subr.mxu0 %v541
    %950 = vmatpush1.msra.mxu0 %v540
    %951 = vmatprep.subr.mxu0 0.0
    %952 = vmatpush1.msra.mxu0 0.0
    %953 = vmatprep.subr.mxu0 0.0
    %954 = vmatpush1.msra.mxu0 0.0
    %955 = vmatprep.subr.mxu0 0.0
    %956 = vmatpush1.msra.mxu0 0.0
    %957 = vmatprep.subr.mxu0 0.0
    %958 = vmatpush1.msra.mxu0 0.0
    %959 = vmatprep.subr.mxu0 0.0
    %960 = vmatpush1.msra.mxu0 0.0
    %961 = vmatprep.subr.mxu0 0.0
    %962 = vmatpush1.msra.mxu0 0.0
    %963 = vmatprep.subr.mxu0 0.0
    %964 = vmatpush1.msra.mxu0 0.0
    %965 = vmatprep.subr.mxu0 0.0
    %966 = vmatpush1.msra.mxu0 0.0
    %967 = vmatprep.subr.mxu0 0.0
    %968 = vmatpush1.msra.mxu0 0.0
    %969 = vmatprep.subr.mxu0 0.0
    %970 = vmatpush1.msra.mxu0 0.0
    %971 = vmatprep.subr.mxu0 0.0
    %972 = vmatpush1.msra.mxu0 0.0
    %973 = vmatprep.subr.mxu0 0.0
    %974 = vmatpush1.msra.mxu0 0.0
    %975 = vmatprep.subr.mxu0 0.0
    %976 = vmatpush1.msra.mxu0 0.0
    %977 = vmatprep.subr.mxu0 0.0
    %978 = vmatpush1.msra.mxu0 0.0
    %979 = vmatprep.subr.mxu0 0.0
    %980 = vmatpush1.msra.mxu0 0.0
    %981 = vmatprep.subr.mxu0 0.0
    %982 = vmatpush1.msra.mxu0 0.0
    %983 = vmatprep.mubr.f32.mxu0 0.0
    %984 = vmatmul.mubr.f32.gmra.mrb[0].mxu0 %v776
    %v985 = vpop.f32.mrb[0].mxu0
    %v986 = vadd.f32 %v844, %v985
    %v987 = vpop.f32.mrb[0].mxu0
    %v988 = vadd.f32 %v846, %v987
    %989 = vdwg.mxu0
    %990 = vmatprep.subr.mxu0 %v483
    %991 = vmatpush1.msra.mxu0 %v482
    %992 = vmatprep.subr.mxu0 %v487
    %993 = vmatpush1.msra.mxu0 %v486
    %994 = vmatprep.subr.mxu0 %v491
    %995 = vmatpush1.msra.mxu0 %v490
    %996 = vmatprep.subr.mxu0 %v495
    %997 = vmatpush1.msra.mxu0 %v494
    %998 = vmatprep.subr.mxu0 %v499
    %999 = vmatpush1.msra.mxu0 %v498
    %1000 = vmatprep.subr.mxu0 %v503
    %1001 = vmatpush1.msra.mxu0 %v502
    %1002 = vmatprep.subr.mxu0 %v507
    %1003 = vmatpush1.msra.mxu0 %v506
    %1004 = vmatprep.subr.mxu0 %v511
    %1005 = vmatpush1.msra.mxu0 %v510
    %1006 = vmatprep.subr.mxu0 %v515
    %1007 = vmatpush1.msra.mxu0 %v514
    %1008 = vmatprep.subr.mxu0 %v519
    %1009 = vmatpush1.msra.mxu0 %v518
    %1010 = vmatprep.subr.mxu0 %v523
    %1011 = vmatpush1.msra.mxu0 %v522
    %1012 = vmatprep.subr.mxu0 %v527
    %1013 = vmatpush1.msra.mxu0 %v526
    %1014 = vmatprep.subr.mxu0 %v531
    %1015 = vmatpush1.msra.mxu0 %v530
    %1016 = vmatprep.subr.mxu0 %v535
    %1017 = vmatpush1.msra.mxu0 %v534
    %1018 = vmatprep.subr.mxu0 %v539
    %1019 = vmatpush1.msra.mxu0 %v538
    %1020 = vmatprep.subr.mxu0 %v543
    %1021 = vmatpush1.msra.mxu0 %v542
    %1022 = vmatprep.subr.mxu0 0.0
    %1023 = vmatpush1.msra.mxu0 0.0
    %1024 = vmatprep.subr.mxu0 0.0
    %1025 = vmatpush1.msra.mxu0 0.0
    %1026 = vmatprep.subr.mxu0 0.0
    %1027 = vmatpush1.msra.mxu0 0.0
    %1028 = vmatprep.subr.mxu0 0.0
    %1029 = vmatpush1.msra.mxu0 0.0
    %1030 = vmatprep.subr.mxu0 0.0
    %1031 = vmatpush1.msra.mxu0 0.0
    %1032 = vmatprep.subr.mxu0 0.0
    %1033 = vmatpush1.msra.mxu0 0.0
    %1034 = vmatprep.subr.mxu0 0.0
    %1035 = vmatpush1.msra.mxu0 0.0
    %1036 = vmatprep.subr.mxu0 0.0
    %1037 = vmatpush1.msra.mxu0 0.0
    %1038 = vmatprep.subr.mxu0 0.0
    %1039 = vmatpush1.msra.mxu0 0.0
    %1040 = vmatprep.subr.mxu0 0.0
    %1041 = vmatpush1.msra.mxu0 0.0
    %1042 = vmatprep.subr.mxu0 0.0
    %1043 = vmatpush1.msra.mxu0 0.0
    %1044 = vmatprep.subr.mxu0 0.0
    %1045 = vmatpush1.msra.mxu0 0.0
    %1046 = vmatprep.subr.mxu0 0.0
    %1047 = vmatpush1.msra.mxu0 0.0
    %1048 = vmatprep.subr.mxu0 0.0
    %1049 = vmatpush1.msra.mxu0 0.0
    %1050 = vmatprep.subr.mxu0 0.0
    %1051 = vmatpush1.msra.mxu0 0.0
    %1052 = vmatprep.subr.mxu0 0.0
    %1053 = vmatpush1.msra.mxu0 0.0
    %1054 = vmatprep.mubr.f32.mxu0 0.0
    %1055 = vmatmul.mubr.f32.gmra.mrb[0].mxu0 %v776
    %v1056 = vpop.f32.mrb[0].mxu0
    %v1057 = vadd.f32 %v915, %v1056
    %v1058 = vpop.f32.mrb[0].mxu0
    %v1059 = vadd.f32 %v917, %v1058
    %1060 = vdwg.mxu0
    %v1062 = vlaneseq
    %v1063 = vshrl.u32 %v1062, 7
    %v1064 = vsub.s32 0, %v1063
    %v1065 = vrot.slane %v608, %v1064
    %v1066 = vlaneseq
    %v1067 = vshrl.u32 %v1066, 7
    %v1068 = vsub.s32 1, %v1067
    %v1069 = vrot.slane %v608, %v1068
    %v1070 = vlaneseq
    %v1071 = vshrl.u32 %v1070, 7
    %v1072 = vsub.s32 2, %v1071
    %v1073 = vrot.slane %v608, %v1072
    %v1074 = vlaneseq
    %v1075 = vshrl.u32 %v1074, 7
    %v1076 = vsub.s32 3, %v1075
    %v1077 = vrot.slane %v608, %v1076
    %v1082 = vadd.f32 %v986, %v1065
    %v1083 = vadd.f32 %v988, %v1069
    %v1084 = vadd.f32 %v1057, %v1073
    %v1085 = vadd.f32 %v1059, %v1077
    %v1086 = vmul.f32 %v1082, 0.5
    %v1087 = vmul.f32 %v1083, 0.5
    %v1088 = vmul.f32 %v1084, 0.5
    %v1089 = vtanh.pop %v1086
    %v1090 = vtanh.pop %v1087
    %v1091 = vtanh.pop %v1088
    %v1092 = vmul.f32 %v1089, 0.5
    %v1093 = vmul.f32 %v1090, 0.5
    %v1094 = vmul.f32 %v1091, 0.5
    %v1095 = vadd.f32 %v1092, 0.5
    %v1096 = vadd.f32 %v1093, 0.5
    %v1097 = vadd.f32 %v1094, 0.5
    %v1098 = vtanh.pop %v1085
    %v1099 = vmul.f32 %v1096, 0.0
    %v1100 = vmul.f32 %v1095, %v1098
    %v1101 = vadd.f32 %v1099, %v1100
    %v1102 = vtanh.pop %v1101
    %v1103 = vmul.f32 %v1097, %v1102
    %v1104 = vld [vmem:[#allocation2 + $0x20] sm:$0xff]
    %v1105 = vld [vmem:[#allocation2 + $0x28] sm:$0xff]
    %v1106 = vld [vmem:[#allocation2 + $0x30] sm:$0xff]
    %v1107 = vld [vmem:[#allocation2 + $0x38] sm:$0xff]
    %1108 = vmatprep.subr.mxu0 %v417
    %1109 = vmatpush1.msra.mxu0 %v416
    %1110 = vmatprep.subr.mxu0 %v421
    %1111 = vmatpush1.msra.mxu0 %v420
    %1112 = vmatprep.subr.mxu0 %v425
    %1113 = vmatpush1.msra.mxu0 %v424
    %1114 = vmatprep.subr.mxu0 %v429
    %1115 = vmatpush1.msra.mxu0 %v428
    %1116 = vmatprep.subr.mxu0 %v433
    %1117 = vmatpush1.msra.mxu0 %v432
    %1118 = vmatprep.subr.mxu0 %v437
    %1119 = vmatpush1.msra.mxu0 %v436
    %1120 = vmatprep.subr.mxu0 %v441
    %1121 = vmatpush1.msra.mxu0 %v440
    %1122 = vmatprep.subr.mxu0 %v445
    %1123 = vmatpush1.msra.mxu0 %v444
    %1124 = vmatprep.subr.mxu0 %v449
    %1125 = vmatpush1.msra.mxu0 %v448
    %1126 = vmatprep.subr.mxu0 %v453
    %1127 = vmatpush1.msra.mxu0 %v452
    %1128 = vmatprep.subr.mxu0 %v457
    %1129 = vmatpush1.msra.mxu0 %v456
    %1130 = vmatprep.subr.mxu0 %v461
    %1131 = vmatpush1.msra.mxu0 %v460
    %1132 = vmatprep.subr.mxu0 %v465
    %1133 = vmatpush1.msra.mxu0 %v464
    %1134 = vmatprep.subr.mxu0 %v469
    %1135 = vmatpush1.msra.mxu0 %v468
    %1136 = vmatprep.subr.mxu0 %v473
    %1137 = vmatpush1.msra.mxu0 %v472
    %1138 = vmatprep.subr.mxu0 %v477
    %1139 = vmatpush1.msra.mxu0 %v476
    %1140 = vmatprep.subr.mxu0 0.0
    %1141 = vmatpush1.msra.mxu0 0.0
    %1142 = vmatprep.subr.mxu0 0.0
    %1143 = vmatpush1.msra.mxu0 0.0
    %1144 = vmatprep.subr.mxu0 0.0
    %1145 = vmatpush1.msra.mxu0 0.0
    %1146 = vmatprep.subr.mxu0 0.0
    %1147 = vmatpush1.msra.mxu0 0.0
    %1148 = vmatprep.subr.mxu0 0.0
    %1149 = vmatpush1.msra.mxu0 0.0
    %1150 = vmatprep.subr.mxu0 0.0
    %1151 = vmatpush1.msra.mxu0 0.0
    %1152 = vmatprep.subr.mxu0 0.0
    %1153 = vmatpush1.msra.mxu0 0.0
    %1154 = vmatprep.subr.mxu0 0.0
    %1155 = vmatpush1.msra.mxu0 0.0
    %1156 = vmatprep.subr.mxu0 0.0
    %1157 = vmatpush1.msra.mxu0 0.0
    %1158 = vmatprep.subr.mxu0 0.0
    %1159 = vmatpush1.msra.mxu0 0.0
    %1160 = vmatprep.subr.mxu0 0.0
    %1161 = vmatpush1.msra.mxu0 0.0
    %1162 = vmatprep.subr.mxu0 0.0
    %1163 = vmatpush1.msra.mxu0 0.0
    %1164 = vmatprep.subr.mxu0 0.0
    %1165 = vmatpush1.msra.mxu0 0.0
    %1166 = vmatprep.subr.mxu0 0.0
    %1167 = vmatpush1.msra.mxu0 0.0
    %1168 = vmatprep.subr.mxu0 0.0
    %1169 = vmatpush1.msra.mxu0 0.0
    %1170 = vmatprep.subr.mxu0 0.0
    %1171 = vmatpush1.msra.mxu0 0.0
    %1172 = vmatprep.mubr.f32.mxu0 0.0
    %1173 = vmatmul.mubr.f32.gmra.mrb[0].mxu0 %v776
    %v1174 = vpop.f32.mrb[0].mxu0
    %v1175 = vadd.f32 0.0, %v1174
    %v1176 = vpop.f32.mrb[0].mxu0
    %v1177 = vadd.f32 0.0, %v1176
    %1178 = vdwg.mxu0
    %1179 = vmatprep.subr.mxu0 %v419
    %1180 = vmatpush1.msra.mxu0 %v418
    %1181 = vmatprep.subr.mxu0 %v423
    %1182 = vmatpush1.msra.mxu0 %v422
    %1183 = vmatprep.subr.mxu0 %v427
    %1184 = vmatpush1.msra.mxu0 %v426
    %1185 = vmatprep.subr.mxu0 %v431
    %1186 = vmatpush1.msra.mxu0 %v430
    %1187 = vmatprep.subr.mxu0 %v435
    %1188 = vmatpush1.msra.mxu0 %v434
    %1189 = vmatprep.subr.mxu0 %v439
    %1190 = vmatpush1.msra.mxu0 %v438
    %1191 = vmatprep.subr.mxu0 %v443
    %1192 = vmatpush1.msra.mxu0 %v442
    %1193 = vmatprep.subr.mxu0 %v447
    %1194 = vmatpush1.msra.mxu0 %v446
    %1195 = vmatprep.subr.mxu0 %v451
    %1196 = vmatpush1.msra.mxu0 %v450
    %1197 = vmatprep.subr.mxu0 %v455
    %1198 = vmatpush1.msra.mxu0 %v454
    %1199 = vmatprep.subr.mxu0 %v459
    %1200 = vmatpush1.msra.mxu0 %v458
    %1201 = vmatprep.subr.mxu0 %v463
    %1202 = vmatpush1.msra.mxu0 %v462
    %1203 = vmatprep.subr.mxu0 %v467
    %1204 = vmatpush1.msra.mxu0 %v466
    %1205 = vmatprep.subr.mxu0 %v471
    %1206 = vmatpush1.msra.mxu0 %v470
    %1207 = vmatprep.subr.mxu0 %v475
    %1208 = vmatpush1.msra.mxu0 %v474
    %1209 = vmatprep.subr.mxu0 %v479
    %1210 = vmatpush1.msra.mxu0 %v478
    %1211 = vmatprep.subr.mxu0 0.0
    %1212 = vmatpush1.msra.mxu0 0.0
    %1213 = vmatprep.subr.mxu0 0.0
    %1214 = vmatpush1.msra.mxu0 0.0
    %1215 = vmatprep.subr.mxu0 0.0
    %1216 = vmatpush1.msra.mxu0 0.0
    %1217 = vmatprep.subr.mxu0 0.0
    %1218 = vmatpush1.msra.mxu0 0.0
    %1219 = vmatprep.subr.mxu0 0.0
    %1220 = vmatpush1.msra.mxu0 0.0
    %1221 = vmatprep.subr.mxu0 0.0
    %1222 = vmatpush1.msra.mxu0 0.0
    %1223 = vmatprep.subr.mxu0 0.0
    %1224 = vmatpush1.msra.mxu0 0.0
    %1225 = vmatprep.subr.mxu0 0.0
    %1226 = vmatpush1.msra.mxu0 0.0
    %1227 = vmatprep.subr.mxu0 0.0
    %1228 = vmatpush1.msra.mxu0 0.0
    %1229 = vmatprep.subr.mxu0 0.0
    %1230 = vmatpush1.msra.mxu0 0.0
    %1231 = vmatprep.subr.mxu0 0.0
    %1232 = vmatpush1.msra.mxu0 0.0
    %1233 = vmatprep.subr.mxu0 0.0
    %1234 = vmatpush1.msra.mxu0 0.0
    %1235 = vmatprep.subr.mxu0 0.0
    %1236 = vmatpush1.msra.mxu0 0.0
    %1237 = vmatprep.subr.mxu0 0.0
    %1238 = vmatpush1.msra.mxu0 0.0
    %1239 = vmatprep.subr.mxu0 0.0
    %1240 = vmatpush1.msra.mxu0 0.0
    %1241 = vmatprep.subr.mxu0 0.0
    %1242 = vmatpush1.msra.mxu0 0.0
    %1243 = vmatprep.mubr.f32.mxu0 0.0
    %1244 = vmatmul.mubr.f32.gmra.mrb[0].mxu0 %v776
    %v1245 = vpop.f32.mrb[0].mxu0
    %v1246 = vadd.f32 0.0, %v1245
    %v1247 = vpop.f32.mrb[0].mxu0
    %v1248 = vadd.f32 0.0, %v1247
    %1249 = vdwg.mxu0
    %v1250 = vadd.f32 %v1104, %v1175
    %v1251 = vadd.f32 %v1105, %v1177
    %v1252 = vadd.f32 %v1106, %v1246
    %v1253 = vadd.f32 %v1107, %v1248
    %v1254 = vmul.f32 %v1250, 0.5
    %v1255 = vmul.f32 %v1251, 0.5
    %v1256 = vmul.f32 %v1252, 0.5
    %v1257 = vtanh.pop %v1254
    %v1258 = vtanh.pop %v1255
    %v1259 = vtanh.pop %v1256
    %v1260 = vmul.f32 %v1257, 0.5
    %v1261 = vmul.f32 %v1258, 0.5
    %v1262 = vmul.f32 %v1259, 0.5
    %v1263 = vadd.f32 %v1260, 0.5
    %v1264 = vadd.f32 %v1261, 0.5
    %v1265 = vadd.f32 %v1262, 0.5
    %v1266 = vtanh.pop %v1253
    %v1267 = vmul.f32 %v1264, %v774
    %v1268 = vmul.f32 %v1263, %v1266
    %v1269 = vadd.f32 %v1267, %v1268
    %v1270 = vtanh.pop %v1269
    %v1271 = vmul.f32 %v1265, %v1270
    %1272 = vmatprep.subr.mxu0 %v545
    %1273 = vmatpush1.msra.mxu0 %v544
    %1274 = vmatprep.subr.mxu0 %v549
    %1275 = vmatpush1.msra.mxu0 %v548
    %1276 = vmatprep.subr.mxu0 %v553
    %1277 = vmatpush1.msra.mxu0 %v552
    %1278 = vmatprep.subr.mxu0 %v557
    %1279 = vmatpush1.msra.mxu0 %v556
    %1280 = vmatprep.subr.mxu0 %v561
    %1281 = vmatpush1.msra.mxu0 %v560
    %1282 = vmatprep.subr.mxu0 %v565
    %1283 = vmatpush1.msra.mxu0 %v564
    %1284 = vmatprep.subr.mxu0 %v569
    %1285 = vmatpush1.msra.mxu0 %v568
    %1286 = vmatprep.subr.mxu0 %v573
    %1287 = vmatpush1.msra.mxu0 %v572
    %1288 = vmatprep.subr.mxu0 %v577
    %1289 = vmatpush1.msra.mxu0 %v576
    %1290 = vmatprep.subr.mxu0 %v581
    %1291 = vmatpush1.msra.mxu0 %v580
    %1292 = vmatprep.subr.mxu0 %v585
    %1293 = vmatpush1.msra.mxu0 %v584
    %1294 = vmatprep.subr.mxu0 %v589
    %1295 = vmatpush1.msra.mxu0 %v588
    %1296 = vmatprep.subr.mxu0 %v593
    %1297 = vmatpush1.msra.mxu0 %v592
    %1298 = vmatprep.subr.mxu0 %v597
    %1299 = vmatpush1.msra.mxu0 %v596
    %1300 = vmatprep.subr.mxu0 %v601
    %1301 = vmatpush1.msra.mxu0 %v600
    %1302 = vmatprep.subr.mxu0 %v605
    %1303 = vmatpush1.msra.mxu0 %v604
    %1304 = vmatprep.subr.mxu0 0.0
    %1305 = vmatpush1.msra.mxu0 0.0
    %1306 = vmatprep.subr.mxu0 0.0
    %1307 = vmatpush1.msra.mxu0 0.0
    %1308 = vmatprep.subr.mxu0 0.0
    %1309 = vmatpush1.msra.mxu0 0.0
    %1310 = vmatprep.subr.mxu0 0.0
    %1311 = vmatpush1.msra.mxu0 0.0
    %1312 = vmatprep.subr.mxu0 0.0
    %1313 = vmatpush1.msra.mxu0 0.0
    %1314 = vmatprep.subr.mxu0 0.0
    %1315 = vmatpush1.msra.mxu0 0.0
    %1316 = vmatprep.subr.mxu0 0.0
    %1317 = vmatpush1.msra.mxu0 0.0
    %1318 = vmatprep.subr.mxu0 0.0
    %1319 = vmatpush1.msra.mxu0 0.0
    %1320 = vmatprep.subr.mxu0 0.0
    %1321 = vmatpush1.msra.mxu0 0.0
    %1322 = vmatprep.subr.mxu0 0.0
    %1323 = vmatpush1.msra.mxu0 0.0
    %1324 = vmatprep.subr.mxu0 0.0
    %1325 = vmatpush1.msra.mxu0 0.0
    %1326 = vmatprep.subr.mxu0 0.0
    %1327 = vmatpush1.msra.mxu0 0.0
    %1328 = vmatprep.subr.mxu0 0.0
    %1329 = vmatpush1.msra.mxu0 0.0
    %1330 = vmatprep.subr.mxu0 0.0
    %1331 = vmatpush1.msra.mxu0 0.0
    %1332 = vmatprep.subr.mxu0 0.0
    %1333 = vmatpush1.msra.mxu0 0.0
    %1334 = vmatprep.subr.mxu0 0.0
    %1335 = vmatpush1.msra.mxu0 0.0
    %1336 = vmatprep.mubr.f32.mxu0 0.0
    %1337 = vmatmul.mubr.f32.gmra.mrb[0].mxu0 %v1103
    %v1338 = vpop.f32.mrb[0].mxu0
    %v1339 = vadd.f32 0.0, %v1338
    %v1340 = vpop.f32.mrb[0].mxu0
    %v1341 = vadd.f32 0.0, %v1340
    %1342 = vdwg.mxu0
    %1343 = vmatprep.subr.mxu0 %v547
    %1344 = vmatpush1.msra.mxu0 %v546
    %1345 = vmatprep.subr.mxu0 %v551
    %1346 = vmatpush1.msra.mxu0 %v550
    %1347 = vmatprep.subr.mxu0 %v555
    %1348 = vmatpush1.msra.mxu0 %v554
    %1349 = vmatprep.subr.mxu0 %v559
    %1350 = vmatpush1.msra.mxu0 %v558
    %1351 = vmatprep.subr.mxu0 %v563
    %1352 = vmatpush1.msra.mxu0 %v562
    %1353 = vmatprep.subr.mxu0 %v567
    %1354 = vmatpush1.msra.mxu0 %v566
    %1355 = vmatprep.subr.mxu0 %v571
    %1356 = vmatpush1.msra.mxu0 %v570
    %1357 = vmatprep.subr.mxu0 %v575
    %1358 = vmatpush1.msra.mxu0 %v574
    %1359 = vmatprep.subr.mxu0 %v579
    %1360 = vmatpush1.msra.mxu0 %v578
    %1361 = vmatprep.subr.mxu0 %v583
    %1362 = vmatpush1.msra.mxu0 %v582
    %1363 = vmatprep.subr.mxu0 %v587
    %1364 = vmatpush1.msra.mxu0 %v586
    %1365 = vmatprep.subr.mxu0 %v591
    %1366 = vmatpush1.msra.mxu0 %v590
    %1367 = vmatprep.subr.mxu0 %v595
    %1368 = vmatpush1.msra.mxu0 %v594
    %1369 = vmatprep.subr.mxu0 %v599
    %1370 = vmatpush1.msra.mxu0 %v598
    %1371 = vmatprep.subr.mxu0 %v603
    %1372 = vmatpush1.msra.mxu0 %v602
    %1373 = vmatprep.subr.mxu0 %v607
    %1374 = vmatpush1.msra.mxu0 %v606
    %1375 = vmatprep.subr.mxu0 0.0
    %1376 = vmatpush1.msra.mxu0 0.0
    %1377 = vmatprep.subr.mxu0 0.0
    %1378 = vmatpush1.msra.mxu0 0.0
    %1379 = vmatprep.subr.mxu0 0.0
    %1380 = vmatpush1.msra.mxu0 0.0
    %1381 = vmatprep.subr.mxu0 0.0
    %1382 = vmatpush1.msra.mxu0 0.0
    %1383 = vmatprep.subr.mxu0 0.0
    %1384 = vmatpush1.msra.mxu0 0.0
    %1385 = vmatprep.subr.mxu0 0.0
    %1386 = vmatpush1.msra.mxu0 0.0
    %1387 = vmatprep.subr.mxu0 0.0
    %1388 = vmatpush1.msra.mxu0 0.0
    %1389 = vmatprep.subr.mxu0 0.0
    %1390 = vmatpush1.msra.mxu0 0.0
    %1391 = vmatprep.subr.mxu0 0.0
    %1392 = vmatpush1.msra.mxu0 0.0
    %1393 = vmatprep.subr.mxu0 0.0
    %1394 = vmatpush1.msra.mxu0 0.0
    %1395 = vmatprep.subr.mxu0 0.0
    %1396 = vmatpush1.msra.mxu0 0.0
    %1397 = vmatprep.subr.mxu0 0.0
    %1398 = vmatpush1.msra.mxu0 0.0
    %1399 = vmatprep.subr.mxu0 0.0
    %1400 = vmatpush1.msra.mxu0 0.0
    %1401 = vmatprep.subr.mxu0 0.0
    %1402 = vmatpush1.msra.mxu0 0.0
    %1403 = vmatprep.subr.mxu0 0.0
    %1404 = vmatpush1.msra.mxu0 0.0
    %1405 = vmatprep.subr.mxu0 0.0
    %1406 = vmatpush1.msra.mxu0 0.0
    %1407 = vmatprep.mubr.f32.mxu0 0.0
    %1408 = vmatmul.mubr.f32.gmra.mrb[0].mxu0 %v1103
    %v1409 = vpop.f32.mrb[0].mxu0
    %v1410 = vadd.f32 0.0, %v1409
    %v1411 = vpop.f32.mrb[0].mxu0
    %v1412 = vadd.f32 0.0, %v1411
    %1413 = vdwg.mxu0
    %1414 = vmatprep.subr.mxu0 %v481
    %1415 = vmatpush1.msra.mxu0 %v480
    %1416 = vmatprep.subr.mxu0 %v485
    %1417 = vmatpush1.msra.mxu0 %v484
    %1418 = vmatprep.subr.mxu0 %v489
    %1419 = vmatpush1.msra.mxu0 %v488
    %1420 = vmatprep.subr.mxu0 %v493
    %1421 = vmatpush1.msra.mxu0 %v492
    %1422 = vmatprep.subr.mxu0 %v497
    %1423 = vmatpush1.msra.mxu0 %v496
    %1424 = vmatprep.subr.mxu0 %v501
    %1425 = vmatpush1.msra.mxu0 %v500
    %1426 = vmatprep.subr.mxu0 %v505
    %1427 = vmatpush1.msra.mxu0 %v504
    %1428 = vmatprep.subr.mxu0 %v509
    %1429 = vmatpush1.msra.mxu0 %v508
    %1430 = vmatprep.subr.mxu0 %v513
    %1431 = vmatpush1.msra.mxu0 %v512
    %1432 = vmatprep.subr.mxu0 %v517
    %1433 = vmatpush1.msra.mxu0 %v516
    %1434 = vmatprep.subr.mxu0 %v521
    %1435 = vmatpush1.msra.mxu0 %v520
    %1436 = vmatprep.subr.mxu0 %v525
    %1437 = vmatpush1.msra.mxu0 %v524
    %1438 = vmatprep.subr.mxu0 %v529
    %1439 = vmatpush1.msra.mxu0 %v528
    %1440 = vmatprep.subr.mxu0 %v533
    %1441 = vmatpush1.msra.mxu0 %v532
    %1442 = vmatprep.subr.mxu0 %v537
    %1443 = vmatpush1.msra.mxu0 %v536
    %1444 = vmatprep.subr.mxu0 %v541
    %1445 = vmatpush1.msra.mxu0 %v540
    %1446 = vmatprep.subr.mxu0 0.0
    %1447 = vmatpush1.msra.mxu0 0.0
    %1448 = vmatprep.subr.mxu0 0.0
    %1449 = vmatpush1.msra.mxu0 0.0
    %1450 = vmatprep.subr.mxu0 0.0
    %1451 = vmatpush1.msra.mxu0 0.0
    %1452 = vmatprep.subr.mxu0 0.0
    %1453 = vmatpush1.msra.mxu0 0.0
    %1454 = vmatprep.subr.mxu0 0.0
    %1455 = vmatpush1.msra.mxu0 0.0
    %1456 = vmatprep.subr.mxu0 0.0
    %1457 = vmatpush1.msra.mxu0 0.0
    %1458 = vmatprep.subr.mxu0 0.0
    %1459 = vmatpush1.msra.mxu0 0.0
    %1460 = vmatprep.subr.mxu0 0.0
    %1461 = vmatpush1.msra.mxu0 0.0
    %1462 = vmatprep.subr.mxu0 0.0
    %1463 = vmatpush1.msra.mxu0 0.0
    %1464 = vmatprep.subr.mxu0 0.0
    %1465 = vmatpush1.msra.mxu0 0.0
    %1466 = vmatprep.subr.mxu0 0.0
    %1467 = vmatpush1.msra.mxu0 0.0
    %1468 = vmatprep.subr.mxu0 0.0
    %1469 = vmatpush1.msra.mxu0 0.0
    %1470 = vmatprep.subr.mxu0 0.0
    %1471 = vmatpush1.msra.mxu0 0.0
    %1472 = vmatprep.subr.mxu0 0.0
    %1473 = vmatpush1.msra.mxu0 0.0
    %1474 = vmatprep.subr.mxu0 0.0
    %1475 = vmatpush1.msra.mxu0 0.0
    %1476 = vmatprep.subr.mxu0 0.0
    %1477 = vmatpush1.msra.mxu0 0.0
    %1478 = vmatprep.mubr.f32.mxu0 0.0
    %1479 = vmatmul.mubr.f32.gmra.mrb[0].mxu0 %v1271
    %v1480 = vpop.f32.mrb[0].mxu0
    %v1481 = vadd.f32 %v1339, %v1480
    %v1482 = vpop.f32.mrb[0].mxu0
    %v1483 = vadd.f32 %v1341, %v1482
    %1484 = vdwg.mxu0
    %1485 = vmatprep.subr.mxu0 %v483
    %1486 = vmatpush1.msra.mxu0 %v482
    %1487 = vmatprep.subr.mxu0 %v487
    %1488 = vmatpush1.msra.mxu0 %v486
    %1489 = vmatprep.subr.mxu0 %v491
    %1490 = vmatpush1.msra.mxu0 %v490
    %1491 = vmatprep.subr.mxu0 %v495
    %1492 = vmatpush1.msra.mxu0 %v494
    %1493 = vmatprep.subr.mxu0 %v499
    %1494 = vmatpush1.msra.mxu0 %v498
    %1495 = vmatprep.subr.mxu0 %v503
    %1496 = vmatpush1.msra.mxu0 %v502
    %1497 = vmatprep.subr.mxu0 %v507
    %1498 = vmatpush1.msra.mxu0 %v506
    %1499 = vmatprep.subr.mxu0 %v511
    %1500 = vmatpush1.msra.mxu0 %v510
    %1501 = vmatprep.subr.mxu0 %v515
    %1502 = vmatpush1.msra.mxu0 %v514
    %1503 = vmatprep.subr.mxu0 %v519
    %1504 = vmatpush1.msra.mxu0 %v518
    %1505 = vmatprep.subr.mxu0 %v523
    %1506 = vmatpush1.msra.mxu0 %v522
    %1507 = vmatprep.subr.mxu0 %v527
    %1508 = vmatpush1.msra.mxu0 %v526
    %1509 = vmatprep.subr.mxu0 %v531
    %1510 = vmatpush1.msra.mxu0 %v530
    %1511 = vmatprep.subr.mxu0 %v535
    %1512 = vmatpush1.msra.mxu0 %v534
    %1513 = vmatprep.subr.mxu0 %v539
    %1514 = vmatpush1.msra.mxu0 %v538
    %1515 = vmatprep.subr.mxu0 %v543
    %1516 = vmatpush1.msra.mxu0 %v542
    %1517 = vmatprep.subr.mxu0 0.0
    %1518 = vmatpush1.msra.mxu0 0.0
    %1519 = vmatprep.subr.mxu0 0.0
    %1520 = vmatpush1.msra.mxu0 0.0
    %1521 = vmatprep.subr.mxu0 0.0
    %1522 = vmatpush1.msra.mxu0 0.0
    %1523 = vmatprep.subr.mxu0 0.0
    %1524 = vmatpush1.msra.mxu0 0.0
    %1525 = vmatprep.subr.mxu0 0.0
    %1526 = vmatpush1.msra.mxu0 0.0
    %1527 = vmatprep.subr.mxu0 0.0
    %1528 = vmatpush1.msra.mxu0 0.0
    %1529 = vmatprep.subr.mxu0 0.0
    %1530 = vmatpush1.msra.mxu0 0.0
    %1531 = vmatprep.subr.mxu0 0.0
    %1532 = vmatpush1.msra.mxu0 0.0
    %1533 = vmatprep.subr.mxu0 0.0
    %1534 = vmatpush1.msra.mxu0 0.0
    %1535 = vmatprep.subr.mxu0 0.0
    %1536 = vmatpush1.msra.mxu0 0.0
    %1537 = vmatprep.subr.mxu0 0.0
    %1538 = vmatpush1.msra.mxu0 0.0
    %1539 = vmatprep.subr.mxu0 0.0
    %1540 = vmatpush1.msra.mxu0 0.0
    %1541 = vmatprep.subr.mxu0 0.0
    %1542 = vmatpush1.msra.mxu0 0.0
    %1543 = vmatprep.subr.mxu0 0.0
    %1544 = vmatpush1.msra.mxu0 0.0
    %1545 = vmatprep.subr.mxu0 0.0
    %1546 = vmatpush1.msra.mxu0 0.0
    %1547 = vmatprep.subr.mxu0 0.0
    %1548 = vmatpush1.msra.mxu0 0.0
    %1549 = vmatprep.mubr.f32.mxu0 0.0
    %1550 = vmatmul.mubr.f32.gmra.mrb[0].mxu0 %v1271
    %v1551 = vpop.f32.mrb[0].mxu0
    %v1552 = vadd.f32 %v1410, %v1551
    %v1553 = vpop.f32.mrb[0].mxu0
    %v1554 = vadd.f32 %v1412, %v1553
    %1555 = vdwg.mxu0
    %v1556 = vadd.f32 %v1481, %v1065
    %v1557 = vadd.f32 %v1483, %v1069
    %v1558 = vadd.f32 %v1552, %v1073
    %v1559 = vadd.f32 %v1554, %v1077
    %v1560 = vmul.f32 %v1556, 0.5
    %v1561 = vmul.f32 %v1557, 0.5
    %v1562 = vmul.f32 %v1558, 0.5
    %v1563 = vtanh.pop %v1560
    %v1564 = vtanh.pop %v1561
    %v1565 = vtanh.pop %v1562
    %v1566 = vmul.f32 %v1563, 0.5
    %v1567 = vmul.f32 %v1564, 0.5
    %v1568 = vmul.f32 %v1565, 0.5
    %v1569 = vadd.f32 %v1566, 0.5
    %v1570 = vadd.f32 %v1567, 0.5
    %v1571 = vadd.f32 %v1568, 0.5
    %v1572 = vtanh.pop %v1559
    %v1573 = vmul.f32 %v1570, %v1101
    %v1574 = vmul.f32 %v1569, %v1572
    %v1575 = vadd.f32 %v1573, %v1574
    %v1576 = vtanh.pop %v1575
    %v1577 = vmul.f32 %v1571, %v1576
    %v1578 = vld [vmem:[#allocation2 + $0x40] sm:$0xff]
    %v1579 = vld [vmem:[#allocation2 + $0x48] sm:$0xff]
    %v1580 = vld [vmem:[#allocation2 + $0x50] sm:$0xff]
    %v1581 = vld [vmem:[#allocation2 + $0x58] sm:$0xff]
    %1582 = vmatprep.subr.mxu0 %v417
    %1583 = vmatpush1.msra.mxu0 %v416
    %1584 = vmatprep.subr.mxu0 %v421
    %1585 = vmatpush1.msra.mxu0 %v420
    %1586 = vmatprep.subr.mxu0 %v425
    %1587 = vmatpush1.msra.mxu0 %v424
    %1588 = vmatprep.subr.mxu0 %v429
    %1589 = vmatpush1.msra.mxu0 %v428
    %1590 = vmatprep.subr.mxu0 %v433
    %1591 = vmatpush1.msra.mxu0 %v432
    %1592 = vmatprep.subr.mxu0 %v437
    %1593 = vmatpush1.msra.mxu0 %v436
    %1594 = vmatprep.subr.mxu0 %v441
    %1595 = vmatpush1.msra.mxu0 %v440
    %1596 = vmatprep.subr.mxu0 %v445
    %1597 = vmatpush1.msra.mxu0 %v444
    %1598 = vmatprep.subr.mxu0 %v449
    %1599 = vmatpush1.msra.mxu0 %v448
    %1600 = vmatprep.subr.mxu0 %v453
    %1601 = vmatpush1.msra.mxu0 %v452
    %1602 = vmatprep.subr.mxu0 %v457
    %1603 = vmatpush1.msra.mxu0 %v456
    %1604 = vmatprep.subr.mxu0 %v461
    %1605 = vmatpush1.msra.mxu0 %v460
    %1606 = vmatprep.subr.mxu0 %v465
    %1607 = vmatpush1.msra.mxu0 %v464
    %1608 = vmatprep.subr.mxu0 %v469
    %1609 = vmatpush1.msra.mxu0 %v468
    %1610 = vmatprep.subr.mxu0 %v473
    %1611 = vmatpush1.msra.mxu0 %v472
    %1612 = vmatprep.subr.mxu0 %v477
    %1613 = vmatpush1.msra.mxu0 %v476
    %1614 = vmatprep.subr.mxu0 0.0
    %1615 = vmatpush1.msra.mxu0 0.0
    %1616 = vmatprep.subr.mxu0 0.0
    %1617 = vmatpush1.msra.mxu0 0.0
    %1618 = vmatprep.subr.mxu0 0.0
    %1619 = vmatpush1.msra.mxu0 0.0
    %1620 = vmatprep.subr.mxu0 0.0
    %1621 = vmatpush1.msra.mxu0 0.0
    %1622 = vmatprep.subr.mxu0 0.0
    %1623 = vmatpush1.msra.mxu0 0.0
    %1624 = vmatprep.subr.mxu0 0.0
    %1625 = vmatpush1.msra.mxu0 0.0
    %1626 = vmatprep.subr.mxu0 0.0
    %1627 = vmatpush1.msra.mxu0 0.0
    %1628 = vmatprep.subr.mxu0 0.0
    %1629 = vmatpush1.msra.mxu0 0.0
    %1630 = vmatprep.subr.mxu0 0.0
    %1631 = vmatpush1.msra.mxu0 0.0
    %1632 = vmatprep.subr.mxu0 0.0
    %1633 = vmatpush1.msra.mxu0 0.0
    %1634 = vmatprep.subr.mxu0 0.0
    %1635 = vmatpush1.msra.mxu0 0.0
    %1636 = vmatprep.subr.mxu0 0.0
    %1637 = vmatpush1.msra.mxu0 0.0
    %1638 = vmatprep.subr.mxu0 0.0
    %1639 = vmatpush1.msra.mxu0 0.0
    %1640 = vmatprep.subr.mxu0 0.0
    %1641 = vmatpush1.msra.mxu0 0.0
    %1642 = vmatprep.subr.mxu0 0.0
    %1643 = vmatpush1.msra.mxu0 0.0
    %1644 = vmatprep.subr.mxu0 0.0
    %1645 = vmatpush1.msra.mxu0 0.0
    %1646 = vmatprep.mubr.f32.mxu0 0.0
    %1647 = vmatmul.mubr.f32.gmra.mrb[0].mxu0 %v1271
    %v1648 = vpop.f32.mrb[0].mxu0
    %v1649 = vadd.f32 0.0, %v1648
    %v1650 = vpop.f32.mrb[0].mxu0
    %v1651 = vadd.f32 0.0, %v1650
    %1652 = vdwg.mxu0
    %1653 = vmatprep.subr.mxu0 %v419
    %1654 = vmatpush1.msra.mxu0 %v418
    %1655 = vmatprep.subr.mxu0 %v423
    %1656 = vmatpush1.msra.mxu0 %v422
    %1657 = vmatprep.subr.mxu0 %v427
    %1658 = vmatpush1.msra.mxu0 %v426
    %1659 = vmatprep.subr.mxu0 %v431
    %1660 = vmatpush1.msra.mxu0 %v430
    %1661 = vmatprep.subr.mxu0 %v435
    %1662 = vmatpush1.msra.mxu0 %v434
    %1663 = vmatprep.subr.mxu0 %v439
    %1664 = vmatpush1.msra.mxu0 %v438
    %1665 = vmatprep.subr.mxu0 %v443
    %1666 = vmatpush1.msra.mxu0 %v442
    %1667 = vmatprep.subr.mxu0 %v447
    %1668 = vmatpush1.msra.mxu0 %v446
    %1669 = vmatprep.subr.mxu0 %v451
    %1670 = vmatpush1.msra.mxu0 %v450
    %1671 = vmatprep.subr.mxu0 %v455
    %1672 = vmatpush1.msra.mxu0 %v454
    %1673 = vmatprep.subr.mxu0 %v459
    %1674 = vmatpush1.msra.mxu0 %v458
    %1675 = vmatprep.subr.mxu0 %v463
    %1676 = vmatpush1.msra.mxu0 %v462
    %1677 = vmatprep.subr.mxu0 %v467
    %1678 = vmatpush1.msra.mxu0 %v466
    %1679 = vmatprep.subr.mxu0 %v471
    %1680 = vmatpush1.msra.mxu0 %v470
    %1681 = vmatprep.subr.mxu0 %v475
    %1682 = vmatpush1.msra.mxu0 %v474
    %1683 = vmatprep.subr.mxu0 %v479
    %1684 = vmatpush1.msra.mxu0 %v478
    %1685 = vmatprep.subr.mxu0 0.0
    %1686 = vmatpush1.msra.mxu0 0.0
    %1687 = vmatprep.subr.mxu0 0.0
    %1688 = vmatpush1.msra.mxu0 0.0
    %1689 = vmatprep.subr.mxu0 0.0
    %1690 = vmatpush1.msra.mxu0 0.0
    %1691 = vmatprep.subr.mxu0 0.0
    %1692 = vmatpush1.msra.mxu0 0.0
    %1693 = vmatprep.subr.mxu0 0.0
    %1694 = vmatpush1.msra.mxu0 0.0
    %1695 = vmatprep.subr.mxu0 0.0
    %1696 = vmatpush1.msra.mxu0 0.0
    %1697 = vmatprep.subr.mxu0 0.0
    %1698 = vmatpush1.msra.mxu0 0.0
    %1699 = vmatprep.subr.mxu0 0.0
    %1700 = vmatpush1.msra.mxu0 0.0
    %1701 = vmatprep.subr.mxu0 0.0
    %1702 = vmatpush1.msra.mxu0 0.0
    %1703 = vmatprep.subr.mxu0 0.0
    %1704 = vmatpush1.msra.mxu0 0.0
    %1705 = vmatprep.subr.mxu0 0.0
    %1706 = vmatpush1.msra.mxu0 0.0
    %1707 = vmatprep.subr.mxu0 0.0
    %1708 = vmatpush1.msra.mxu0 0.0
    %1709 = vmatprep.subr.mxu0 0.0
    %1710 = vmatpush1.msra.mxu0 0.0
    %1711 = vmatprep.subr.mxu0 0.0
    %1712 = vmatpush1.msra.mxu0 0.0
    %1713 = vmatprep.subr.mxu0 0.0
    %1714 = vmatpush1.msra.mxu0 0.0
    %1715 = vmatprep.subr.mxu0 0.0
    %1716 = vmatpush1.msra.mxu0 0.0
    %1717 = vmatprep.mubr.f32.mxu0 0.0
    %1718 = vmatmul.mubr.f32.gmra.mrb[0].mxu0 %v1271
    %v1719 = vpop.f32.mrb[0].mxu0
    %v1720 = vadd.f32 0.0, %v1719
    %v1721 = vpop.f32.mrb[0].mxu0
    %v1722 = vadd.f32 0.0, %v1721
    %1723 = vdwg.mxu0
    %v1724 = vadd.f32 %v1578, %v1649
    %v1725 = vadd.f32 %v1579, %v1651
    %v1726 = vadd.f32 %v1580, %v1720
    %v1727 = vadd.f32 %v1581, %v1722
    %v1728 = vmul.f32 %v1724, 0.5
    %v1729 = vmul.f32 %v1725, 0.5
    %v1730 = vmul.f32 %v1726, 0.5
    %v1731 = vtanh.pop %v1728
    %v1732 = vtanh.pop %v1729
    %v1733 = vtanh.pop %v1730
    %v1734 = vmul.f32 %v1731, 0.5
    %v1735 = vmul.f32 %v1732, 0.5
    %v1736 = vmul.f32 %v1733, 0.5
    %v1737 = vadd.f32 %v1734, 0.5
    %v1738 = vadd.f32 %v1735, 0.5
    %v1739 = vadd.f32 %v1736, 0.5
    %v1740 = vtanh.pop %v1727
    %v1741 = vmul.f32 %v1738, %v1269
    %v1742 = vmul.f32 %v1737, %v1740
    %v1743 = vadd.f32 %v1741, %v1742
    %v1744 = vtanh.pop %v1743
    %v1745 = vmul.f32 %v1739, %v1744
    %1746 = vmatprep.subr.mxu0 %v545
    %1747 = vmatpush1.msra.mxu0 %v544
    %1748 = vmatprep.subr.mxu0 %v549
    %1749 = vmatpush1.msra.mxu0 %v548
    %1750 = vmatprep.subr.mxu0 %v553
    %1751 = vmatpush1.msra.mxu0 %v552
    %1752 = vmatprep.subr.mxu0 %v557
    %1753 = vmatpush1.msra.mxu0 %v556
    %1754 = vmatprep.subr.mxu0 %v561
    %1755 = vmatpush1.msra.mxu0 %v560
    %1756 = vmatprep.subr.mxu0 %v565
    %1757 = vmatpush1.msra.mxu0 %v564
    %1758 = vmatprep.subr.mxu0 %v569
    %1759 = vmatpush1.msra.mxu0 %v568
    %1760 = vmatprep.subr.mxu0 %v573
    %1761 = vmatpush1.msra.mxu0 %v572
    %1762 = vmatprep.subr.mxu0 %v577
    %1763 = vmatpush1.msra.mxu0 %v576
    %1764 = vmatprep.subr.mxu0 %v581
    %1765 = vmatpush1.msra.mxu0 %v580
    %1766 = vmatprep.subr.mxu0 %v585
    %1767 = vmatpush1.msra.mxu0 %v584
    %1768 = vmatprep.subr.mxu0 %v589
    %1769 = vmatpush1.msra.mxu0 %v588
    %1770 = vmatprep.subr.mxu0 %v593
    %1771 = vmatpush1.msra.mxu0 %v592
    %1772 = vmatprep.subr.mxu0 %v597
    %1773 = vmatpush1.msra.mxu0 %v596
    %1774 = vmatprep.subr.mxu0 %v601
    %1775 = vmatpush1.msra.mxu0 %v600
    %1776 = vmatprep.subr.mxu0 %v605
    %1777 = vmatpush1.msra.mxu0 %v604
    %1778 = vmatprep.subr.mxu0 0.0
    %1779 = vmatpush1.msra.mxu0 0.0
    %1780 = vmatprep.subr.mxu0 0.0
    %1781 = vmatpush1.msra.mxu0 0.0
    %1782 = vmatprep.subr.mxu0 0.0
    %1783 = vmatpush1.msra.mxu0 0.0
    %1784 = vmatprep.subr.mxu0 0.0
    %1785 = vmatpush1.msra.mxu0 0.0
    %1786 = vmatprep.subr.mxu0 0.0
    %1787 = vmatpush1.msra.mxu0 0.0
    %1788 = vmatprep.subr.mxu0 0.0
    %1789 = vmatpush1.msra.mxu0 0.0
    %1790 = vmatprep.subr.mxu0 0.0
    %1791 = vmatpush1.msra.mxu0 0.0
    %1792 = vmatprep.subr.mxu0 0.0
    %1793 = vmatpush1.msra.mxu0 0.0
    %1794 = vmatprep.subr.mxu0 0.0
    %1795 = vmatpush1.msra.mxu0 0.0
    %1796 = vmatprep.subr.mxu0 0.0
    %1797 = vmatpush1.msra.mxu0 0.0
    %1798 = vmatprep.subr.mxu0 0.0
    %1799 = vmatpush1.msra.mxu0 0.0
    %1800 = vmatprep.subr.mxu0 0.0
    %1801 = vmatpush1.msra.mxu0 0.0
    %1802 = vmatprep.subr.mxu0 0.0
    %1803 = vmatpush1.msra.mxu0 0.0
    %1804 = vmatprep.subr.mxu0 0.0
    %1805 = vmatpush1.msra.mxu0 0.0
    %1806 = vmatprep.subr.mxu0 0.0
    %1807 = vmatpush1.msra.mxu0 0.0
    %1808 = vmatprep.subr.mxu0 0.0
    %1809 = vmatpush1.msra.mxu0 0.0
    %1810 = vmatprep.mubr.f32.mxu0 0.0
    %1811 = vmatmul.mubr.f32.gmra.mrb[0].mxu0 %v1577
    %v1812 = vpop.f32.mrb[0].mxu0
    %v1813 = vadd.f32 0.0, %v1812
    %v1814 = vpop.f32.mrb[0].mxu0
    %v1815 = vadd.f32 0.0, %v1814
    %1816 = vdwg.mxu0
    %1817 = vmatprep.subr.mxu0 %v547
    %1818 = vmatpush1.msra.mxu0 %v546
    %1819 = vmatprep.subr.mxu0 %v551
    %1820 = vmatpush1.msra.mxu0 %v550
    %1821 = vmatprep.subr.mxu0 %v555
    %1822 = vmatpush1.msra.mxu0 %v554
    %1823 = vmatprep.subr.mxu0 %v559
    %1824 = vmatpush1.msra.mxu0 %v558
    %1825 = vmatprep.subr.mxu0 %v563
    %1826 = vmatpush1.msra.mxu0 %v562
    %1827 = vmatprep.subr.mxu0 %v567
    %1828 = vmatpush1.msra.mxu0 %v566
    %1829 = vmatprep.subr.mxu0 %v571
    %1830 = vmatpush1.msra.mxu0 %v570
    %1831 = vmatprep.subr.mxu0 %v575
    %1832 = vmatpush1.msra.mxu0 %v574
    %1833 = vmatprep.subr.mxu0 %v579
    %1834 = vmatpush1.msra.mxu0 %v578
    %1835 = vmatprep.subr.mxu0 %v583
    %1836 = vmatpush1.msra.mxu0 %v582
    %1837 = vmatprep.subr.mxu0 %v587
    %1838 = vmatpush1.msra.mxu0 %v586
    %1839 = vmatprep.subr.mxu0 %v591
    %1840 = vmatpush1.msra.mxu0 %v590
    %1841 = vmatprep.subr.mxu0 %v595
    %1842 = vmatpush1.msra.mxu0 %v594
    %1843 = vmatprep.subr.mxu0 %v599
    %1844 = vmatpush1.msra.mxu0 %v598
    %1845 = vmatprep.subr.mxu0 %v603
    %1846 = vmatpush1.msra.mxu0 %v602
    %1847 = vmatprep.subr.mxu0 %v607
    %1848 = vmatpush1.msra.mxu0 %v606
    %1849 = vmatprep.subr.mxu0 0.0
    %1850 = vmatpush1.msra.mxu0 0.0
    %1851 = vmatprep.subr.mxu0 0.0
    %1852 = vmatpush1.msra.mxu0 0.0
    %1853 = vmatprep.subr.mxu0 0.0
    %1854 = vmatpush1.msra.mxu0 0.0
    %1855 = vmatprep.subr.mxu0 0.0
    %1856 = vmatpush1.msra.mxu0 0.0
    %1857 = vmatprep.subr.mxu0 0.0
    %1858 = vmatpush1.msra.mxu0 0.0
    %1859 = vmatprep.subr.mxu0 0.0
    %1860 = vmatpush1.msra.mxu0 0.0
    %1861 = vmatprep.subr.mxu0 0.0
    %1862 = vmatpush1.msra.mxu0 0.0
    %1863 = vmatprep.subr.mxu0 0.0
    %1864 = vmatpush1.msra.mxu0 0.0
    %1865 = vmatprep.subr.mxu0 0.0
    %1866 = vmatpush1.msra.mxu0 0.0
    %1867 = vmatprep.subr.mxu0 0.0
    %1868 = vmatpush1.msra.mxu0 0.0
    %1869 = vmatprep.subr.mxu0 0.0
    %1870 = vmatpush1.msra.mxu0 0.0
    %1871 = vmatprep.subr.mxu0 0.0
    %1872 = vmatpush1.msra.mxu0 0.0
    %1873 = vmatprep.subr.mxu0 0.0
    %1874 = vmatpush1.msra.mxu0 0.0
    %1875 = vmatprep.subr.mxu0 0.0
    %1876 = vmatpush1.msra.mxu0 0.0
    %1877 = vmatprep.subr.mxu0 0.0
    %1878 = vmatpush1.msra.mxu0 0.0
    %1879 = vmatprep.subr.mxu0 0.0
    %1880 = vmatpush1.msra.mxu0 0.0
    %1881 = vmatprep.mubr.f32.mxu0 0.0
    %1882 = vmatmul.mubr.f32.gmra.mrb[0].mxu0 %v1577
    %v1883 = vpop.f32.mrb[0].mxu0
    %v1884 = vadd.f32 0.0, %v1883
    %v1885 = vpop.f32.mrb[0].mxu0
    %v1886 = vadd.f32 0.0, %v1885
    %1887 = vdwg.mxu0
    %1888 = vmatprep.subr.mxu0 %v481
    %1889 = vmatpush1.msra.mxu0 %v480
    %1890 = vmatprep.subr.mxu0 %v485
    %1891 = vmatpush1.msra.mxu0 %v484
    %1892 = vmatprep.subr.mxu0 %v489
    %1893 = vmatpush1.msra.mxu0 %v488
    %1894 = vmatprep.subr.mxu0 %v493
    %1895 = vmatpush1.msra.mxu0 %v492
    %1896 = vmatprep.subr.mxu0 %v497
    %1897 = vmatpush1.msra.mxu0 %v496
    %1898 = vmatprep.subr.mxu0 %v501
    %1899 = vmatpush1.msra.mxu0 %v500
    %1900 = vmatprep.subr.mxu0 %v505
    %1901 = vmatpush1.msra.mxu0 %v504
    %1902 = vmatprep.subr.mxu0 %v509
    %1903 = vmatpush1.msra.mxu0 %v508
    %1904 = vmatprep.subr.mxu0 %v513
    %1905 = vmatpush1.msra.mxu0 %v512
    %1906 = vmatprep.subr.mxu0 %v517
    %1907 = vmatpush1.msra.mxu0 %v516
    %1908 = vmatprep.subr.mxu0 %v521
    %1909 = vmatpush1.msra.mxu0 %v520
    %1910 = vmatprep.subr.mxu0 %v525
    %1911 = vmatpush1.msra.mxu0 %v524
    %1912 = vmatprep.subr.mxu0 %v529
    %1913 = vmatpush1.msra.mxu0 %v528
    %1914 = vmatprep.subr.mxu0 %v533
    %1915 = vmatpush1.msra.mxu0 %v532
    %1916 = vmatprep.subr.mxu0 %v537
    %1917 = vmatpush1.msra.mxu0 %v536
    %1918 = vmatprep.subr.mxu0 %v541
    %1919 = vmatpush1.msra.mxu0 %v540
    %1920 = vmatprep.subr.mxu0 0.0
    %1921 = vmatpush1.msra.mxu0 0.0
    %1922 = vmatprep.subr.mxu0 0.0
    %1923 = vmatpush1.msra.mxu0 0.0
    %1924 = vmatprep.subr.mxu0 0.0
    %1925 = vmatpush1.msra.mxu0 0.0
    %1926 = vmatprep.subr.mxu0 0.0
    %1927 = vmatpush1.msra.mxu0 0.0
    %1928 = vmatprep.subr.mxu0 0.0
    %1929 = vmatpush1.msra.mxu0 0.0
    %1930 = vmatprep.subr.mxu0 0.0
    %1931 = vmatpush1.msra.mxu0 0.0
    %1932 = vmatprep.subr.mxu0 0.0
    %1933 = vmatpush1.msra.mxu0 0.0
    %1934 = vmatprep.subr.mxu0 0.0
    %1935 = vmatpush1.msra.mxu0 0.0
    %1936 = vmatprep.subr.mxu0 0.0
    %1937 = vmatpush1.msra.mxu0 0.0
    %1938 = vmatprep.subr.mxu0 0.0
    %1939 = vmatpush1.msra.mxu0 0.0
    %1940 = vmatprep.subr.mxu0 0.0
    %1941 = vmatpush1.msra.mxu0 0.0
    %1942 = vmatprep.subr.mxu0 0.0
    %1943 = vmatpush1.msra.mxu0 0.0
    %1944 = vmatprep.subr.mxu0 0.0
    %1945 = vmatpush1.msra.mxu0 0.0
    %1946 = vmatprep.subr.mxu0 0.0
    %1947 = vmatpush1.msra.mxu0 0.0
    %1948 = vmatprep.subr.mxu0 0.0
    %1949 = vmatpush1.msra.mxu0 0.0
    %1950 = vmatprep.subr.mxu0 0.0
    %1951 = vmatpush1.msra.mxu0 0.0
    %1952 = vmatprep.mubr.f32.mxu0 0.0
    %1953 = vmatmul.mubr.f32.gmra.mrb[0].mxu0 %v1745
    %v1954 = vpop.f32.mrb[0].mxu0
    %v1955 = vadd.f32 %v1813, %v1954
    %v1956 = vpop.f32.mrb[0].mxu0
    %v1957 = vadd.f32 %v1815, %v1956
    %1958 = vdwg.mxu0
    %1959 = vmatprep.subr.mxu0 %v483
    %1960 = vmatpush1.msra.mxu0 %v482
    %1961 = vmatprep.subr.mxu0 %v487
    %1962 = vmatpush1.msra.mxu0 %v486
    %1963 = vmatprep.subr.mxu0 %v491
    %1964 = vmatpush1.msra.mxu0 %v490
    %1965 = vmatprep.subr.mxu0 %v495
    %1966 = vmatpush1.msra.mxu0 %v494
    %1967 = vmatprep.subr.mxu0 %v499
    %1968 = vmatpush1.msra.mxu0 %v498
    %1969 = vmatprep.subr.mxu0 %v503
    %1970 = vmatpush1.msra.mxu0 %v502
    %1971 = vmatprep.subr.mxu0 %v507
    %1972 = vmatpush1.msra.mxu0 %v506
    %1973 = vmatprep.subr.mxu0 %v511
    %1974 = vmatpush1.msra.mxu0 %v510
    %1975 = vmatprep.subr.mxu0 %v515
    %1976 = vmatpush1.msra.mxu0 %v514
    %1977 = vmatprep.subr.mxu0 %v519
    %1978 = vmatpush1.msra.mxu0 %v518
    %1979 = vmatprep.subr.mxu0 %v523
    %1980 = vmatpush1.msra.mxu0 %v522
    %1981 = vmatprep.subr.mxu0 %v527
    %1982 = vmatpush1.msra.mxu0 %v526
    %1983 = vmatprep.subr.mxu0 %v531
    %1984 = vmatpush1.msra.mxu0 %v530
    %1985 = vmatprep.subr.mxu0 %v535
    %1986 = vmatpush1.msra.mxu0 %v534
    %1987 = vmatprep.subr.mxu0 %v539
    %1988 = vmatpush1.msra.mxu0 %v538
    %1989 = vmatprep.subr.mxu0 %v543
    %1990 = vmatpush1.msra.mxu0 %v542
    %1991 = vmatprep.subr.mxu0 0.0
    %1992 = vmatpush1.msra.mxu0 0.0
    %1993 = vmatprep.subr.mxu0 0.0
    %1994 = vmatpush1.msra.mxu0 0.0
    %1995 = vmatprep.subr.mxu0 0.0
    %1996 = vmatpush1.msra.mxu0 0.0
    %1997 = vmatprep.subr.mxu0 0.0
    %1998 = vmatpush1.msra.mxu0 0.0
    %1999 = vmatprep.subr.mxu0 0.0
    %2000 = vmatpush1.msra.mxu0 0.0
    %2001 = vmatprep.subr.mxu0 0.0
    %2002 = vmatpush1.msra.mxu0 0.0
    %2003 = vmatprep.subr.mxu0 0.0
    %2004 = vmatpush1.msra.mxu0 0.0
    %2005 = vmatprep.subr.mxu0 0.0
    %2006 = vmatpush1.msra.mxu0 0.0
    %2007 = vmatprep.subr.mxu0 0.0
    %2008 = vmatpush1.msra.mxu0 0.0
    %2009 = vmatprep.subr.mxu0 0.0
    %2010 = vmatpush1.msra.mxu0 0.0
    %2011 = vmatprep.subr.mxu0 0.0
    %2012 = vmatpush1.msra.mxu0 0.0
    %2013 = vmatprep.subr.mxu0 0.0
    %2014 = vmatpush1.msra.mxu0 0.0
    %2015 = vmatprep.subr.mxu0 0.0
    %2016 = vmatpush1.msra.mxu0 0.0
    %2017 = vmatprep.subr.mxu0 0.0
    %2018 = vmatpush1.msra.mxu0 0.0
    %2019 = vmatprep.subr.mxu0 0.0
    %2020 = vmatpush1.msra.mxu0 0.0
    %2021 = vmatprep.subr.mxu0 0.0
    %2022 = vmatpush1.msra.mxu0 0.0
    %2023 = vmatprep.mubr.f32.mxu0 0.0
    %2024 = vmatmul.mubr.f32.gmra.mrb[0].mxu0 %v1745
    %v2025 = vpop.f32.mrb[0].mxu0
    %v2026 = vadd.f32 %v1884, %v2025
    %v2027 = vpop.f32.mrb[0].mxu0
    %v2028 = vadd.f32 %v1886, %v2027
    %2029 = vdwg.mxu0
    %v2030 = vadd.f32 %v1955, %v1065
    %v2031 = vadd.f32 %v1957, %v1069
    %v2032 = vadd.f32 %v2026, %v1073
    %v2033 = vadd.f32 %v2028, %v1077
    %v2034 = vmul.f32 %v2030, 0.5
    %v2035 = vmul.f32 %v2031, 0.5
    %v2036 = vmul.f32 %v2032, 0.5
    %v2037 = vtanh.pop %v2034
    %v2038 = vtanh.pop %v2035
    %v2039 = vtanh.pop %v2036
    %v2040 = vmul.f32 %v2037, 0.5
    %v2041 = vmul.f32 %v2038, 0.5
    %v2042 = vmul.f32 %v2039, 0.5
    %v2043 = vadd.f32 %v2040, 0.5
    %v2044 = vadd.f32 %v2041, 0.5
    %v2045 = vadd.f32 %v2042, 0.5
    %v2046 = vtanh.pop %v2033
    %v2047 = vmul.f32 %v2044, %v1575
    %v2048 = vmul.f32 %v2043, %v2046
    %v2049 = vadd.f32 %v2047, %v2048
    %v2050 = vtanh.pop %v2049
    %v2051 = vmul.f32 %v2045, %v2050
    %v2052 = vld [vmem:[#allocation2 + $0x60] sm:$0xff]
    %v2053 = vld [vmem:[#allocation2 + $0x68] sm:$0xff]
    %v2054 = vld [vmem:[#allocation2 + $0x70] sm:$0xff]
    %v2055 = vld [vmem:[#allocation2 + $0x78] sm:$0xff]
    %2056 = vmatprep.subr.mxu0 %v417
    %2057 = vmatpush1.msra.mxu0 %v416
    %2058 = vmatprep.subr.mxu0 %v421
    %2059 = vmatpush1.msra.mxu0 %v420
    %2060 = vmatprep.subr.mxu0 %v425
    %2061 = vmatpush1.msra.mxu0 %v424
    %2062 = vmatprep.subr.mxu0 %v429
    %2063 = vmatpush1.msra.mxu0 %v428
    %2064 = vmatprep.subr.mxu0 %v433
    %2065 = vmatpush1.msra.mxu0 %v432
    %2066 = vmatprep.subr.mxu0 %v437
    %2067 = vmatpush1.msra.mxu0 %v436
    %2068 = vmatprep.subr.mxu0 %v441
    %2069 = vmatpush1.msra.mxu0 %v440
    %2070 = vmatprep.subr.mxu0 %v445
    %2071 = vmatpush1.msra.mxu0 %v444
    %2072 = vmatprep.subr.mxu0 %v449
    %2073 = vmatpush1.msra.mxu0 %v448
    %2074 = vmatprep.subr.mxu0 %v453
    %2075 = vmatpush1.msra.mxu0 %v452
    %2076 = vmatprep.subr.mxu0 %v457
    %2077 = vmatpush1.msra.mxu0 %v456
    %2078 = vmatprep.subr.mxu0 %v461
    %2079 = vmatpush1.msra.mxu0 %v460
    %2080 = vmatprep.subr.mxu0 %v465
    %2081 = vmatpush1.msra.mxu0 %v464
    %2082 = vmatprep.subr.mxu0 %v469
    %2083 = vmatpush1.msra.mxu0 %v468
    %2084 = vmatprep.subr.mxu0 %v473
    %2085 = vmatpush1.msra.mxu0 %v472
    %2086 = vmatprep.subr.mxu0 %v477
    %2087 = vmatpush1.msra.mxu0 %v476
    %2088 = vmatprep.subr.mxu0 0.0
    %2089 = vmatpush1.msra.mxu0 0.0
    %2090 = vmatprep.subr.mxu0 0.0
    %2091 = vmatpush1.msra.mxu0 0.0
    %2092 = vmatprep.subr.mxu0 0.0
    %2093 = vmatpush1.msra.mxu0 0.0
    %2094 = vmatprep.subr.mxu0 0.0
    %2095 = vmatpush1.msra.mxu0 0.0
    %2096 = vmatprep.subr.mxu0 0.0
    %2097 = vmatpush1.msra.mxu0 0.0
    %2098 = vmatprep.subr.mxu0 0.0
    %2099 = vmatpush1.msra.mxu0 0.0
    %2100 = vmatprep.subr.mxu0 0.0
    %2101 = vmatpush1.msra.mxu0 0.0
    %2102 = vmatprep.subr.mxu0 0.0
    %2103 = vmatpush1.msra.mxu0 0.0
    %2104 = vmatprep.subr.mxu0 0.0
    %2105 = vmatpush1.msra.mxu0 0.0
    %2106 = vmatprep.subr.mxu0 0.0
    %2107 = vmatpush1.msra.mxu0 0.0
    %2108 = vmatprep.subr.mxu0 0.0
    %2109 = vmatpush1.msra.mxu0 0.0
    %2110 = vmatprep.subr.mxu0 0.0
    %2111 = vmatpush1.msra.mxu0 0.0
    %2112 = vmatprep.subr.mxu0 0.0
    %2113 = vmatpush1.msra.mxu0 0.0
    %2114 = vmatprep.subr.mxu0 0.0
    %2115 = vmatpush1.msra.mxu0 0.0
    %2116 = vmatprep.subr.mxu0 0.0
    %2117 = vmatpush1.msra.mxu0 0.0
    %2118 = vmatprep.subr.mxu0 0.0
    %2119 = vmatpush1.msra.mxu0 0.0
    %2120 = vmatprep.mubr.f32.mxu0 0.0
    %2121 = vmatmul.mubr.f32.gmra.mrb[0].mxu0 %v1745
    %v2122 = vpop.f32.mrb[0].mxu0
    %v2123 = vadd.f32 0.0, %v2122
    %v2124 = vpop.f32.mrb[0].mxu0
    %v2125 = vadd.f32 0.0, %v2124
    %2126 = vdwg.mxu0
    %2127 = vmatprep.subr.mxu0 %v419
    %2128 = vmatpush1.msra.mxu0 %v418
    %2129 = vmatprep.subr.mxu0 %v423
    %2130 = vmatpush1.msra.mxu0 %v422
    %2131 = vmatprep.subr.mxu0 %v427
    %2132 = vmatpush1.msra.mxu0 %v426
    %2133 = vmatprep.subr.mxu0 %v431
    %2134 = vmatpush1.msra.mxu0 %v430
    %2135 = vmatprep.subr.mxu0 %v435
    %2136 = vmatpush1.msra.mxu0 %v434
    %2137 = vmatprep.subr.mxu0 %v439
    %2138 = vmatpush1.msra.mxu0 %v438
    %2139 = vmatprep.subr.mxu0 %v443
    %2140 = vmatpush1.msra.mxu0 %v442
    %2141 = vmatprep.subr.mxu0 %v447
    %2142 = vmatpush1.msra.mxu0 %v446
    %2143 = vmatprep.subr.mxu0 %v451
    %2144 = vmatpush1.msra.mxu0 %v450
    %2145 = vmatprep.subr.mxu0 %v455
    %2146 = vmatpush1.msra.mxu0 %v454
    %2147 = vmatprep.subr.mxu0 %v459
    %2148 = vmatpush1.msra.mxu0 %v458
    %2149 = vmatprep.subr.mxu0 %v463
    %2150 = vmatpush1.msra.mxu0 %v462
    %2151 = vmatprep.subr.mxu0 %v467
    %2152 = vmatpush1.msra.mxu0 %v466
    %2153 = vmatprep.subr.mxu0 %v471
    %2154 = vmatpush1.msra.mxu0 %v470
    %2155 = vmatprep.subr.mxu0 %v475
    %2156 = vmatpush1.msra.mxu0 %v474
    %2157 = vmatprep.subr.mxu0 %v479
    %2158 = vmatpush1.msra.mxu0 %v478
    %2159 = vmatprep.subr.mxu0 0.0
    %2160 = vmatpush1.msra.mxu0 0.0
    %2161 = vmatprep.subr.mxu0 0.0
    %2162 = vmatpush1.msra.mxu0 0.0
    %2163 = vmatprep.subr.mxu0 0.0
    %2164 = vmatpush1.msra.mxu0 0.0
    %2165 = vmatprep.subr.mxu0 0.0
    %2166 = vmatpush1.msra.mxu0 0.0
    %2167 = vmatprep.subr.mxu0 0.0
    %2168 = vmatpush1.msra.mxu0 0.0
    %2169 = vmatprep.subr.mxu0 0.0
    %2170 = vmatpush1.msra.mxu0 0.0
    %2171 = vmatprep.subr.mxu0 0.0
    %2172 = vmatpush1.msra.mxu0 0.0
    %2173 = vmatprep.subr.mxu0 0.0
    %2174 = vmatpush1.msra.mxu0 0.0
    %2175 = vmatprep.subr.mxu0 0.0
    %2176 = vmatpush1.msra.mxu0 0.0
    %2177 = vmatprep.subr.mxu0 0.0
    %2178 = vmatpush1.msra.mxu0 0.0
    %2179 = vmatprep.subr.mxu0 0.0
    %2180 = vmatpush1.msra.mxu0 0.0
    %2181 = vmatprep.subr.mxu0 0.0
    %2182 = vmatpush1.msra.mxu0 0.0
    %2183 = vmatprep.subr.mxu0 0.0
    %2184 = vmatpush1.msra.mxu0 0.0
    %2185 = vmatprep.subr.mxu0 0.0
    %2186 = vmatpush1.msra.mxu0 0.0
    %2187 = vmatprep.subr.mxu0 0.0
    %2188 = vmatpush1.msra.mxu0 0.0
    %2189 = vmatprep.subr.mxu0 0.0
    %2190 = vmatpush1.msra.mxu0 0.0
    %2191 = vmatprep.mubr.f32.mxu0 0.0
    %2192 = vmatmul.mubr.f32.gmra.mrb[0].mxu0 %v1745
    %v2193 = vpop.f32.mrb[0].mxu0
    %v2194 = vadd.f32 0.0, %v2193
    %v2195 = vpop.f32.mrb[0].mxu0
    %v2196 = vadd.f32 0.0, %v2195
    %2197 = vdwg.mxu0
    %v2198 = vadd.f32 %v2052, %v2123
    %v2199 = vadd.f32 %v2053, %v2125
    %v2200 = vadd.f32 %v2054, %v2194
    %v2201 = vadd.f32 %v2055, %v2196
    %v2202 = vmul.f32 %v2198, 0.5
    %v2203 = vmul.f32 %v2199, 0.5
    %v2204 = vmul.f32 %v2200, 0.5
    %v2205 = vtanh.pop %v2202
    %v2206 = vtanh.pop %v2203
    %v2207 = vtanh.pop %v2204
    %v2208 = vmul.f32 %v2205, 0.5
    %v2209 = vmul.f32 %v2206, 0.5
    %v2210 = vmul.f32 %v2207, 0.5
    %v2211 = vadd.f32 %v2208, 0.5
    %v2212 = vadd.f32 %v2209, 0.5
    %v2213 = vadd.f32 %v2210, 0.5
    %v2214 = vtanh.pop %v2201
    %v2215 = vmul.f32 %v2212, %v1743
    %v2216 = vmul.f32 %v2211, %v2214
    %v2217 = vadd.f32 %v2215, %v2216
    %v2218 = vtanh.pop %v2217
    %v2219 = vmul.f32 %v2213, %v2218
    %2220 = vmatprep.subr.mxu0 %v545
    %2221 = vmatpush1.msra.mxu0 %v544
    %2222 = vmatprep.subr.mxu0 %v549
    %2223 = vmatpush1.msra.mxu0 %v548
    %2224 = vmatprep.subr.mxu0 %v553
    %2225 = vmatpush1.msra.mxu0 %v552
    %2226 = vmatprep.subr.mxu0 %v557
    %2227 = vmatpush1.msra.mxu0 %v556
    %2228 = vmatprep.subr.mxu0 %v561
    %2229 = vmatpush1.msra.mxu0 %v560
    %2230 = vmatprep.subr.mxu0 %v565
    %2231 = vmatpush1.msra.mxu0 %v564
    %2232 = vmatprep.subr.mxu0 %v569
    %2233 = vmatpush1.msra.mxu0 %v568
    %2234 = vmatprep.subr.mxu0 %v573
    %2235 = vmatpush1.msra.mxu0 %v572
    %2236 = vmatprep.subr.mxu0 %v577
    %2237 = vmatpush1.msra.mxu0 %v576
    %2238 = vmatprep.subr.mxu0 %v581
    %2239 = vmatpush1.msra.mxu0 %v580
    %2240 = vmatprep.subr.mxu0 %v585
    %2241 = vmatpush1.msra.mxu0 %v584
    %2242 = vmatprep.subr.mxu0 %v589
    %2243 = vmatpush1.msra.mxu0 %v588
    %2244 = vmatprep.subr.mxu0 %v593
    %2245 = vmatpush1.msra.mxu0 %v592
    %2246 = vmatprep.subr.mxu0 %v597
    %2247 = vmatpush1.msra.mxu0 %v596
    %2248 = vmatprep.subr.mxu0 %v601
    %2249 = vmatpush1.msra.mxu0 %v600
    %2250 = vmatprep.subr.mxu0 %v605
    %2251 = vmatpush1.msra.mxu0 %v604
    %2252 = vmatprep.subr.mxu0 0.0
    %2253 = vmatpush1.msra.mxu0 0.0
    %2254 = vmatprep.subr.mxu0 0.0
    %2255 = vmatpush1.msra.mxu0 0.0
    %2256 = vmatprep.subr.mxu0 0.0
    %2257 = vmatpush1.msra.mxu0 0.0
    %2258 = vmatprep.subr.mxu0 0.0
    %2259 = vmatpush1.msra.mxu0 0.0
    %2260 = vmatprep.subr.mxu0 0.0
    %2261 = vmatpush1.msra.mxu0 0.0
    %2262 = vmatprep.subr.mxu0 0.0
    %2263 = vmatpush1.msra.mxu0 0.0
    %2264 = vmatprep.subr.mxu0 0.0
    %2265 = vmatpush1.msra.mxu0 0.0
    %2266 = vmatprep.subr.mxu0 0.0
    %2267 = vmatpush1.msra.mxu0 0.0
    %2268 = vmatprep.subr.mxu0 0.0
    %2269 = vmatpush1.msra.mxu0 0.0
    %2270 = vmatprep.subr.mxu0 0.0
    %2271 = vmatpush1.msra.mxu0 0.0
    %2272 = vmatprep.subr.mxu0 0.0
    %2273 = vmatpush1.msra.mxu0 0.0
    %2274 = vmatprep.subr.mxu0 0.0
    %2275 = vmatpush1.msra.mxu0 0.0
    %2276 = vmatprep.subr.mxu0 0.0
    %2277 = vmatpush1.msra.mxu0 0.0
    %2278 = vmatprep.subr.mxu0 0.0
    %2279 = vmatpush1.msra.mxu0 0.0
    %2280 = vmatprep.subr.mxu0 0.0
    %2281 = vmatpush1.msra.mxu0 0.0
    %2282 = vmatprep.subr.mxu0 0.0
    %2283 = vmatpush1.msra.mxu0 0.0
    %2284 = vmatprep.mubr.f32.mxu0 0.0
    %2285 = vmatmul.mubr.f32.gmra.mrb[0].mxu0 %v2051
    %v2286 = vpop.f32.mrb[0].mxu0
    %v2287 = vadd.f32 0.0, %v2286
    %v2288 = vpop.f32.mrb[0].mxu0
    %v2289 = vadd.f32 0.0, %v2288
    %2290 = vdwg.mxu0
    %2291 = vmatprep.subr.mxu0 %v547
    %2292 = vmatpush1.msra.mxu0 %v546
    %2293 = vmatprep.subr.mxu0 %v551
    %2294 = vmatpush1.msra.mxu0 %v550
    %2295 = vmatprep.subr.mxu0 %v555
    %2296 = vmatpush1.msra.mxu0 %v554
    %2297 = vmatprep.subr.mxu0 %v559
    %2298 = vmatpush1.msra.mxu0 %v558
    %2299 = vmatprep.subr.mxu0 %v563
    %2300 = vmatpush1.msra.mxu0 %v562
    %2301 = vmatprep.subr.mxu0 %v567
    %2302 = vmatpush1.msra.mxu0 %v566
    %2303 = vmatprep.subr.mxu0 %v571
    %2304 = vmatpush1.msra.mxu0 %v570
    %2305 = vmatprep.subr.mxu0 %v575
    %2306 = vmatpush1.msra.mxu0 %v574
    %2307 = vmatprep.subr.mxu0 %v579
    %2308 = vmatpush1.msra.mxu0 %v578
    %2309 = vmatprep.subr.mxu0 %v583
    %2310 = vmatpush1.msra.mxu0 %v582
    %2311 = vmatprep.subr.mxu0 %v587
    %2312 = vmatpush1.msra.mxu0 %v586
    %2313 = vmatprep.subr.mxu0 %v591
    %2314 = vmatpush1.msra.mxu0 %v590
    %2315 = vmatprep.subr.mxu0 %v595
    %2316 = vmatpush1.msra.mxu0 %v594
    %2317 = vmatprep.subr.mxu0 %v599
    %2318 = vmatpush1.msra.mxu0 %v598
    %2319 = vmatprep.subr.mxu0 %v603
    %2320 = vmatpush1.msra.mxu0 %v602
    %2321 = vmatprep.subr.mxu0 %v607
    %2322 = vmatpush1.msra.mxu0 %v606
    %2323 = vmatprep.subr.mxu0 0.0
    %2324 = vmatpush1.msra.mxu0 0.0
    %2325 = vmatprep.subr.mxu0 0.0
    %2326 = vmatpush1.msra.mxu0 0.0
    %2327 = vmatprep.subr.mxu0 0.0
    %2328 = vmatpush1.msra.mxu0 0.0
    %2329 = vmatprep.subr.mxu0 0.0
    %2330 = vmatpush1.msra.mxu0 0.0
    %2331 = vmatprep.subr.mxu0 0.0
    %2332 = vmatpush1.msra.mxu0 0.0
    %2333 = vmatprep.subr.mxu0 0.0
    %2334 = vmatpush1.msra.mxu0 0.0
    %2335 = vmatprep.subr.mxu0 0.0
    %2336 = vmatpush1.msra.mxu0 0.0
    %2337 = vmatprep.subr.mxu0 0.0
    %2338 = vmatpush1.msra.mxu0 0.0
    %2339 = vmatprep.subr.mxu0 0.0
    %2340 = vmatpush1.msra.mxu0 0.0
    %2341 = vmatprep.subr.mxu0 0.0
    %2342 = vmatpush1.msra.mxu0 0.0
    %2343 = vmatprep.subr.mxu0 0.0
    %2344 = vmatpush1.msra.mxu0 0.0
    %2345 = vmatprep.subr.mxu0 0.0
    %2346 = vmatpush1.msra.mxu0 0.0
    %2347 = vmatprep.subr.mxu0 0.0
    %2348 = vmatpush1.msra.mxu0 0.0
    %2349 = vmatprep.subr.mxu0 0.0
    %2350 = vmatpush1.msra.mxu0 0.0
    %2351 = vmatprep.subr.mxu0 0.0
    %2352 = vmatpush1.msra.mxu0 0.0
    %2353 = vmatprep.subr.mxu0 0.0
    %2354 = vmatpush1.msra.mxu0 0.0
    %2355 = vmatprep.mubr.f32.mxu0 0.0
    %2356 = vmatmul.mubr.f32.gmra.mrb[0].mxu0 %v2051
    %v2357 = vpop.f32.mrb[0].mxu0
    %v2358 = vadd.f32 0.0, %v2357
    %v2359 = vpop.f32.mrb[0].mxu0
    %v2360 = vadd.f32 0.0, %v2359
    %2361 = vdwg.mxu0
    %2362 = vmatprep.subr.mxu0 %v481
    %2363 = vmatpush1.msra.mxu0 %v480
    %2364 = vmatprep.subr.mxu0 %v485
    %2365 = vmatpush1.msra.mxu0 %v484
    %2366 = vmatprep.subr.mxu0 %v489
    %2367 = vmatpush1.msra.mxu0 %v488
    %2368 = vmatprep.subr.mxu0 %v493
    %2369 = vmatpush1.msra.mxu0 %v492
    %2370 = vmatprep.subr.mxu0 %v497
    %2371 = vmatpush1.msra.mxu0 %v496
    %2372 = vmatprep.subr.mxu0 %v501
    %2373 = vmatpush1.msra.mxu0 %v500
    %2374 = vmatprep.subr.mxu0 %v505
    %2375 = vmatpush1.msra.mxu0 %v504
    %2376 = vmatprep.subr.mxu0 %v509
    %2377 = vmatpush1.msra.mxu0 %v508
    %2378 = vmatprep.subr.mxu0 %v513
    %2379 = vmatpush1.msra.mxu0 %v512
    %2380 = vmatprep.subr.mxu0 %v517
    %2381 = vmatpush1.msra.mxu0 %v516
    %2382 = vmatprep.subr.mxu0 %v521
    %2383 = vmatpush1.msra.mxu0 %v520
    %2384 = vmatprep.subr.mxu0 %v525
    %2385 = vmatpush1.msra.mxu0 %v524
    %2386 = vmatprep.subr.mxu0 %v529
    %2387 = vmatpush1.msra.mxu0 %v528
    %2388 = vmatprep.subr.mxu0 %v533
    %2389 = vmatpush1.msra.mxu0 %v532
    %2390 = vmatprep.subr.mxu0 %v537
    %2391 = vmatpush1.msra.mxu0 %v536
    %2392 = vmatprep.subr.mxu0 %v541
    %2393 = vmatpush1.msra.mxu0 %v540
    %2394 = vmatprep.subr.mxu0 0.0
    %2395 = vmatpush1.msra.mxu0 0.0
    %2396 = vmatprep.subr.mxu0 0.0
    %2397 = vmatpush1.msra.mxu0 0.0
    %2398 = vmatprep.subr.mxu0 0.0
    %2399 = vmatpush1.msra.mxu0 0.0
    %2400 = vmatprep.subr.mxu0 0.0
    %2401 = vmatpush1.msra.mxu0 0.0
    %2402 = vmatprep.subr.mxu0 0.0
    %2403 = vmatpush1.msra.mxu0 0.0
    %2404 = vmatprep.subr.mxu0 0.0
    %2405 = vmatpush1.msra.mxu0 0.0
    %2406 = vmatprep.subr.mxu0 0.0
    %2407 = vmatpush1.msra.mxu0 0.0
    %2408 = vmatprep.subr.mxu0 0.0
    %2409 = vmatpush1.msra.mxu0 0.0
    %2410 = vmatprep.subr.mxu0 0.0
    %2411 = vmatpush1.msra.mxu0 0.0
    %2412 = vmatprep.subr.mxu0 0.0
    %2413 = vmatpush1.msra.mxu0 0.0
    %2414 = vmatprep.subr.mxu0 0.0
    %2415 = vmatpush1.msra.mxu0 0.0
    %2416 = vmatprep.subr.mxu0 0.0
    %2417 = vmatpush1.msra.mxu0 0.0
    %2418 = vmatprep.subr.mxu0 0.0
    %2419 = vmatpush1.msra.mxu0 0.0
    %2420 = vmatprep.subr.mxu0 0.0
    %2421 = vmatpush1.msra.mxu0 0.0
    %2422 = vmatprep.subr.mxu0 0.0
    %2423 = vmatpush1.msra.mxu0 0.0
    %2424 = vmatprep.subr.mxu0 0.0
    %2425 = vmatpush1.msra.mxu0 0.0
    %2426 = vmatprep.mubr.f32.mxu0 0.0
    %2427 = vmatmul.mubr.f32.gmra.mrb[0].mxu0 %v2219
    %v2428 = vpop.f32.mrb[0].mxu0
    %v2429 = vadd.f32 %v2287, %v2428
    %v2430 = vpop.f32.mrb[0].mxu0
    %v2431 = vadd.f32 %v2289, %v2430
    %2432 = vdwg.mxu0
    %2433 = vmatprep.subr.mxu0 %v483
    %2434 = vmatpush1.msra.mxu0 %v482
    %2435 = vmatprep.subr.mxu0 %v487
    %2436 = vmatpush1.msra.mxu0 %v486
    %2437 = vmatprep.subr.mxu0 %v491
    %2438 = vmatpush1.msra.mxu0 %v490
    %2439 = vmatprep.subr.mxu0 %v495
    %2440 = vmatpush1.msra.mxu0 %v494
    %2441 = vmatprep.subr.mxu0 %v499
    %2442 = vmatpush1.msra.mxu0 %v498
    %2443 = vmatprep.subr.mxu0 %v503
    %2444 = vmatpush1.msra.mxu0 %v502
    %2445 = vmatprep.subr.mxu0 %v507
    %2446 = vmatpush1.msra.mxu0 %v506
    %2447 = vmatprep.subr.mxu0 %v511
    %2448 = vmatpush1.msra.mxu0 %v510
    %2449 = vmatprep.subr.mxu0 %v515
    %2450 = vmatpush1.msra.mxu0 %v514
    %2451 = vmatprep.subr.mxu0 %v519
    %2452 = vmatpush1.msra.mxu0 %v518
    %2453 = vmatprep.subr.mxu0 %v523
    %2454 = vmatpush1.msra.mxu0 %v522
    %2455 = vmatprep.subr.mxu0 %v527
    %2456 = vmatpush1.msra.mxu0 %v526
    %2457 = vmatprep.subr.mxu0 %v531
    %2458 = vmatpush1.msra.mxu0 %v530
    %2459 = vmatprep.subr.mxu0 %v535
    %2460 = vmatpush1.msra.mxu0 %v534
    %2461 = vmatprep.subr.mxu0 %v539
    %2462 = vmatpush1.msra.mxu0 %v538
    %2463 = vmatprep.subr.mxu0 %v543
    %2464 = vmatpush1.msra.mxu0 %v542
    %2465 = vmatprep.subr.mxu0 0.0
    %2466 = vmatpush1.msra.mxu0 0.0
    %2467 = vmatprep.subr.mxu0 0.0
    %2468 = vmatpush1.msra.mxu0 0.0
    %2469 = vmatprep.subr.mxu0 0.0
    %2470 = vmatpush1.msra.mxu0 0.0
    %2471 = vmatprep.subr.mxu0 0.0
    %2472 = vmatpush1.msra.mxu0 0.0
    %2473 = vmatprep.subr.mxu0 0.0
    %2474 = vmatpush1.msra.mxu0 0.0
    %2475 = vmatprep.subr.mxu0 0.0
    %2476 = vmatpush1.msra.mxu0 0.0
    %2477 = vmatprep.subr.mxu0 0.0
    %2478 = vmatpush1.msra.mxu0 0.0
    %2479 = vmatprep.subr.mxu0 0.0
    %2480 = vmatpush1.msra.mxu0 0.0
    %2481 = vmatprep.subr.mxu0 0.0
    %2482 = vmatpush1.msra.mxu0 0.0
    %2483 = vmatprep.subr.mxu0 0.0
    %2484 = vmatpush1.msra.mxu0 0.0
    %2485 = vmatprep.subr.mxu0 0.0
    %2486 = vmatpush1.msra.mxu0 0.0
    %2487 = vmatprep.subr.mxu0 0.0
    %2488 = vmatpush1.msra.mxu0 0.0
    %2489 = vmatprep.subr.mxu0 0.0
    %2490 = vmatpush1.msra.mxu0 0.0
    %2491 = vmatprep.subr.mxu0 0.0
    %2492 = vmatpush1.msra.mxu0 0.0
    %2493 = vmatprep.subr.mxu0 0.0
    %2494 = vmatpush1.msra.mxu0 0.0
    %2495 = vmatprep.subr.mxu0 0.0
    %2496 = vmatpush1.msra.mxu0 0.0
    %2497 = vmatprep.mubr.f32.mxu0 0.0
    %2498 = vmatmul.mubr.f32.gmra.mrb[0].mxu0 %v2219
    %v2499 = vpop.f32.mrb[0].mxu0
    %v2500 = vadd.f32 %v2358, %v2499
    %v2501 = vpop.f32.mrb[0].mxu0
    %v2502 = vadd.f32 %v2360, %v2501
    %2503 = vdwg.mxu0
    %v2504 = vadd.f32 %v2429, %v1065
    %v2505 = vadd.f32 %v2431, %v1069
    %v2506 = vadd.f32 %v2500, %v1073
    %v2507 = vadd.f32 %v2502, %v1077
    %v2508 = vmul.f32 %v2504, 0.5
    %v2509 = vmul.f32 %v2505, 0.5
    %v2510 = vmul.f32 %v2506, 0.5
    %v2511 = vtanh.pop %v2508
    %v2512 = vtanh.pop %v2509
    %v2513 = vtanh.pop %v2510
    %v2514 = vmul.f32 %v2511, 0.5
    %v2515 = vmul.f32 %v2512, 0.5
    %v2516 = vmul.f32 %v2513, 0.5
    %v2517 = vadd.f32 %v2514, 0.5
    %v2518 = vadd.f32 %v2515, 0.5
    %v2519 = vadd.f32 %v2516, 0.5
    %v2520 = vtanh.pop %v2507
    %v2521 = vmul.f32 %v2518, %v2049
    %v2522 = vmul.f32 %v2517, %v2520
    %v2523 = vadd.f32 %v2521, %v2522
    %v2524 = vtanh.pop %v2523
    %v2525 = vmul.f32 %v2519, %v2524
    %v2526 = vld [vmem:[#allocation2 + $0x80] sm:$0xff]
    %v2527 = vld [vmem:[#allocation2 + $0x88] sm:$0xff]
    %v2528 = vld [vmem:[#allocation2 + $0x90] sm:$0xff]
    %v2529 = vld [vmem:[#allocation2 + $0x98] sm:$0xff]
    %2530 = vmatprep.subr.mxu0 %v417
    %2531 = vmatpush1.msra.mxu0 %v416
    %2532 = vmatprep.subr.mxu0 %v421
    %2533 = vmatpush1.msra.mxu0 %v420
    %2534 = vmatprep.subr.mxu0 %v425
    %2535 = vmatpush1.msra.mxu0 %v424
    %2536 = vmatprep.subr.mxu0 %v429
    %2537 = vmatpush1.msra.mxu0 %v428
    %2538 = vmatprep.subr.mxu0 %v433
    %2539 = vmatpush1.msra.mxu0 %v432
    %2540 = vmatprep.subr.mxu0 %v437
    %2541 = vmatpush1.msra.mxu0 %v436
    %2542 = vmatprep.subr.mxu0 %v441
    %2543 = vmatpush1.msra.mxu0 %v440
    %2544 = vmatprep.subr.mxu0 %v445
    %2545 = vmatpush1.msra.mxu0 %v444
    %2546 = vmatprep.subr.mxu0 %v449
    %2547 = vmatpush1.msra.mxu0 %v448
    %2548 = vmatprep.subr.mxu0 %v453
    %2549 = vmatpush1.msra.mxu0 %v452
    %2550 = vmatprep.subr.mxu0 %v457
    %2551 = vmatpush1.msra.mxu0 %v456
    %2552 = vmatprep.subr.mxu0 %v461
    %2553 = vmatpush1.msra.mxu0 %v460
    %2554 = vmatprep.subr.mxu0 %v465
    %2555 = vmatpush1.msra.mxu0 %v464
    %2556 = vmatprep.subr.mxu0 %v469
    %2557 = vmatpush1.msra.mxu0 %v468
    %2558 = vmatprep.subr.mxu0 %v473
    %2559 = vmatpush1.msra.mxu0 %v472
    %2560 = vmatprep.subr.mxu0 %v477
    %2561 = vmatpush1.msra.mxu0 %v476
    %2562 = vmatprep.subr.mxu0 0.0
    %2563 = vmatpush1.msra.mxu0 0.0
    %2564 = vmatprep.subr.mxu0 0.0
    %2565 = vmatpush1.msra.mxu0 0.0
    %2566 = vmatprep.subr.mxu0 0.0
    %2567 = vmatpush1.msra.mxu0 0.0
    %2568 = vmatprep.subr.mxu0 0.0
    %2569 = vmatpush1.msra.mxu0 0.0
    %2570 = vmatprep.subr.mxu0 0.0
    %2571 = vmatpush1.msra.mxu0 0.0
    %2572 = vmatprep.subr.mxu0 0.0
    %2573 = vmatpush1.msra.mxu0 0.0
    %2574 = vmatprep.subr.mxu0 0.0
    %2575 = vmatpush1.msra.mxu0 0.0
    %2576 = vmatprep.subr.mxu0 0.0
    %2577 = vmatpush1.msra.mxu0 0.0
    %2578 = vmatprep.subr.mxu0 0.0
    %2579 = vmatpush1.msra.mxu0 0.0
    %2580 = vmatprep.subr.mxu0 0.0
    %2581 = vmatpush1.msra.mxu0 0.0
    %2582 = vmatprep.subr.mxu0 0.0
    %2583 = vmatpush1.msra.mxu0 0.0
    %2584 = vmatprep.subr.mxu0 0.0
    %2585 = vmatpush1.msra.mxu0 0.0
    %2586 = vmatprep.subr.mxu0 0.0
    %2587 = vmatpush1.msra.mxu0 0.0
    %2588 = vmatprep.subr.mxu0 0.0
    %2589 = vmatpush1.msra.mxu0 0.0
    %2590 = vmatprep.subr.mxu0 0.0
    %2591 = vmatpush1.msra.mxu0 0.0
    %2592 = vmatprep.subr.mxu0 0.0
    %2593 = vmatpush1.msra.mxu0 0.0
    %2594 = vmatprep.mubr.f32.mxu0 0.0
    %2595 = vmatmul.mubr.f32.gmra.mrb[0].mxu0 %v2219
    %v2596 = vpop.f32.mrb[0].mxu0
    %v2597 = vadd.f32 0.0, %v2596
    %v2598 = vpop.f32.mrb[0].mxu0
    %v2599 = vadd.f32 0.0, %v2598
    %2600 = vdwg.mxu0
    %2601 = vmatprep.subr.mxu0 %v419
    %2602 = vmatpush1.msra.mxu0 %v418
    %2603 = vmatprep.subr.mxu0 %v423
    %2604 = vmatpush1.msra.mxu0 %v422
    %2605 = vmatprep.subr.mxu0 %v427
    %2606 = vmatpush1.msra.mxu0 %v426
    %2607 = vmatprep.subr.mxu0 %v431
    %2608 = vmatpush1.msra.mxu0 %v430
    %2609 = vmatprep.subr.mxu0 %v435
    %2610 = vmatpush1.msra.mxu0 %v434
    %2611 = vmatprep.subr.mxu0 %v439
    %2612 = vmatpush1.msra.mxu0 %v438
    %2613 = vmatprep.subr.mxu0 %v443
    %2614 = vmatpush1.msra.mxu0 %v442
    %2615 = vmatprep.subr.mxu0 %v447
    %2616 = vmatpush1.msra.mxu0 %v446
    %2617 = vmatprep.subr.mxu0 %v451
    %2618 = vmatpush1.msra.mxu0 %v450
    %2619 = vmatprep.subr.mxu0 %v455
    %2620 = vmatpush1.msra.mxu0 %v454
    %2621 = vmatprep.subr.mxu0 %v459
    %2622 = vmatpush1.msra.mxu0 %v458
    %2623 = vmatprep.subr.mxu0 %v463
    %2624 = vmatpush1.msra.mxu0 %v462
    %2625 = vmatprep.subr.mxu0 %v467
    %2626 = vmatpush1.msra.mxu0 %v466
    %2627 = vmatprep.subr.mxu0 %v471
    %2628 = vmatpush1.msra.mxu0 %v470
    %2629 = vmatprep.subr.mxu0 %v475
    %2630 = vmatpush1.msra.mxu0 %v474
    %2631 = vmatprep.subr.mxu0 %v479
    %2632 = vmatpush1.msra.mxu0 %v478
    %2633 = vmatprep.subr.mxu0 0.0
    %2634 = vmatpush1.msra.mxu0 0.0
    %2635 = vmatprep.subr.mxu0 0.0
    %2636 = vmatpush1.msra.mxu0 0.0
    %2637 = vmatprep.subr.mxu0 0.0
    %2638 = vmatpush1.msra.mxu0 0.0
    %2639 = vmatprep.subr.mxu0 0.0
    %2640 = vmatpush1.msra.mxu0 0.0
    %2641 = vmatprep.subr.mxu0 0.0
    %2642 = vmatpush1.msra.mxu0 0.0
    %2643 = vmatprep.subr.mxu0 0.0
    %2644 = vmatpush1.msra.mxu0 0.0
    %2645 = vmatprep.subr.mxu0 0.0
    %2646 = vmatpush1.msra.mxu0 0.0
    %2647 = vmatprep.subr.mxu0 0.0
    %2648 = vmatpush1.msra.mxu0 0.0
    %2649 = vmatprep.subr.mxu0 0.0
    %2650 = vmatpush1.msra.mxu0 0.0
    %2651 = vmatprep.subr.mxu0 0.0
    %2652 = vmatpush1.msra.mxu0 0.0
    %2653 = vmatprep.subr.mxu0 0.0
    %2654 = vmatpush1.msra.mxu0 0.0
    %2655 = vmatprep.subr.mxu0 0.0
    %2656 = vmatpush1.msra.mxu0 0.0
    %2657 = vmatprep.subr.mxu0 0.0
    %2658 = vmatpush1.msra.mxu0 0.0
    %2659 = vmatprep.subr.mxu0 0.0
    %2660 = vmatpush1.msra.mxu0 0.0
    %2661 = vmatprep.subr.mxu0 0.0
    %2662 = vmatpush1.msra.mxu0 0.0
    %2663 = vmatprep.subr.mxu0 0.0
    %2664 = vmatpush1.msra.mxu0 0.0
    %2665 = vmatprep.mubr.f32.mxu0 0.0
    %2666 = vmatmul.mubr.f32.gmra.mrb[0].mxu0 %v2219
    %v2667 = vpop.f32.mrb[0].mxu0
    %v2668 = vadd.f32 0.0, %v2667
    %v2669 = vpop.f32.mrb[0].mxu0
    %v2670 = vadd.f32 0.0, %v2669
    %2671 = vdwg.mxu0
    %v2672 = vadd.f32 %v2526, %v2597
    %v2673 = vadd.f32 %v2527, %v2599
    %v2674 = vadd.f32 %v2528, %v2668
    %v2675 = vadd.f32 %v2529, %v2670
    %v2676 = vmul.f32 %v2672, 0.5
    %v2677 = vmul.f32 %v2673, 0.5
    %v2678 = vmul.f32 %v2674, 0.5
    %v2679 = vtanh.pop %v2676
    %v2680 = vtanh.pop %v2677
    %v2681 = vtanh.pop %v2678
    %v2682 = vmul.f32 %v2679, 0.5
    %v2683 = vmul.f32 %v2680, 0.5
    %v2684 = vmul.f32 %v2681, 0.5
    %v2685 = vadd.f32 %v2682, 0.5
    %v2686 = vadd.f32 %v2683, 0.5
    %v2687 = vadd.f32 %v2684, 0.5
    %v2688 = vtanh.pop %v2675
    %v2689 = vmul.f32 %v2686, %v2217
    %v2690 = vmul.f32 %v2685, %v2688
    %v2691 = vadd.f32 %v2689, %v2690
    %v2692 = vtanh.pop %v2691
    %v2693 = vmul.f32 %v2687, %v2692
    %2694 = vmatprep.subr.mxu0 %v545
    %2695 = vmatpush1.msra.mxu0 %v544
    %2696 = vmatprep.subr.mxu0 %v549
    %2697 = vmatpush1.msra.mxu0 %v548
    %2698 = vmatprep.subr.mxu0 %v553
    %2699 = vmatpush1.msra.mxu0 %v552
    %2700 = vmatprep.subr.mxu0 %v557
    %2701 = vmatpush1.msra.mxu0 %v556
    %2702 = vmatprep.subr.mxu0 %v561
    %2703 = vmatpush1.msra.mxu0 %v560
    %2704 = vmatprep.subr.mxu0 %v565
    %2705 = vmatpush1.msra.mxu0 %v564
    %2706 = vmatprep.subr.mxu0 %v569
    %2707 = vmatpush1.msra.mxu0 %v568
    %2708 = vmatprep.subr.mxu0 %v573
    %2709 = vmatpush1.msra.mxu0 %v572
    %2710 = vmatprep.subr.mxu0 %v577
    %2711 = vmatpush1.msra.mxu0 %v576
    %2712 = vmatprep.subr.mxu0 %v581
    %2713 = vmatpush1.msra.mxu0 %v580
    %2714 = vmatprep.subr.mxu0 %v585
    %2715 = vmatpush1.msra.mxu0 %v584
    %2716 = vmatprep.subr.mxu0 %v589
    %2717 = vmatpush1.msra.mxu0 %v588
    %2718 = vmatprep.subr.mxu0 %v593
    %2719 = vmatpush1.msra.mxu0 %v592
    %2720 = vmatprep.subr.mxu0 %v597
    %2721 = vmatpush1.msra.mxu0 %v596
    %2722 = vmatprep.subr.mxu0 %v601
    %2723 = vmatpush1.msra.mxu0 %v600
    %2724 = vmatprep.subr.mxu0 %v605
    %2725 = vmatpush1.msra.mxu0 %v604
    %2726 = vmatprep.subr.mxu0 0.0
    %2727 = vmatpush1.msra.mxu0 0.0
    %2728 = vmatprep.subr.mxu0 0.0
    %2729 = vmatpush1.msra.mxu0 0.0
    %2730 = vmatprep.subr.mxu0 0.0
    %2731 = vmatpush1.msra.mxu0 0.0
    %2732 = vmatprep.subr.mxu0 0.0
    %2733 = vmatpush1.msra.mxu0 0.0
    %2734 = vmatprep.subr.mxu0 0.0
    %2735 = vmatpush1.msra.mxu0 0.0
    %2736 = vmatprep.subr.mxu0 0.0
    %2737 = vmatpush1.msra.mxu0 0.0
    %2738 = vmatprep.subr.mxu0 0.0
    %2739 = vmatpush1.msra.mxu0 0.0
    %2740 = vmatprep.subr.mxu0 0.0
    %2741 = vmatpush1.msra.mxu0 0.0
    %2742 = vmatprep.subr.mxu0 0.0
    %2743 = vmatpush1.msra.mxu0 0.0
    %2744 = vmatprep.subr.mxu0 0.0
    %2745 = vmatpush1.msra.mxu0 0.0
    %2746 = vmatprep.subr.mxu0 0.0
    %2747 = vmatpush1.msra.mxu0 0.0
    %2748 = vmatprep.subr.mxu0 0.0
    %2749 = vmatpush1.msra.mxu0 0.0
    %2750 = vmatprep.subr.mxu0 0.0
    %2751 = vmatpush1.msra.mxu0 0.0
    %2752 = vmatprep.subr.mxu0 0.0
    %2753 = vmatpush1.msra.mxu0 0.0
    %2754 = vmatprep.subr.mxu0 0.0
    %2755 = vmatpush1.msra.mxu0 0.0
    %2756 = vmatprep.subr.mxu0 0.0
    %2757 = vmatpush1.msra.mxu0 0.0
    %2758 = vmatprep.mubr.f32.mxu0 0.0
    %2759 = vmatmul.mubr.f32.gmra.mrb[0].mxu0 %v2525
    %v2760 = vpop.f32.mrb[0].mxu0
    %v2761 = vadd.f32 0.0, %v2760
    %v2762 = vpop.f32.mrb[0].mxu0
    %v2763 = vadd.f32 0.0, %v2762
    %2764 = vdwg.mxu0
    %2765 = vmatprep.subr.mxu0 %v547
    %2766 = vmatpush1.msra.mxu0 %v546
    %2767 = vmatprep.subr.mxu0 %v551
    %2768 = vmatpush1.msra.mxu0 %v550
    %2769 = vmatprep.subr.mxu0 %v555
    %2770 = vmatpush1.msra.mxu0 %v554
    %2771 = vmatprep.subr.mxu0 %v559
    %2772 = vmatpush1.msra.mxu0 %v558
    %2773 = vmatprep.subr.mxu0 %v563
    %2774 = vmatpush1.msra.mxu0 %v562
    %2775 = vmatprep.subr.mxu0 %v567
    %2776 = vmatpush1.msra.mxu0 %v566
    %2777 = vmatprep.subr.mxu0 %v571
    %2778 = vmatpush1.msra.mxu0 %v570
    %2779 = vmatprep.subr.mxu0 %v575
    %2780 = vmatpush1.msra.mxu0 %v574
    %2781 = vmatprep.subr.mxu0 %v579
    %2782 = vmatpush1.msra.mxu0 %v578
    %2783 = vmatprep.subr.mxu0 %v583
    %2784 = vmatpush1.msra.mxu0 %v582
    %2785 = vmatprep.subr.mxu0 %v587
    %2786 = vmatpush1.msra.mxu0 %v586
    %2787 = vmatprep.subr.mxu0 %v591
    %2788 = vmatpush1.msra.mxu0 %v590
    %2789 = vmatprep.subr.mxu0 %v595
    %2790 = vmatpush1.msra.mxu0 %v594
    %2791 = vmatprep.subr.mxu0 %v599
    %2792 = vmatpush1.msra.mxu0 %v598
    %2793 = vmatprep.subr.mxu0 %v603
    %2794 = vmatpush1.msra.mxu0 %v602
    %2795 = vmatprep.subr.mxu0 %v607
    %2796 = vmatpush1.msra.mxu0 %v606
    %2797 = vmatprep.subr.mxu0 0.0
    %2798 = vmatpush1.msra.mxu0 0.0
    %2799 = vmatprep.subr.mxu0 0.0
    %2800 = vmatpush1.msra.mxu0 0.0
    %2801 = vmatprep.subr.mxu0 0.0
    %2802 = vmatpush1.msra.mxu0 0.0
    %2803 = vmatprep.subr.mxu0 0.0
    %2804 = vmatpush1.msra.mxu0 0.0
    %2805 = vmatprep.subr.mxu0 0.0
    %2806 = vmatpush1.msra.mxu0 0.0
    %2807 = vmatprep.subr.mxu0 0.0
    %2808 = vmatpush1.msra.mxu0 0.0
    %2809 = vmatprep.subr.mxu0 0.0
    %2810 = vmatpush1.msra.mxu0 0.0
    %2811 = vmatprep.subr.mxu0 0.0
    %2812 = vmatpush1.msra.mxu0 0.0
    %2813 = vmatprep.subr.mxu0 0.0
    %2814 = vmatpush1.msra.mxu0 0.0
    %2815 = vmatprep.subr.mxu0 0.0
    %2816 = vmatpush1.msra.mxu0 0.0
    %2817 = vmatprep.subr.mxu0 0.0
    %2818 = vmatpush1.msra.mxu0 0.0
    %2819 = vmatprep.subr.mxu0 0.0
    %2820 = vmatpush1.msra.mxu0 0.0
    %2821 = vmatprep.subr.mxu0 0.0
    %2822 = vmatpush1.msra.mxu0 0.0
    %2823 = vmatprep.subr.mxu0 0.0
    %2824 = vmatpush1.msra.mxu0 0.0
    %2825 = vmatprep.subr.mxu0 0.0
    %2826 = vmatpush1.msra.mxu0 0.0
    %2827 = vmatprep.subr.mxu0 0.0
    %2828 = vmatpush1.msra.mxu0 0.0
    %2829 = vmatprep.mubr.f32.mxu0 0.0
    %2830 = vmatmul.mubr.f32.gmra.mrb[0].mxu0 %v2525
    %v2831 = vpop.f32.mrb[0].mxu0
    %v2832 = vadd.f32 0.0, %v2831
    %v2833 = vpop.f32.mrb[0].mxu0
    %v2834 = vadd.f32 0.0, %v2833
    %2835 = vdwg.mxu0
    %2836 = vmatprep.subr.mxu0 %v481
    %2837 = vmatpush1.msra.mxu0 %v480
    %2838 = vmatprep.subr.mxu0 %v485
    %2839 = vmatpush1.msra.mxu0 %v484
    %2840 = vmatprep.subr.mxu0 %v489
    %2841 = vmatpush1.msra.mxu0 %v488
    %2842 = vmatprep.subr.mxu0 %v493
    %2843 = vmatpush1.msra.mxu0 %v492
    %2844 = vmatprep.subr.mxu0 %v497
    %2845 = vmatpush1.msra.mxu0 %v496
    %2846 = vmatprep.subr.mxu0 %v501
    %2847 = vmatpush1.msra.mxu0 %v500
    %2848 = vmatprep.subr.mxu0 %v505
    %2849 = vmatpush1.msra.mxu0 %v504
    %2850 = vmatprep.subr.mxu0 %v509
    %2851 = vmatpush1.msra.mxu0 %v508
    %2852 = vmatprep.subr.mxu0 %v513
    %2853 = vmatpush1.msra.mxu0 %v512
    %2854 = vmatprep.subr.mxu0 %v517
    %2855 = vmatpush1.msra.mxu0 %v516
    %2856 = vmatprep.subr.mxu0 %v521
    %2857 = vmatpush1.msra.mxu0 %v520
    %2858 = vmatprep.subr.mxu0 %v525
    %2859 = vmatpush1.msra.mxu0 %v524
    %2860 = vmatprep.subr.mxu0 %v529
    %2861 = vmatpush1.msra.mxu0 %v528
    %2862 = vmatprep.subr.mxu0 %v533
    %2863 = vmatpush1.msra.mxu0 %v532
    %2864 = vmatprep.subr.mxu0 %v537
    %2865 = vmatpush1.msra.mxu0 %v536
    %2866 = vmatprep.subr.mxu0 %v541
    %2867 = vmatpush1.msra.mxu0 %v540
    %2868 = vmatprep.subr.mxu0 0.0
    %2869 = vmatpush1.msra.mxu0 0.0
    %2870 = vmatprep.subr.mxu0 0.0
    %2871 = vmatpush1.msra.mxu0 0.0
    %2872 = vmatprep.subr.mxu0 0.0
    %2873 = vmatpush1.msra.mxu0 0.0
    %2874 = vmatprep.subr.mxu0 0.0
    %2875 = vmatpush1.msra.mxu0 0.0
    %2876 = vmatprep.subr.mxu0 0.0
    %2877 = vmatpush1.msra.mxu0 0.0
    %2878 = vmatprep.subr.mxu0 0.0
    %2879 = vmatpush1.msra.mxu0 0.0
    %2880 = vmatprep.subr.mxu0 0.0
    %2881 = vmatpush1.msra.mxu0 0.0
    %2882 = vmatprep.subr.mxu0 0.0
    %2883 = vmatpush1.msra.mxu0 0.0
    %2884 = vmatprep.subr.mxu0 0.0
    %2885 = vmatpush1.msra.mxu0 0.0
    %2886 = vmatprep.subr.mxu0 0.0
    %2887 = vmatpush1.msra.mxu0 0.0
    %2888 = vmatprep.subr.mxu0 0.0
    %2889 = vmatpush1.msra.mxu0 0.0
    %2890 = vmatprep.subr.mxu0 0.0
    %2891 = vmatpush1.msra.mxu0 0.0
    %2892 = vmatprep.subr.mxu0 0.0
    %2893 = vmatpush1.msra.mxu0 0.0
    %2894 = vmatprep.subr.mxu0 0.0
    %2895 = vmatpush1.msra.mxu0 0.0
    %2896 = vmatprep.subr.mxu0 0.0
    %2897 = vmatpush1.msra.mxu0 0.0
    %2898 = vmatprep.subr.mxu0 0.0
    %2899 = vmatpush1.msra.mxu0 0.0
    %2900 = vmatprep.mubr.f32.mxu0 0.0
    %2901 = vmatmul.mubr.f32.gmra.mrb[0].mxu0 %v2693
    %v2902 = vpop.f32.mrb[0].mxu0
    %v2903 = vadd.f32 %v2761, %v2902
    %v2904 = vpop.f32.mrb[0].mxu0
    %v2905 = vadd.f32 %v2763, %v2904
    %2906 = vdwg.mxu0
    %2907 = vmatprep.subr.mxu0 %v483
    %2908 = vmatpush1.msra.mxu0 %v482
    %2909 = vmatprep.subr.mxu0 %v487
    %2910 = vmatpush1.msra.mxu0 %v486
    %2911 = vmatprep.subr.mxu0 %v491
    %2912 = vmatpush1.msra.mxu0 %v490
    %2913 = vmatprep.subr.mxu0 %v495
    %2914 = vmatpush1.msra.mxu0 %v494
    %2915 = vmatprep.subr.mxu0 %v499
    %2916 = vmatpush1.msra.mxu0 %v498
    %2917 = vmatprep.subr.mxu0 %v503
    %2918 = vmatpush1.msra.mxu0 %v502
    %2919 = vmatprep.subr.mxu0 %v507
    %2920 = vmatpush1.msra.mxu0 %v506
    %2921 = vmatprep.subr.mxu0 %v511
    %2922 = vmatpush1.msra.mxu0 %v510
    %2923 = vmatprep.subr.mxu0 %v515
    %2924 = vmatpush1.msra.mxu0 %v514
    %2925 = vmatprep.subr.mxu0 %v519
    %2926 = vmatpush1.msra.mxu0 %v518
    %2927 = vmatprep.subr.mxu0 %v523
    %2928 = vmatpush1.msra.mxu0 %v522
    %2929 = vmatprep.subr.mxu0 %v527
    %2930 = vmatpush1.msra.mxu0 %v526
    %2931 = vmatprep.subr.mxu0 %v531
    %2932 = vmatpush1.msra.mxu0 %v530
    %2933 = vmatprep.subr.mxu0 %v535
    %2934 = vmatpush1.msra.mxu0 %v534
    %2935 = vmatprep.subr.mxu0 %v539
    %2936 = vmatpush1.msra.mxu0 %v538
    %2937 = vmatprep.subr.mxu0 %v543
    %2938 = vmatpush1.msra.mxu0 %v542
    %2939 = vmatprep.subr.mxu0 0.0
    %2940 = vmatpush1.msra.mxu0 0.0
    %2941 = vmatprep.subr.mxu0 0.0
    %2942 = vmatpush1.msra.mxu0 0.0
    %2943 = vmatprep.subr.mxu0 0.0
    %2944 = vmatpush1.msra.mxu0 0.0
    %2945 = vmatprep.subr.mxu0 0.0
    %2946 = vmatpush1.msra.mxu0 0.0
    %2947 = vmatprep.subr.mxu0 0.0
    %2948 = vmatpush1.msra.mxu0 0.0
    %2949 = vmatprep.subr.mxu0 0.0
    %2950 = vmatpush1.msra.mxu0 0.0
    %2951 = vmatprep.subr.mxu0 0.0
    %2952 = vmatpush1.msra.mxu0 0.0
    %2953 = vmatprep.subr.mxu0 0.0
    %2954 = vmatpush1.msra.mxu0 0.0
    %2955 = vmatprep.subr.mxu0 0.0
    %2956 = vmatpush1.msra.mxu0 0.0
    %2957 = vmatprep.subr.mxu0 0.0
    %2958 = vmatpush1.msra.mxu0 0.0
    %2959 = vmatprep.subr.mxu0 0.0
    %2960 = vmatpush1.msra.mxu0 0.0
    %2961 = vmatprep.subr.mxu0 0.0
    %2962 = vmatpush1.msra.mxu0 0.0
    %2963 = vmatprep.subr.mxu0 0.0
    %2964 = vmatpush1.msra.mxu0 0.0
    %2965 = vmatprep.subr.mxu0 0.0
    %2966 = vmatpush1.msra.mxu0 0.0
    %2967 = vmatprep.subr.mxu0 0.0
    %2968 = vmatpush1.msra.mxu0 0.0
    %2969 = vmatprep.subr.mxu0 0.0
    %2970 = vmatpush1.msra.mxu0 0.0
    %2971 = vmatprep.mubr.f32.mxu0 0.0
    %2972 = vmatmul.mubr.f32.gmra.mrb[0].mxu0 %v2693
    %v2973 = vpop.f32.mrb[0].mxu0
    %v2974 = vadd.f32 %v2832, %v2973
    %v2975 = vpop.f32.mrb[0].mxu0
    %v2976 = vadd.f32 %v2834, %v2975
    %2977 = vdwg.mxu0
    %v2978 = vadd.f32 %v2903, %v1065
    %v2979 = vadd.f32 %v2905, %v1069
    %v2980 = vadd.f32 %v2974, %v1073
    %v2981 = vadd.f32 %v2976, %v1077
    %v2982 = vmul.f32 %v2978, 0.5
    %v2983 = vmul.f32 %v2979, 0.5
    %v2984 = vmul.f32 %v2980, 0.5
    %v2985 = vtanh.pop %v2982
    %v2986 = vtanh.pop %v2983
    %v2987 = vtanh.pop %v2984
    %v2988 = vmul.f32 %v2985, 0.5
    %v2989 = vmul.f32 %v2986, 0.5
    %v2990 = vmul.f32 %v2987, 0.5
    %v2991 = vadd.f32 %v2988, 0.5
    %v2992 = vadd.f32 %v2989, 0.5
    %v2993 = vadd.f32 %v2990, 0.5
    %v2994 = vtanh.pop %v2981
    %v2995 = vmul.f32 %v2992, %v2523
    %v2996 = vmul.f32 %v2991, %v2994
    %v2997 = vadd.f32 %v2995, %v2996
    %v2998 = vtanh.pop %v2997
    %v2999 = vmul.f32 %v2993, %v2998
    %v3000 = vld [vmem:[#allocation2 + $0xa0] sm:$0xff]
    %v3001 = vld [vmem:[#allocation2 + $0xa8] sm:$0xff]
    %v3002 = vld [vmem:[#allocation2 + $0xb0] sm:$0xff]
    %v3003 = vld [vmem:[#allocation2 + $0xb8] sm:$0xff]
    %3004 = vmatprep.subr.mxu0 %v417
    %3005 = vmatpush1.msra.mxu0 %v416
    %3006 = vmatprep.subr.mxu0 %v421
    %3007 = vmatpush1.msra.mxu0 %v420
    %3008 = vmatprep.subr.mxu0 %v425
    %3009 = vmatpush1.msra.mxu0 %v424
    %3010 = vmatprep.subr.mxu0 %v429
    %3011 = vmatpush1.msra.mxu0 %v428
    %3012 = vmatprep.subr.mxu0 %v433
    %3013 = vmatpush1.msra.mxu0 %v432
    %3014 = vmatprep.subr.mxu0 %v437
    %3015 = vmatpush1.msra.mxu0 %v436
    %3016 = vmatprep.subr.mxu0 %v441
    %3017 = vmatpush1.msra.mxu0 %v440
    %3018 = vmatprep.subr.mxu0 %v445
    %3019 = vmatpush1.msra.mxu0 %v444
    %3020 = vmatprep.subr.mxu0 %v449
    %3021 = vmatpush1.msra.mxu0 %v448
    %3022 = vmatprep.subr.mxu0 %v453
    %3023 = vmatpush1.msra.mxu0 %v452
    %3024 = vmatprep.subr.mxu0 %v457
    %3025 = vmatpush1.msra.mxu0 %v456
    %3026 = vmatprep.subr.mxu0 %v461
    %3027 = vmatpush1.msra.mxu0 %v460
    %3028 = vmatprep.subr.mxu0 %v465
    %3029 = vmatpush1.msra.mxu0 %v464
    %3030 = vmatprep.subr.mxu0 %v469
    %3031 = vmatpush1.msra.mxu0 %v468
    %3032 = vmatprep.subr.mxu0 %v473
    %3033 = vmatpush1.msra.mxu0 %v472
    %3034 = vmatprep.subr.mxu0 %v477
    %3035 = vmatpush1.msra.mxu0 %v476
    %3036 = vmatprep.subr.mxu0 0.0
    %3037 = vmatpush1.msra.mxu0 0.0
    %3038 = vmatprep.subr.mxu0 0.0
    %3039 = vmatpush1.msra.mxu0 0.0
    %3040 = vmatprep.subr.mxu0 0.0
    %3041 = vmatpush1.msra.mxu0 0.0
    %3042 = vmatprep.subr.mxu0 0.0
    %3043 = vmatpush1.msra.mxu0 0.0
    %3044 = vmatprep.subr.mxu0 0.0
    %3045 = vmatpush1.msra.mxu0 0.0
    %3046 = vmatprep.subr.mxu0 0.0
    %3047 = vmatpush1.msra.mxu0 0.0
    %3048 = vmatprep.subr.mxu0 0.0
    %3049 = vmatpush1.msra.mxu0 0.0
    %3050 = vmatprep.subr.mxu0 0.0
    %3051 = vmatpush1.msra.mxu0 0.0
    %3052 = vmatprep.subr.mxu0 0.0
    %3053 = vmatpush1.msra.mxu0 0.0
    %3054 = vmatprep.subr.mxu0 0.0
    %3055 = vmatpush1.msra.mxu0 0.0
    %3056 = vmatprep.subr.mxu0 0.0
    %3057 = vmatpush1.msra.mxu0 0.0
    %3058 = vmatprep.subr.mxu0 0.0
    %3059 = vmatpush1.msra.mxu0 0.0
    %3060 = vmatprep.subr.mxu0 0.0
    %3061 = vmatpush1.msra.mxu0 0.0
    %3062 = vmatprep.subr.mxu0 0.0
    %3063 = vmatpush1.msra.mxu0 0.0
    %3064 = vmatprep.subr.mxu0 0.0
    %3065 = vmatpush1.msra.mxu0 0.0
    %3066 = vmatprep.subr.mxu0 0.0
    %3067 = vmatpush1.msra.mxu0 0.0
    %3068 = vmatprep.mubr.f32.mxu0 0.0
    %3069 = vmatmul.mubr.f32.gmra.mrb[0].mxu0 %v2693
    %v3070 = vpop.f32.mrb[0].mxu0
    %v3071 = vadd.f32 0.0, %v3070
    %v3072 = vpop.f32.mrb[0].mxu0
    %v3073 = vadd.f32 0.0, %v3072
    %3074 = vdwg.mxu0
    %3075 = vmatprep.subr.mxu0 %v419
    %3076 = vmatpush1.msra.mxu0 %v418
    %3077 = vmatprep.subr.mxu0 %v423
    %3078 = vmatpush1.msra.mxu0 %v422
    %3079 = vmatprep.subr.mxu0 %v427
    %3080 = vmatpush1.msra.mxu0 %v426
    %3081 = vmatprep.subr.mxu0 %v431
    %3082 = vmatpush1.msra.mxu0 %v430
    %3083 = vmatprep.subr.mxu0 %v435
    %3084 = vmatpush1.msra.mxu0 %v434
    %3085 = vmatprep.subr.mxu0 %v439
    %3086 = vmatpush1.msra.mxu0 %v438
    %3087 = vmatprep.subr.mxu0 %v443
    %3088 = vmatpush1.msra.mxu0 %v442
    %3089 = vmatprep.subr.mxu0 %v447
    %3090 = vmatpush1.msra.mxu0 %v446
    %3091 = vmatprep.subr.mxu0 %v451
    %3092 = vmatpush1.msra.mxu0 %v450
    %3093 = vmatprep.subr.mxu0 %v455
    %3094 = vmatpush1.msra.mxu0 %v454
    %3095 = vmatprep.subr.mxu0 %v459
    %3096 = vmatpush1.msra.mxu0 %v458
    %3097 = vmatprep.subr.mxu0 %v463
    %3098 = vmatpush1.msra.mxu0 %v462
    %3099 = vmatprep.subr.mxu0 %v467
    %3100 = vmatpush1.msra.mxu0 %v466
    %3101 = vmatprep.subr.mxu0 %v471
    %3102 = vmatpush1.msra.mxu0 %v470
    %3103 = vmatprep.subr.mxu0 %v475
    %3104 = vmatpush1.msra.mxu0 %v474
    %3105 = vmatprep.subr.mxu0 %v479
    %3106 = vmatpush1.msra.mxu0 %v478
    %3107 = vmatprep.subr.mxu0 0.0
    %3108 = vmatpush1.msra.mxu0 0.0
    %3109 = vmatprep.subr.mxu0 0.0
    %3110 = vmatpush1.msra.mxu0 0.0
    %3111 = vmatprep.subr.mxu0 0.0
    %3112 = vmatpush1.msra.mxu0 0.0
    %3113 = vmatprep.subr.mxu0 0.0
    %3114 = vmatpush1.msra.mxu0 0.0
    %3115 = vmatprep.subr.mxu0 0.0
    %3116 = vmatpush1.msra.mxu0 0.0
    %3117 = vmatprep.subr.mxu0 0.0
    %3118 = vmatpush1.msra.mxu0 0.0
    %3119 = vmatprep.subr.mxu0 0.0
    %3120 = vmatpush1.msra.mxu0 0.0
    %3121 = vmatprep.subr.mxu0 0.0
    %3122 = vmatpush1.msra.mxu0 0.0
    %3123 = vmatprep.subr.mxu0 0.0
    %3124 = vmatpush1.msra.mxu0 0.0
    %3125 = vmatprep.subr.mxu0 0.0
    %3126 = vmatpush1.msra.mxu0 0.0
    %3127 = vmatprep.subr.mxu0 0.0
    %3128 = vmatpush1.msra.mxu0 0.0
    %3129 = vmatprep.subr.mxu0 0.0
    %3130 = vmatpush1.msra.mxu0 0.0
    %3131 = vmatprep.subr.mxu0 0.0
    %3132 = vmatpush1.msra.mxu0 0.0
    %3133 = vmatprep.subr.mxu0 0.0
    %3134 = vmatpush1.msra.mxu0 0.0
    %3135 = vmatprep.subr.mxu0 0.0
    %3136 = vmatpush1.msra.mxu0 0.0
    %3137 = vmatprep.subr.mxu0 0.0
    %3138 = vmatpush1.msra.mxu0 0.0
    %3139 = vmatprep.mubr.f32.mxu0 0.0
    %3140 = vmatmul.mubr.f32.gmra.mrb[0].mxu0 %v2693
    %v3141 = vpop.f32.mrb[0].mxu0
    %v3142 = vadd.f32 0.0, %v3141
    %v3143 = vpop.f32.mrb[0].mxu0
    %v3144 = vadd.f32 0.0, %v3143
    %3145 = vdwg.mxu0
    %v3146 = vadd.f32 %v3000, %v3071
    %v3147 = vadd.f32 %v3001, %v3073
    %v3148 = vadd.f32 %v3002, %v3142
    %v3149 = vadd.f32 %v3003, %v3144
    %v3150 = vmul.f32 %v3146, 0.5
    %v3151 = vmul.f32 %v3147, 0.5
    %v3152 = vmul.f32 %v3148, 0.5
    %v3153 = vtanh.pop %v3150
    %v3154 = vtanh.pop %v3151
    %v3155 = vtanh.pop %v3152
    %v3156 = vmul.f32 %v3153, 0.5
    %v3157 = vmul.f32 %v3154, 0.5
    %v3158 = vmul.f32 %v3155, 0.5
    %v3159 = vadd.f32 %v3156, 0.5
    %v3160 = vadd.f32 %v3157, 0.5
    %v3161 = vadd.f32 %v3158, 0.5
    %v3162 = vtanh.pop %v3149
    %v3163 = vmul.f32 %v3160, %v2691
    %v3164 = vmul.f32 %v3159, %v3162
    %v3165 = vadd.f32 %v3163, %v3164
    %v3166 = vtanh.pop %v3165
    %v3167 = vmul.f32 %v3161, %v3166
    %3168 = vmatprep.subr.mxu0 %v545
    %3169 = vmatpush1.msra.mxu0 %v544
    %3170 = vmatprep.subr.mxu0 %v549
    %3171 = vmatpush1.msra.mxu0 %v548
    %3172 = vmatprep.subr.mxu0 %v553
    %3173 = vmatpush1.msra.mxu0 %v552
    %3174 = vmatprep.subr.mxu0 %v557
    %3175 = vmatpush1.msra.mxu0 %v556
    %3176 = vmatprep.subr.mxu0 %v561
    %3177 = vmatpush1.msra.mxu0 %v560
    %3178 = vmatprep.subr.mxu0 %v565
    %3179 = vmatpush1.msra.mxu0 %v564
    %3180 = vmatprep.subr.mxu0 %v569
    %3181 = vmatpush1.msra.mxu0 %v568
    %3182 = vmatprep.subr.mxu0 %v573
    %3183 = vmatpush1.msra.mxu0 %v572
    %3184 = vmatprep.subr.mxu0 %v577
    %3185 = vmatpush1.msra.mxu0 %v576
    %3186 = vmatprep.subr.mxu0 %v581
    %3187 = vmatpush1.msra.mxu0 %v580
    %3188 = vmatprep.subr.mxu0 %v585
    %3189 = vmatpush1.msra.mxu0 %v584
    %3190 = vmatprep.subr.mxu0 %v589
    %3191 = vmatpush1.msra.mxu0 %v588
    %3192 = vmatprep.subr.mxu0 %v593
    %3193 = vmatpush1.msra.mxu0 %v592
    %3194 = vmatprep.subr.mxu0 %v597
    %3195 = vmatpush1.msra.mxu0 %v596
    %3196 = vmatprep.subr.mxu0 %v601
    %3197 = vmatpush1.msra.mxu0 %v600
    %3198 = vmatprep.subr.mxu0 %v605
    %3199 = vmatpush1.msra.mxu0 %v604
    %3200 = vmatprep.subr.mxu0 0.0
    %3201 = vmatpush1.msra.mxu0 0.0
    %3202 = vmatprep.subr.mxu0 0.0
    %3203 = vmatpush1.msra.mxu0 0.0
    %3204 = vmatprep.subr.mxu0 0.0
    %3205 = vmatpush1.msra.mxu0 0.0
    %3206 = vmatprep.subr.mxu0 0.0
    %3207 = vmatpush1.msra.mxu0 0.0
    %3208 = vmatprep.subr.mxu0 0.0
    %3209 = vmatpush1.msra.mxu0 0.0
    %3210 = vmatprep.subr.mxu0 0.0
    %3211 = vmatpush1.msra.mxu0 0.0
    %3212 = vmatprep.subr.mxu0 0.0
    %3213 = vmatpush1.msra.mxu0 0.0
    %3214 = vmatprep.subr.mxu0 0.0
    %3215 = vmatpush1.msra.mxu0 0.0
    %3216 = vmatprep.subr.mxu0 0.0
    %3217 = vmatpush1.msra.mxu0 0.0
    %3218 = vmatprep.subr.mxu0 0.0
    %3219 = vmatpush1.msra.mxu0 0.0
    %3220 = vmatprep.subr.mxu0 0.0
    %3221 = vmatpush1.msra.mxu0 0.0
    %3222 = vmatprep.subr.mxu0 0.0
    %3223 = vmatpush1.msra.mxu0 0.0
    %3224 = vmatprep.subr.mxu0 0.0
    %3225 = vmatpush1.msra.mxu0 0.0
    %3226 = vmatprep.subr.mxu0 0.0
    %3227 = vmatpush1.msra.mxu0 0.0
    %3228 = vmatprep.subr.mxu0 0.0
    %3229 = vmatpush1.msra.mxu0 0.0
    %3230 = vmatprep.subr.mxu0 0.0
    %3231 = vmatpush1.msra.mxu0 0.0
    %3232 = vmatprep.mubr.f32.mxu0 0.0
    %3233 = vmatmul.mubr.f32.gmra.mrb[0].mxu0 %v2999
    %v3234 = vpop.f32.mrb[0].mxu0
    %v3235 = vadd.f32 0.0, %v3234
    %v3236 = vpop.f32.mrb[0].mxu0
    %v3237 = vadd.f32 0.0, %v3236
    %3238 = vdwg.mxu0
    %3239 = vmatprep.subr.mxu0 %v547
    %3240 = vmatpush1.msra.mxu0 %v546
    %3241 = vmatprep.subr.mxu0 %v551
    %3242 = vmatpush1.msra.mxu0 %v550
    %3243 = vmatprep.subr.mxu0 %v555
    %3244 = vmatpush1.msra.mxu0 %v554
    %3245 = vmatprep.subr.mxu0 %v559
    %3246 = vmatpush1.msra.mxu0 %v558
    %3247 = vmatprep.subr.mxu0 %v563
    %3248 = vmatpush1.msra.mxu0 %v562
    %3249 = vmatprep.subr.mxu0 %v567
    %3250 = vmatpush1.msra.mxu0 %v566
    %3251 = vmatprep.subr.mxu0 %v571
    %3252 = vmatpush1.msra.mxu0 %v570
    %3253 = vmatprep.subr.mxu0 %v575
    %3254 = vmatpush1.msra.mxu0 %v574
    %3255 = vmatprep.subr.mxu0 %v579
    %3256 = vmatpush1.msra.mxu0 %v578
    %3257 = vmatprep.subr.mxu0 %v583
    %3258 = vmatpush1.msra.mxu0 %v582
    %3259 = vmatprep.subr.mxu0 %v587
    %3260 = vmatpush1.msra.mxu0 %v586
    %3261 = vmatprep.subr.mxu0 %v591
    %3262 = vmatpush1.msra.mxu0 %v590
    %3263 = vmatprep.subr.mxu0 %v595
    %3264 = vmatpush1.msra.mxu0 %v594
    %3265 = vmatprep.subr.mxu0 %v599
    %3266 = vmatpush1.msra.mxu0 %v598
    %3267 = vmatprep.subr.mxu0 %v603
    %3268 = vmatpush1.msra.mxu0 %v602
    %3269 = vmatprep.subr.mxu0 %v607
    %3270 = vmatpush1.msra.mxu0 %v606
    %3271 = vmatprep.subr.mxu0 0.0
    %3272 = vmatpush1.msra.mxu0 0.0
    %3273 = vmatprep.subr.mxu0 0.0
    %3274 = vmatpush1.msra.mxu0 0.0
    %3275 = vmatprep.subr.mxu0 0.0
    %3276 = vmatpush1.msra.mxu0 0.0
    %3277 = vmatprep.subr.mxu0 0.0
    %3278 = vmatpush1.msra.mxu0 0.0
    %3279 = vmatprep.subr.mxu0 0.0
    %3280 = vmatpush1.msra.mxu0 0.0
    %3281 = vmatprep.subr.mxu0 0.0
    %3282 = vmatpush1.msra.mxu0 0.0
    %3283 = vmatprep.subr.mxu0 0.0
    %3284 = vmatpush1.msra.mxu0 0.0
    %3285 = vmatprep.subr.mxu0 0.0
    %3286 = vmatpush1.msra.mxu0 0.0
    %3287 = vmatprep.subr.mxu0 0.0
    %3288 = vmatpush1.msra.mxu0 0.0
    %3289 = vmatprep.subr.mxu0 0.0
    %3290 = vmatpush1.msra.mxu0 0.0
    %3291 = vmatprep.subr.mxu0 0.0
    %3292 = vmatpush1.msra.mxu0 0.0
    %3293 = vmatprep.subr.mxu0 0.0
    %3294 = vmatpush1.msra.mxu0 0.0
    %3295 = vmatprep.subr.mxu0 0.0
    %3296 = vmatpush1.msra.mxu0 0.0
    %3297 = vmatprep.subr.mxu0 0.0
    %3298 = vmatpush1.msra.mxu0 0.0
    %3299 = vmatprep.subr.mxu0 0.0
    %3300 = vmatpush1.msra.mxu0 0.0
    %3301 = vmatprep.subr.mxu0 0.0
    %3302 = vmatpush1.msra.mxu0 0.0
    %3303 = vmatprep.mubr.f32.mxu0 0.0
    %3304 = vmatmul.mubr.f32.gmra.mrb[0].mxu0 %v2999
    %v3305 = vpop.f32.mrb[0].mxu0
    %v3306 = vadd.f32 0.0, %v3305
    %v3307 = vpop.f32.mrb[0].mxu0
    %v3308 = vadd.f32 0.0, %v3307
    %3309 = vdwg.mxu0
    %3310 = vmatprep.subr.mxu0 %v481
    %3311 = vmatpush1.msra.mxu0 %v480
    %3312 = vmatprep.subr.mxu0 %v485
    %3313 = vmatpush1.msra.mxu0 %v484
    %3314 = vmatprep.subr.mxu0 %v489
    %3315 = vmatpush1.msra.mxu0 %v488
    %3316 = vmatprep.subr.mxu0 %v493
    %3317 = vmatpush1.msra.mxu0 %v492
    %3318 = vmatprep.subr.mxu0 %v497
    %3319 = vmatpush1.msra.mxu0 %v496
    %3320 = vmatprep.subr.mxu0 %v501
    %3321 = vmatpush1.msra.mxu0 %v500
    %3322 = vmatprep.subr.mxu0 %v505
    %3323 = vmatpush1.msra.mxu0 %v504
    %3324 = vmatprep.subr.mxu0 %v509
    %3325 = vmatpush1.msra.mxu0 %v508
    %3326 = vmatprep.subr.mxu0 %v513
    %3327 = vmatpush1.msra.mxu0 %v512
    %3328 = vmatprep.subr.mxu0 %v517
    %3329 = vmatpush1.msra.mxu0 %v516
    %3330 = vmatprep.subr.mxu0 %v521
    %3331 = vmatpush1.msra.mxu0 %v520
    %3332 = vmatprep.subr.mxu0 %v525
    %3333 = vmatpush1.msra.mxu0 %v524
    %3334 = vmatprep.subr.mxu0 %v529
    %3335 = vmatpush1.msra.mxu0 %v528
    %3336 = vmatprep.subr.mxu0 %v533
    %3337 = vmatpush1.msra.mxu0 %v532
    %3338 = vmatprep.subr.mxu0 %v537
    %3339 = vmatpush1.msra.mxu0 %v536
    %3340 = vmatprep.subr.mxu0 %v541
    %3341 = vmatpush1.msra.mxu0 %v540
    %3342 = vmatprep.subr.mxu0 0.0
    %3343 = vmatpush1.msra.mxu0 0.0
    %3344 = vmatprep.subr.mxu0 0.0
    %3345 = vmatpush1.msra.mxu0 0.0
    %3346 = vmatprep.subr.mxu0 0.0
    %3347 = vmatpush1.msra.mxu0 0.0
    %3348 = vmatprep.subr.mxu0 0.0
    %3349 = vmatpush1.msra.mxu0 0.0
    %3350 = vmatprep.subr.mxu0 0.0
    %3351 = vmatpush1.msra.mxu0 0.0
    %3352 = vmatprep.subr.mxu0 0.0
    %3353 = vmatpush1.msra.mxu0 0.0
    %3354 = vmatprep.subr.mxu0 0.0
    %3355 = vmatpush1.msra.mxu0 0.0
    %3356 = vmatprep.subr.mxu0 0.0
    %3357 = vmatpush1.msra.mxu0 0.0
    %3358 = vmatprep.subr.mxu0 0.0
    %3359 = vmatpush1.msra.mxu0 0.0
    %3360 = vmatprep.subr.mxu0 0.0
    %3361 = vmatpush1.msra.mxu0 0.0
    %3362 = vmatprep.subr.mxu0 0.0
    %3363 = vmatpush1.msra.mxu0 0.0
    %3364 = vmatprep.subr.mxu0 0.0
    %3365 = vmatpush1.msra.mxu0 0.0
    %3366 = vmatprep.subr.mxu0 0.0
    %3367 = vmatpush1.msra.mxu0 0.0
    %3368 = vmatprep.subr.mxu0 0.0
    %3369 = vmatpush1.msra.mxu0 0.0
    %3370 = vmatprep.subr.mxu0 0.0
    %3371 = vmatpush1.msra.mxu0 0.0
    %3372 = vmatprep.subr.mxu0 0.0
    %3373 = vmatpush1.msra.mxu0 0.0
    %3374 = vmatprep.mubr.f32.mxu0 0.0
    %3375 = vmatmul.mubr.f32.gmra.mrb[0].mxu0 %v3167
    %v3376 = vpop.f32.mrb[0].mxu0
    %v3377 = vadd.f32 %v3235, %v3376
    %v3378 = vpop.f32.mrb[0].mxu0
    %v3379 = vadd.f32 %v3237, %v3378
    %3380 = vdwg.mxu0
    %3381 = vmatprep.subr.mxu0 %v483
    %3382 = vmatpush1.msra.mxu0 %v482
    %3383 = vmatprep.subr.mxu0 %v487
    %3384 = vmatpush1.msra.mxu0 %v486
    %3385 = vmatprep.subr.mxu0 %v491
    %3386 = vmatpush1.msra.mxu0 %v490
    %3387 = vmatprep.subr.mxu0 %v495
    %3388 = vmatpush1.msra.mxu0 %v494
    %3389 = vmatprep.subr.mxu0 %v499
    %3390 = vmatpush1.msra.mxu0 %v498
    %3391 = vmatprep.subr.mxu0 %v503
    %3392 = vmatpush1.msra.mxu0 %v502
    %3393 = vmatprep.subr.mxu0 %v507
    %3394 = vmatpush1.msra.mxu0 %v506
    %3395 = vmatprep.subr.mxu0 %v511
    %3396 = vmatpush1.msra.mxu0 %v510
    %3397 = vmatprep.subr.mxu0 %v515
    %3398 = vmatpush1.msra.mxu0 %v514
    %3399 = vmatprep.subr.mxu0 %v519
    %3400 = vmatpush1.msra.mxu0 %v518
    %3401 = vmatprep.subr.mxu0 %v523
    %3402 = vmatpush1.msra.mxu0 %v522
    %3403 = vmatprep.subr.mxu0 %v527
    %3404 = vmatpush1.msra.mxu0 %v526
    %3405 = vmatprep.subr.mxu0 %v531
    %3406 = vmatpush1.msra.mxu0 %v530
    %3407 = vmatprep.subr.mxu0 %v535
    %3408 = vmatpush1.msra.mxu0 %v534
    %3409 = vmatprep.subr.mxu0 %v539
    %3410 = vmatpush1.msra.mxu0 %v538
    %3411 = vmatprep.subr.mxu0 %v543
    %3412 = vmatpush1.msra.mxu0 %v542
    %3413 = vmatprep.subr.mxu0 0.0
    %3414 = vmatpush1.msra.mxu0 0.0
    %3415 = vmatprep.subr.mxu0 0.0
    %3416 = vmatpush1.msra.mxu0 0.0
    %3417 = vmatprep.subr.mxu0 0.0
    %3418 = vmatpush1.msra.mxu0 0.0
    %3419 = vmatprep.subr.mxu0 0.0
    %3420 = vmatpush1.msra.mxu0 0.0
    %3421 = vmatprep.subr.mxu0 0.0
    %3422 = vmatpush1.msra.mxu0 0.0
    %3423 = vmatprep.subr.mxu0 0.0
    %3424 = vmatpush1.msra.mxu0 0.0
    %3425 = vmatprep.subr.mxu0 0.0
    %3426 = vmatpush1.msra.mxu0 0.0
    %3427 = vmatprep.subr.mxu0 0.0
    %3428 = vmatpush1.msra.mxu0 0.0
    %3429 = vmatprep.subr.mxu0 0.0
    %3430 = vmatpush1.msra.mxu0 0.0
    %3431 = vmatprep.subr.mxu0 0.0
    %3432 = vmatpush1.msra.mxu0 0.0
    %3433 = vmatprep.subr.mxu0 0.0
    %3434 = vmatpush1.msra.mxu0 0.0
    %3435 = vmatprep.subr.mxu0 0.0
    %3436 = vmatpush1.msra.mxu0 0.0
    %3437 = vmatprep.subr.mxu0 0.0
    %3438 = vmatpush1.msra.mxu0 0.0
    %3439 = vmatprep.subr.mxu0 0.0
    %3440 = vmatpush1.msra.mxu0 0.0
    %3441 = vmatprep.subr.mxu0 0.0
    %3442 = vmatpush1.msra.mxu0 0.0
    %3443 = vmatprep.subr.mxu0 0.0
    %3444 = vmatpush1.msra.mxu0 0.0
    %3445 = vmatprep.mubr.f32.mxu0 0.0
    %3446 = vmatmul.mubr.f32.gmra.mrb[0].mxu0 %v3167
    %v3447 = vpop.f32.mrb[0].mxu0
    %v3448 = vadd.f32 %v3306, %v3447
    %v3449 = vpop.f32.mrb[0].mxu0
    %v3450 = vadd.f32 %v3308, %v3449
    %3451 = vdwg.mxu0
    %v3452 = vadd.f32 %v3377, %v1065
    %v3453 = vadd.f32 %v3379, %v1069
    %v3454 = vadd.f32 %v3448, %v1073
    %v3455 = vadd.f32 %v3450, %v1077
    %v3456 = vmul.f32 %v3452, 0.5
    %v3457 = vmul.f32 %v3453, 0.5
    %v3458 = vmul.f32 %v3454, 0.5
    %v3459 = vtanh.pop %v3456
    %v3460 = vtanh.pop %v3457
    %v3461 = vtanh.pop %v3458
    %v3462 = vmul.f32 %v3459, 0.5
    %v3463 = vmul.f32 %v3460, 0.5
    %v3464 = vmul.f32 %v3461, 0.5
    %v3465 = vadd.f32 %v3462, 0.5
    %v3466 = vadd.f32 %v3463, 0.5
    %v3467 = vadd.f32 %v3464, 0.5
    %v3468 = vtanh.pop %v3455
    %v3469 = vmul.f32 %v3466, %v2997
    %v3470 = vmul.f32 %v3465, %v3468
    %v3471 = vadd.f32 %v3469, %v3470
    %v3472 = vtanh.pop %v3471
    %v3473 = vmul.f32 %v3467, %v3472
    %v3474 = vld [vmem:[#allocation2 + $0xc0] sm:$0xff]
    %v3475 = vld [vmem:[#allocation2 + $0xc8] sm:$0xff]
    %v3476 = vld [vmem:[#allocation2 + $0xd0] sm:$0xff]
    %v3477 = vld [vmem:[#allocation2 + $0xd8] sm:$0xff]
    %3478 = vmatprep.subr.mxu0 %v417
    %3479 = vmatpush1.msra.mxu0 %v416
    %3480 = vmatprep.subr.mxu0 %v421
    %3481 = vmatpush1.msra.mxu0 %v420
    %3482 = vmatprep.subr.mxu0 %v425
    %3483 = vmatpush1.msra.mxu0 %v424
    %3484 = vmatprep.subr.mxu0 %v429
    %3485 = vmatpush1.msra.mxu0 %v428
    %3486 = vmatprep.subr.mxu0 %v433
    %3487 = vmatpush1.msra.mxu0 %v432
    %3488 = vmatprep.subr.mxu0 %v437
    %3489 = vmatpush1.msra.mxu0 %v436
    %3490 = vmatprep.subr.mxu0 %v441
    %3491 = vmatpush1.msra.mxu0 %v440
    %3492 = vmatprep.subr.mxu0 %v445
    %3493 = vmatpush1.msra.mxu0 %v444
    %3494 = vmatprep.subr.mxu0 %v449
    %3495 = vmatpush1.msra.mxu0 %v448
    %3496 = vmatprep.subr.mxu0 %v453
    %3497 = vmatpush1.msra.mxu0 %v452
    %3498 = vmatprep.subr.mxu0 %v457
    %3499 = vmatpush1.msra.mxu0 %v456
    %3500 = vmatprep.subr.mxu0 %v461
    %3501 = vmatpush1.msra.mxu0 %v460
    %3502 = vmatprep.subr.mxu0 %v465
    %3503 = vmatpush1.msra.mxu0 %v464
    %3504 = vmatprep.subr.mxu0 %v469
    %3505 = vmatpush1.msra.mxu0 %v468
    %3506 = vmatprep.subr.mxu0 %v473
    %3507 = vmatpush1.msra.mxu0 %v472
    %3508 = vmatprep.subr.mxu0 %v477
    %3509 = vmatpush1.msra.mxu0 %v476
    %3510 = vmatprep.subr.mxu0 0.0
    %3511 = vmatpush1.msra.mxu0 0.0
    %3512 = vmatprep.subr.mxu0 0.0
    %3513 = vmatpush1.msra.mxu0 0.0
    %3514 = vmatprep.subr.mxu0 0.0
    %3515 = vmatpush1.msra.mxu0 0.0
    %3516 = vmatprep.subr.mxu0 0.0
    %3517 = vmatpush1.msra.mxu0 0.0
    %3518 = vmatprep.subr.mxu0 0.0
    %3519 = vmatpush1.msra.mxu0 0.0
    %3520 = vmatprep.subr.mxu0 0.0
    %3521 = vmatpush1.msra.mxu0 0.0
    %3522 = vmatprep.subr.mxu0 0.0
    %3523 = vmatpush1.msra.mxu0 0.0
    %3524 = vmatprep.subr.mxu0 0.0
    %3525 = vmatpush1.msra.mxu0 0.0
    %3526 = vmatprep.subr.mxu0 0.0
    %3527 = vmatpush1.msra.mxu0 0.0
    %3528 = vmatprep.subr.mxu0 0.0
    %3529 = vmatpush1.msra.mxu0 0.0
    %3530 = vmatprep.subr.mxu0 0.0
    %3531 = vmatpush1.msra.mxu0 0.0
    %3532 = vmatprep.subr.mxu0 0.0
    %3533 = vmatpush1.msra.mxu0 0.0
    %3534 = vmatprep.subr.mxu0 0.0
    %3535 = vmatpush1.msra.mxu0 0.0
    %3536 = vmatprep.subr.mxu0 0.0
    %3537 = vmatpush1.msra.mxu0 0.0
    %3538 = vmatprep.subr.mxu0 0.0
    %3539 = vmatpush1.msra.mxu0 0.0
    %3540 = vmatprep.subr.mxu0 0.0
    %3541 = vmatpush1.msra.mxu0 0.0
    %3542 = vmatprep.mubr.f32.mxu0 0.0
    %3543 = vmatmul.mubr.f32.gmra.mrb[0].mxu0 %v3167
    %v3544 = vpop.f32.mrb[0].mxu0
    %v3545 = vadd.f32 0.0, %v3544
    %v3546 = vpop.f32.mrb[0].mxu0
    %v3547 = vadd.f32 0.0, %v3546
    %3548 = vdwg.mxu0
    %3549 = vmatprep.subr.mxu0 %v419
    %3550 = vmatpush1.msra.mxu0 %v418
    %3551 = vmatprep.subr.mxu0 %v423
    %3552 = vmatpush1.msra.mxu0 %v422
    %3553 = vmatprep.subr.mxu0 %v427
    %3554 = vmatpush1.msra.mxu0 %v426
    %3555 = vmatprep.subr.mxu0 %v431
    %3556 = vmatpush1.msra.mxu0 %v430
    %3557 = vmatprep.subr.mxu0 %v435
    %3558 = vmatpush1.msra.mxu0 %v434
    %3559 = vmatprep.subr.mxu0 %v439
    %3560 = vmatpush1.msra.mxu0 %v438
    %3561 = vmatprep.subr.mxu0 %v443
    %3562 = vmatpush1.msra.mxu0 %v442
    %3563 = vmatprep.subr.mxu0 %v447
    %3564 = vmatpush1.msra.mxu0 %v446
    %3565 = vmatprep.subr.mxu0 %v451
    %3566 = vmatpush1.msra.mxu0 %v450
    %3567 = vmatprep.subr.mxu0 %v455
    %3568 = vmatpush1.msra.mxu0 %v454
    %3569 = vmatprep.subr.mxu0 %v459
    %3570 = vmatpush1.msra.mxu0 %v458
    %3571 = vmatprep.subr.mxu0 %v463
    %3572 = vmatpush1.msra.mxu0 %v462
    %3573 = vmatprep.subr.mxu0 %v467
    %3574 = vmatpush1.msra.mxu0 %v466
    %3575 = vmatprep.subr.mxu0 %v471
    %3576 = vmatpush1.msra.mxu0 %v470
    %3577 = vmatprep.subr.mxu0 %v475
    %3578 = vmatpush1.msra.mxu0 %v474
    %3579 = vmatprep.subr.mxu0 %v479
    %3580 = vmatpush1.msra.mxu0 %v478
    %3581 = vmatprep.subr.mxu0 0.0
    %3582 = vmatpush1.msra.mxu0 0.0
    %3583 = vmatprep.subr.mxu0 0.0
    %3584 = vmatpush1.msra.mxu0 0.0
    %3585 = vmatprep.subr.mxu0 0.0
    %3586 = vmatpush1.msra.mxu0 0.0
    %3587 = vmatprep.subr.mxu0 0.0
    %3588 = vmatpush1.msra.mxu0 0.0
    %3589 = vmatprep.subr.mxu0 0.0
    %3590 = vmatpush1.msra.mxu0 0.0
    %3591 = vmatprep.subr.mxu0 0.0
    %3592 = vmatpush1.msra.mxu0 0.0
    %3593 = vmatprep.subr.mxu0 0.0
    %3594 = vmatpush1.msra.mxu0 0.0
    %3595 = vmatprep.subr.mxu0 0.0
    %3596 = vmatpush1.msra.mxu0 0.0
    %3597 = vmatprep.subr.mxu0 0.0
    %3598 = vmatpush1.msra.mxu0 0.0
    %3599 = vmatprep.subr.mxu0 0.0
    %3600 = vmatpush1.msra.mxu0 0.0
    %3601 = vmatprep.subr.mxu0 0.0
    %3602 = vmatpush1.msra.mxu0 0.0
    %3603 = vmatprep.subr.mxu0 0.0
    %3604 = vmatpush1.msra.mxu0 0.0
    %3605 = vmatprep.subr.mxu0 0.0
    %3606 = vmatpush1.msra.mxu0 0.0
    %3607 = vmatprep.subr.mxu0 0.0
    %3608 = vmatpush1.msra.mxu0 0.0
    %3609 = vmatprep.subr.mxu0 0.0
    %3610 = vmatpush1.msra.mxu0 0.0
    %3611 = vmatprep.subr.mxu0 0.0
    %3612 = vmatpush1.msra.mxu0 0.0
    %3613 = vmatprep.mubr.f32.mxu0 0.0
    %3614 = vmatmul.mubr.f32.gmra.mrb[0].mxu0 %v3167
    %v3615 = vpop.f32.mrb[0].mxu0
    %v3616 = vadd.f32 0.0, %v3615
    %v3617 = vpop.f32.mrb[0].mxu0
    %v3618 = vadd.f32 0.0, %v3617
    %3619 = vdwg.mxu0
    %v3620 = vadd.f32 %v3474, %v3545
    %v3621 = vadd.f32 %v3475, %v3547
    %v3622 = vadd.f32 %v3476, %v3616
    %v3623 = vadd.f32 %v3477, %v3618
    %v3624 = vmul.f32 %v3620, 0.5
    %v3625 = vmul.f32 %v3621, 0.5
    %v3626 = vmul.f32 %v3622, 0.5
    %v3627 = vtanh.pop %v3624
    %v3628 = vtanh.pop %v3625
    %v3629 = vtanh.pop %v3626
    %v3630 = vmul.f32 %v3627, 0.5
    %v3631 = vmul.f32 %v3628, 0.5
    %v3632 = vmul.f32 %v3629, 0.5
    %v3633 = vadd.f32 %v3630, 0.5
    %v3634 = vadd.f32 %v3631, 0.5
    %v3635 = vadd.f32 %v3632, 0.5
    %v3636 = vtanh.pop %v3623
    %v3637 = vmul.f32 %v3634, %v3165
    %v3638 = vmul.f32 %v3633, %v3636
    %v3639 = vadd.f32 %v3637, %v3638
    %v3640 = vtanh.pop %v3639
    %v3641 = vmul.f32 %v3635, %v3640
    %3642 = vmatprep.subr.mxu0 %v545
    %3643 = vmatpush1.msra.mxu0 %v544
    %3644 = vmatprep.subr.mxu0 %v549
    %3645 = vmatpush1.msra.mxu0 %v548
    %3646 = vmatprep.subr.mxu0 %v553
    %3647 = vmatpush1.msra.mxu0 %v552
    %3648 = vmatprep.subr.mxu0 %v557
    %3649 = vmatpush1.msra.mxu0 %v556
    %3650 = vmatprep.subr.mxu0 %v561
    %3651 = vmatpush1.msra.mxu0 %v560
    %3652 = vmatprep.subr.mxu0 %v565
    %3653 = vmatpush1.msra.mxu0 %v564
    %3654 = vmatprep.subr.mxu0 %v569
    %3655 = vmatpush1.msra.mxu0 %v568
    %3656 = vmatprep.subr.mxu0 %v573
    %3657 = vmatpush1.msra.mxu0 %v572
    %3658 = vmatprep.subr.mxu0 %v577
    %3659 = vmatpush1.msra.mxu0 %v576
    %3660 = vmatprep.subr.mxu0 %v581
    %3661 = vmatpush1.msra.mxu0 %v580
    %3662 = vmatprep.subr.mxu0 %v585
    %3663 = vmatpush1.msra.mxu0 %v584
    %3664 = vmatprep.subr.mxu0 %v589
    %3665 = vmatpush1.msra.mxu0 %v588
    %3666 = vmatprep.subr.mxu0 %v593
    %3667 = vmatpush1.msra.mxu0 %v592
    %3668 = vmatprep.subr.mxu0 %v597
    %3669 = vmatpush1.msra.mxu0 %v596
    %3670 = vmatprep.subr.mxu0 %v601
    %3671 = vmatpush1.msra.mxu0 %v600
    %3672 = vmatprep.subr.mxu0 %v605
    %3673 = vmatpush1.msra.mxu0 %v604
    %3674 = vmatprep.subr.mxu0 0.0
    %3675 = vmatpush1.msra.mxu0 0.0
    %3676 = vmatprep.subr.mxu0 0.0
    %3677 = vmatpush1.msra.mxu0 0.0
    %3678 = vmatprep.subr.mxu0 0.0
    %3679 = vmatpush1.msra.mxu0 0.0
    %3680 = vmatprep.subr.mxu0 0.0
    %3681 = vmatpush1.msra.mxu0 0.0
    %3682 = vmatprep.subr.mxu0 0.0
    %3683 = vmatpush1.msra.mxu0 0.0
    %3684 = vmatprep.subr.mxu0 0.0
    %3685 = vmatpush1.msra.mxu0 0.0
    %3686 = vmatprep.subr.mxu0 0.0
    %3687 = vmatpush1.msra.mxu0 0.0
    %3688 = vmatprep.subr.mxu0 0.0
    %3689 = vmatpush1.msra.mxu0 0.0
    %3690 = vmatprep.subr.mxu0 0.0
    %3691 = vmatpush1.msra.mxu0 0.0
    %3692 = vmatprep.subr.mxu0 0.0
    %3693 = vmatpush1.msra.mxu0 0.0
    %3694 = vmatprep.subr.mxu0 0.0
    %3695 = vmatpush1.msra.mxu0 0.0
    %3696 = vmatprep.subr.mxu0 0.0
    %3697 = vmatpush1.msra.mxu0 0.0
    %3698 = vmatprep.subr.mxu0 0.0
    %3699 = vmatpush1.msra.mxu0 0.0
    %3700 = vmatprep.subr.mxu0 0.0
    %3701 = vmatpush1.msra.mxu0 0.0
    %3702 = vmatprep.subr.mxu0 0.0
    %3703 = vmatpush1.msra.mxu0 0.0
    %3704 = vmatprep.subr.mxu0 0.0
    %3705 = vmatpush1.msra.mxu0 0.0
    %3706 = vmatprep.mubr.f32.mxu0 0.0
    %3707 = vmatmul.mubr.f32.gmra.mrb[0].mxu0 %v3473
    %v3708 = vpop.f32.mrb[0].mxu0
    %v3709 = vadd.f32 0.0, %v3708
    %v3710 = vpop.f32.mrb[0].mxu0
    %v3711 = vadd.f32 0.0, %v3710
    %3712 = vdwg.mxu0
    %3713 = vmatprep.subr.mxu0 %v547
    %3714 = vmatpush1.msra.mxu0 %v546
    %3715 = vmatprep.subr.mxu0 %v551
    %3716 = vmatpush1.msra.mxu0 %v550
    %3717 = vmatprep.subr.mxu0 %v555
    %3718 = vmatpush1.msra.mxu0 %v554
    %3719 = vmatprep.subr.mxu0 %v559
    %3720 = vmatpush1.msra.mxu0 %v558
    %3721 = vmatprep.subr.mxu0 %v563
    %3722 = vmatpush1.msra.mxu0 %v562
    %3723 = vmatprep.subr.mxu0 %v567
    %3724 = vmatpush1.msra.mxu0 %v566
    %3725 = vmatprep.subr.mxu0 %v571
    %3726 = vmatpush1.msra.mxu0 %v570
    %3727 = vmatprep.subr.mxu0 %v575
    %3728 = vmatpush1.msra.mxu0 %v574
    %3729 = vmatprep.subr.mxu0 %v579
    %3730 = vmatpush1.msra.mxu0 %v578
    %3731 = vmatprep.subr.mxu0 %v583
    %3732 = vmatpush1.msra.mxu0 %v582
    %3733 = vmatprep.subr.mxu0 %v587
    %3734 = vmatpush1.msra.mxu0 %v586
    %3735 = vmatprep.subr.mxu0 %v591
    %3736 = vmatpush1.msra.mxu0 %v590
    %3737 = vmatprep.subr.mxu0 %v595
    %3738 = vmatpush1.msra.mxu0 %v594
    %3739 = vmatprep.subr.mxu0 %v599
    %3740 = vmatpush1.msra.mxu0 %v598
    %3741 = vmatprep.subr.mxu0 %v603
    %3742 = vmatpush1.msra.mxu0 %v602
    %3743 = vmatprep.subr.mxu0 %v607
    %3744 = vmatpush1.msra.mxu0 %v606
    %3745 = vmatprep.subr.mxu0 0.0
    %3746 = vmatpush1.msra.mxu0 0.0
    %3747 = vmatprep.subr.mxu0 0.0
    %3748 = vmatpush1.msra.mxu0 0.0
    %3749 = vmatprep.subr.mxu0 0.0
    %3750 = vmatpush1.msra.mxu0 0.0
    %3751 = vmatprep.subr.mxu0 0.0
    %3752 = vmatpush1.msra.mxu0 0.0
    %3753 = vmatprep.subr.mxu0 0.0
    %3754 = vmatpush1.msra.mxu0 0.0
    %3755 = vmatprep.subr.mxu0 0.0
    %3756 = vmatpush1.msra.mxu0 0.0
    %3757 = vmatprep.subr.mxu0 0.0
    %3758 = vmatpush1.msra.mxu0 0.0
    %3759 = vmatprep.subr.mxu0 0.0
    %3760 = vmatpush1.msra.mxu0 0.0
    %3761 = vmatprep.subr.mxu0 0.0
    %3762 = vmatpush1.msra.mxu0 0.0
    %3763 = vmatprep.subr.mxu0 0.0
    %3764 = vmatpush1.msra.mxu0 0.0
    %3765 = vmatprep.subr.mxu0 0.0
    %3766 = vmatpush1.msra.mxu0 0.0
    %3767 = vmatprep.subr.mxu0 0.0
    %3768 = vmatpush1.msra.mxu0 0.0
    %3769 = vmatprep.subr.mxu0 0.0
    %3770 = vmatpush1.msra.mxu0 0.0
    %3771 = vmatprep.subr.mxu0 0.0
    %3772 = vmatpush1.msra.mxu0 0.0
    %3773 = vmatprep.subr.mxu0 0.0
    %3774 = vmatpush1.msra.mxu0 0.0
    %3775 = vmatprep.subr.mxu0 0.0
    %3776 = vmatpush1.msra.mxu0 0.0
    %3777 = vmatprep.mubr.f32.mxu0 0.0
    %3778 = vmatmul.mubr.f32.gmra.mrb[0].mxu0 %v3473
    %v3779 = vpop.f32.mrb[0].mxu0
    %v3780 = vadd.f32 0.0, %v3779
    %v3781 = vpop.f32.mrb[0].mxu0
    %v3782 = vadd.f32 0.0, %v3781
    %3783 = vdwg.mxu0
    %3784 = vmatprep.subr.mxu0 %v481
    %3785 = vmatpush1.msra.mxu0 %v480
    %3786 = vmatprep.subr.mxu0 %v485
    %3787 = vmatpush1.msra.mxu0 %v484
    %3788 = vmatprep.subr.mxu0 %v489
    %3789 = vmatpush1.msra.mxu0 %v488
    %3790 = vmatprep.subr.mxu0 %v493
    %3791 = vmatpush1.msra.mxu0 %v492
    %3792 = vmatprep.subr.mxu0 %v497
    %3793 = vmatpush1.msra.mxu0 %v496
    %3794 = vmatprep.subr.mxu0 %v501
    %3795 = vmatpush1.msra.mxu0 %v500
    %3796 = vmatprep.subr.mxu0 %v505
    %3797 = vmatpush1.msra.mxu0 %v504
    %3798 = vmatprep.subr.mxu0 %v509
    %3799 = vmatpush1.msra.mxu0 %v508
    %3800 = vmatprep.subr.mxu0 %v513
    %3801 = vmatpush1.msra.mxu0 %v512
    %3802 = vmatprep.subr.mxu0 %v517
    %3803 = vmatpush1.msra.mxu0 %v516
    %3804 = vmatprep.subr.mxu0 %v521
    %3805 = vmatpush1.msra.mxu0 %v520
    %3806 = vmatprep.subr.mxu0 %v525
    %3807 = vmatpush1.msra.mxu0 %v524
    %3808 = vmatprep.subr.mxu0 %v529
    %3809 = vmatpush1.msra.mxu0 %v528
    %3810 = vmatprep.subr.mxu0 %v533
    %3811 = vmatpush1.msra.mxu0 %v532
    %3812 = vmatprep.subr.mxu0 %v537
    %3813 = vmatpush1.msra.mxu0 %v536
    %3814 = vmatprep.subr.mxu0 %v541
    %3815 = vmatpush1.msra.mxu0 %v540
    %3816 = vmatprep.subr.mxu0 0.0
    %3817 = vmatpush1.msra.mxu0 0.0
    %3818 = vmatprep.subr.mxu0 0.0
    %3819 = vmatpush1.msra.mxu0 0.0
    %3820 = vmatprep.subr.mxu0 0.0
    %3821 = vmatpush1.msra.mxu0 0.0
    %3822 = vmatprep.subr.mxu0 0.0
    %3823 = vmatpush1.msra.mxu0 0.0
    %3824 = vmatprep.subr.mxu0 0.0
    %3825 = vmatpush1.msra.mxu0 0.0
    %3826 = vmatprep.subr.mxu0 0.0
    %3827 = vmatpush1.msra.mxu0 0.0
    %3828 = vmatprep.subr.mxu0 0.0
    %3829 = vmatpush1.msra.mxu0 0.0
    %3830 = vmatprep.subr.mxu0 0.0
    %3831 = vmatpush1.msra.mxu0 0.0
    %3832 = vmatprep.subr.mxu0 0.0
    %3833 = vmatpush1.msra.mxu0 0.0
    %3834 = vmatprep.subr.mxu0 0.0
    %3835 = vmatpush1.msra.mxu0 0.0
    %3836 = vmatprep.subr.mxu0 0.0
    %3837 = vmatpush1.msra.mxu0 0.0
    %3838 = vmatprep.subr.mxu0 0.0
    %3839 = vmatpush1.msra.mxu0 0.0
    %3840 = vmatprep.subr.mxu0 0.0
    %3841 = vmatpush1.msra.mxu0 0.0
    %3842 = vmatprep.subr.mxu0 0.0
    %3843 = vmatpush1.msra.mxu0 0.0
    %3844 = vmatprep.subr.mxu0 0.0
    %3845 = vmatpush1.msra.mxu0 0.0
    %3846 = vmatprep.subr.mxu0 0.0
    %3847 = vmatpush1.msra.mxu0 0.0
    %3848 = vmatprep.mubr.f32.mxu0 0.0
    %3849 = vmatmul.mubr.f32.gmra.mrb[0].mxu0 %v3641
    %v3850 = vpop.f32.mrb[0].mxu0
    %v3851 = vadd.f32 %v3709, %v3850
    %v3852 = vpop.f32.mrb[0].mxu0
    %v3853 = vadd.f32 %v3711, %v3852
    %3854 = vdwg.mxu0
    %3855 = vmatprep.subr.mxu0 %v483
    %3856 = vmatpush1.msra.mxu0 %v482
    %3857 = vmatprep.subr.mxu0 %v487
    %3858 = vmatpush1.msra.mxu0 %v486
    %3859 = vmatprep.subr.mxu0 %v491
    %3860 = vmatpush1.msra.mxu0 %v490
    %3861 = vmatprep.subr.mxu0 %v495
    %3862 = vmatpush1.msra.mxu0 %v494
    %3863 = vmatprep.subr.mxu0 %v499
    %3864 = vmatpush1.msra.mxu0 %v498
    %3865 = vmatprep.subr.mxu0 %v503
    %3866 = vmatpush1.msra.mxu0 %v502
    %3867 = vmatprep.subr.mxu0 %v507
    %3868 = vmatpush1.msra.mxu0 %v506
    %3869 = vmatprep.subr.mxu0 %v511
    %3870 = vmatpush1.msra.mxu0 %v510
    %3871 = vmatprep.subr.mxu0 %v515
    %3872 = vmatpush1.msra.mxu0 %v514
    %3873 = vmatprep.subr.mxu0 %v519
    %3874 = vmatpush1.msra.mxu0 %v518
    %3875 = vmatprep.subr.mxu0 %v523
    %3876 = vmatpush1.msra.mxu0 %v522
    %3877 = vmatprep.subr.mxu0 %v527
    %3878 = vmatpush1.msra.mxu0 %v526
    %3879 = vmatprep.subr.mxu0 %v531
    %3880 = vmatpush1.msra.mxu0 %v530
    %3881 = vmatprep.subr.mxu0 %v535
    %3882 = vmatpush1.msra.mxu0 %v534
    %3883 = vmatprep.subr.mxu0 %v539
    %3884 = vmatpush1.msra.mxu0 %v538
    %3885 = vmatprep.subr.mxu0 %v543
    %3886 = vmatpush1.msra.mxu0 %v542
    %3887 = vmatprep.subr.mxu0 0.0
    %3888 = vmatpush1.msra.mxu0 0.0
    %3889 = vmatprep.subr.mxu0 0.0
    %3890 = vmatpush1.msra.mxu0 0.0
    %3891 = vmatprep.subr.mxu0 0.0
    %3892 = vmatpush1.msra.mxu0 0.0
    %3893 = vmatprep.subr.mxu0 0.0
    %3894 = vmatpush1.msra.mxu0 0.0
    %3895 = vmatprep.subr.mxu0 0.0
    %3896 = vmatpush1.msra.mxu0 0.0
    %3897 = vmatprep.subr.mxu0 0.0
    %3898 = vmatpush1.msra.mxu0 0.0
    %3899 = vmatprep.subr.mxu0 0.0
    %3900 = vmatpush1.msra.mxu0 0.0
    %3901 = vmatprep.subr.mxu0 0.0
    %3902 = vmatpush1.msra.mxu0 0.0
    %3903 = vmatprep.subr.mxu0 0.0
    %3904 = vmatpush1.msra.mxu0 0.0
    %3905 = vmatprep.subr.mxu0 0.0
    %3906 = vmatpush1.msra.mxu0 0.0
    %3907 = vmatprep.subr.mxu0 0.0
    %3908 = vmatpush1.msra.mxu0 0.0
    %3909 = vmatprep.subr.mxu0 0.0
    %3910 = vmatpush1.msra.mxu0 0.0
    %3911 = vmatprep.subr.mxu0 0.0
    %3912 = vmatpush1.msra.mxu0 0.0
    %3913 = vmatprep.subr.mxu0 0.0
    %3914 = vmatpush1.msra.mxu0 0.0
    %3915 = vmatprep.subr.mxu0 0.0
    %3916 = vmatpush1.msra.mxu0 0.0
    %3917 = vmatprep.subr.mxu0 0.0
    %3918 = vmatpush1.msra.mxu0 0.0
    %3919 = vmatprep.mubr.f32.mxu0 0.0
    %3920 = vmatmul.mubr.f32.gmra.mrb[0].mxu0 %v3641
    %v3921 = vpop.f32.mrb[0].mxu0
    %v3922 = vadd.f32 %v3780, %v3921
    %v3923 = vpop.f32.mrb[0].mxu0
    %v3924 = vadd.f32 %v3782, %v3923
    %3925 = vdwg.mxu0
    %v3926 = vadd.f32 %v3851, %v1065
    %v3927 = vadd.f32 %v3853, %v1069
    %v3928 = vadd.f32 %v3922, %v1073
    %v3929 = vadd.f32 %v3924, %v1077
    %v3930 = vmul.f32 %v3926, 0.5
    %v3931 = vmul.f32 %v3927, 0.5
    %v3932 = vmul.f32 %v3928, 0.5
    %v3933 = vtanh.pop %v3930
    %v3934 = vtanh.pop %v3931
    %v3935 = vtanh.pop %v3932
    %v3936 = vmul.f32 %v3933, 0.5
    %v3937 = vmul.f32 %v3934, 0.5
    %v3938 = vmul.f32 %v3935, 0.5
    %v3939 = vadd.f32 %v3936, 0.5
    %v3940 = vadd.f32 %v3937, 0.5
    %v3941 = vadd.f32 %v3938, 0.5
    %v3942 = vtanh.pop %v3929
    %v3943 = vmul.f32 %v3940, %v3471
    %v3944 = vmul.f32 %v3939, %v3942
    %v3945 = vadd.f32 %v3943, %v3944
    %v3946 = vtanh.pop %v3945
    %v3947 = vmul.f32 %v3941, %v3946
    %v3948 = vld [vmem:[#allocation2 + $0xe0] sm:$0xff]
    %v3949 = vld [vmem:[#allocation2 + $0xe8] sm:$0xff]
    %v3950 = vld [vmem:[#allocation2 + $0xf0] sm:$0xff]
    %v3951 = vld [vmem:[#allocation2 + $0xf8] sm:$0xff]
    %3952 = vmatprep.subr.mxu0 %v417
    %3953 = vmatpush1.msra.mxu0 %v416
    %3954 = vmatprep.subr.mxu0 %v421
    %3955 = vmatpush1.msra.mxu0 %v420
    %3956 = vmatprep.subr.mxu0 %v425
    %3957 = vmatpush1.msra.mxu0 %v424
    %3958 = vmatprep.subr.mxu0 %v429
    %3959 = vmatpush1.msra.mxu0 %v428
    %3960 = vmatprep.subr.mxu0 %v433
    %3961 = vmatpush1.msra.mxu0 %v432
    %3962 = vmatprep.subr.mxu0 %v437
    %3963 = vmatpush1.msra.mxu0 %v436
    %3964 = vmatprep.subr.mxu0 %v441
    %3965 = vmatpush1.msra.mxu0 %v440
    %3966 = vmatprep.subr.mxu0 %v445
    %3967 = vmatpush1.msra.mxu0 %v444
    %3968 = vmatprep.subr.mxu0 %v449
    %3969 = vmatpush1.msra.mxu0 %v448
    %3970 = vmatprep.subr.mxu0 %v453
    %3971 = vmatpush1.msra.mxu0 %v452
    %3972 = vmatprep.subr.mxu0 %v457
    %3973 = vmatpush1.msra.mxu0 %v456
    %3974 = vmatprep.subr.mxu0 %v461
    %3975 = vmatpush1.msra.mxu0 %v460
    %3976 = vmatprep.subr.mxu0 %v465
    %3977 = vmatpush1.msra.mxu0 %v464
    %3978 = vmatprep.subr.mxu0 %v469
    %3979 = vmatpush1.msra.mxu0 %v468
    %3980 = vmatprep.subr.mxu0 %v473
    %3981 = vmatpush1.msra.mxu0 %v472
    %3982 = vmatprep.subr.mxu0 %v477
    %3983 = vmatpush1.msra.mxu0 %v476
    %3984 = vmatprep.subr.mxu0 0.0
    %3985 = vmatpush1.msra.mxu0 0.0
    %3986 = vmatprep.subr.mxu0 0.0
    %3987 = vmatpush1.msra.mxu0 0.0
    %3988 = vmatprep.subr.mxu0 0.0
    %3989 = vmatpush1.msra.mxu0 0.0
    %3990 = vmatprep.subr.mxu0 0.0
    %3991 = vmatpush1.msra.mxu0 0.0
    %3992 = vmatprep.subr.mxu0 0.0
    %3993 = vmatpush1.msra.mxu0 0.0
    %3994 = vmatprep.subr.mxu0 0.0
    %3995 = vmatpush1.msra.mxu0 0.0
    %3996 = vmatprep.subr.mxu0 0.0
    %3997 = vmatpush1.msra.mxu0 0.0
    %3998 = vmatprep.subr.mxu0 0.0
    %3999 = vmatpush1.msra.mxu0 0.0
    %4000 = vmatprep.subr.mxu0 0.0
    %4001 = vmatpush1.msra.mxu0 0.0
    %4002 = vmatprep.subr.mxu0 0.0
    %4003 = vmatpush1.msra.mxu0 0.0
    %4004 = vmatprep.subr.mxu0 0.0
    %4005 = vmatpush1.msra.mxu0 0.0
    %4006 = vmatprep.subr.mxu0 0.0
    %4007 = vmatpush1.msra.mxu0 0.0
    %4008 = vmatprep.subr.mxu0 0.0
    %4009 = vmatpush1.msra.mxu0 0.0
    %4010 = vmatprep.subr.mxu0 0.0
    %4011 = vmatpush1.msra.mxu0 0.0
    %4012 = vmatprep.subr.mxu0 0.0
    %4013 = vmatpush1.msra.mxu0 0.0
    %4014 = vmatprep.subr.mxu0 0.0
    %4015 = vmatpush1.msra.mxu0 0.0
    %4016 = vmatprep.mubr.f32.mxu0 0.0
    %4017 = vmatmul.mubr.f32.gmra.mrb[0].mxu0 %v3641
    %v4018 = vpop.f32.mrb[0].mxu0
    %v4019 = vadd.f32 0.0, %v4018
    %v4020 = vpop.f32.mrb[0].mxu0
    %v4021 = vadd.f32 0.0, %v4020
    %4022 = vdwg.mxu0
    %4023 = vmatprep.subr.mxu0 %v419
    %4024 = vmatpush1.msra.mxu0 %v418
    %4025 = vmatprep.subr.mxu0 %v423
    %4026 = vmatpush1.msra.mxu0 %v422
    %4027 = vmatprep.subr.mxu0 %v427
    %4028 = vmatpush1.msra.mxu0 %v426
    %4029 = vmatprep.subr.mxu0 %v431
    %4030 = vmatpush1.msra.mxu0 %v430
    %4031 = vmatprep.subr.mxu0 %v435
    %4032 = vmatpush1.msra.mxu0 %v434
    %4033 = vmatprep.subr.mxu0 %v439
    %4034 = vmatpush1.msra.mxu0 %v438
    %4035 = vmatprep.subr.mxu0 %v443
    %4036 = vmatpush1.msra.mxu0 %v442
    %4037 = vmatprep.subr.mxu0 %v447
    %4038 = vmatpush1.msra.mxu0 %v446
    %4039 = vmatprep.subr.mxu0 %v451
    %4040 = vmatpush1.msra.mxu0 %v450
    %4041 = vmatprep.subr.mxu0 %v455
    %4042 = vmatpush1.msra.mxu0 %v454
    %4043 = vmatprep.subr.mxu0 %v459
    %4044 = vmatpush1.msra.mxu0 %v458
    %4045 = vmatprep.subr.mxu0 %v463
    %4046 = vmatpush1.msra.mxu0 %v462
    %4047 = vmatprep.subr.mxu0 %v467
    %4048 = vmatpush1.msra.mxu0 %v466
    %4049 = vmatprep.subr.mxu0 %v471
    %4050 = vmatpush1.msra.mxu0 %v470
    %4051 = vmatprep.subr.mxu0 %v475
    %4052 = vmatpush1.msra.mxu0 %v474
    %4053 = vmatprep.subr.mxu0 %v479
    %4054 = vmatpush1.msra.mxu0 %v478
    %4055 = vmatprep.subr.mxu0 0.0
    %4056 = vmatpush1.msra.mxu0 0.0
    %4057 = vmatprep.subr.mxu0 0.0
    %4058 = vmatpush1.msra.mxu0 0.0
    %4059 = vmatprep.subr.mxu0 0.0
    %4060 = vmatpush1.msra.mxu0 0.0
    %4061 = vmatprep.subr.mxu0 0.0
    %4062 = vmatpush1.msra.mxu0 0.0
    %4063 = vmatprep.subr.mxu0 0.0
    %4064 = vmatpush1.msra.mxu0 0.0
    %4065 = vmatprep.subr.mxu0 0.0
    %4066 = vmatpush1.msra.mxu0 0.0
    %4067 = vmatprep.subr.mxu0 0.0
    %4068 = vmatpush1.msra.mxu0 0.0
    %4069 = vmatprep.subr.mxu0 0.0
    %4070 = vmatpush1.msra.mxu0 0.0
    %4071 = vmatprep.subr.mxu0 0.0
    %4072 = vmatpush1.msra.mxu0 0.0
    %4073 = vmatprep.subr.mxu0 0.0
    %4074 = vmatpush1.msra.mxu0 0.0
    %4075 = vmatprep.subr.mxu0 0.0
    %4076 = vmatpush1.msra.mxu0 0.0
    %4077 = vmatprep.subr.mxu0 0.0
    %4078 = vmatpush1.msra.mxu0 0.0
    %4079 = vmatprep.subr.mxu0 0.0
    %4080 = vmatpush1.msra.mxu0 0.0
    %4081 = vmatprep.subr.mxu0 0.0
    %4082 = vmatpush1.msra.mxu0 0.0
    %4083 = vmatprep.subr.mxu0 0.0
    %4084 = vmatpush1.msra.mxu0 0.0
    %4085 = vmatprep.subr.mxu0 0.0
    %4086 = vmatpush1.msra.mxu0 0.0
    %4087 = vmatprep.mubr.f32.mxu0 0.0
    %4088 = vmatmul.mubr.f32.gmra.mrb[0].mxu0 %v3641
    %v4089 = vpop.f32.mrb[0].mxu0
    %v4090 = vadd.f32 0.0, %v4089
    %v4091 = vpop.f32.mrb[0].mxu0
    %v4092 = vadd.f32 0.0, %v4091
    %4093 = vdwg.mxu0
    %v4094 = vadd.f32 %v3948, %v4019
    %v4095 = vadd.f32 %v3949, %v4021
    %v4096 = vadd.f32 %v3950, %v4090
    %v4097 = vadd.f32 %v3951, %v4092
    %v4098 = vmul.f32 %v4094, 0.5
    %v4099 = vmul.f32 %v4095, 0.5
    %v4100 = vmul.f32 %v4096, 0.5
    %v4101 = vtanh.pop %v4098
    %v4102 = vtanh.pop %v4099
    %v4103 = vtanh.pop %v4100
    %v4104 = vmul.f32 %v4101, 0.5
    %v4105 = vmul.f32 %v4102, 0.5
    %v4106 = vmul.f32 %v4103, 0.5
    %v4107 = vadd.f32 %v4104, 0.5
    %v4108 = vadd.f32 %v4105, 0.5
    %v4109 = vadd.f32 %v4106, 0.5
    %v4110 = vtanh.pop %v4097
    %v4111 = vmul.f32 %v4108, %v3639
    %v4112 = vmul.f32 %v4107, %v4110
    %v4113 = vadd.f32 %v4111, %v4112
    %v4114 = vtanh.pop %v4113
    %v4115 = vmul.f32 %v4109, %v4114
    %4116 = vmatprep.subr.mxu0 %v545
    %4117 = vmatpush1.msra.mxu0 %v544
    %4118 = vmatprep.subr.mxu0 %v549
    %4119 = vmatpush1.msra.mxu0 %v548
    %4120 = vmatprep.subr.mxu0 %v553
    %4121 = vmatpush1.msra.mxu0 %v552
    %4122 = vmatprep.subr.mxu0 %v557
    %4123 = vmatpush1.msra.mxu0 %v556
    %4124 = vmatprep.subr.mxu0 %v561
    %4125 = vmatpush1.msra.mxu0 %v560
    %4126 = vmatprep.subr.mxu0 %v565
    %4127 = vmatpush1.msra.mxu0 %v564
    %4128 = vmatprep.subr.mxu0 %v569
    %4129 = vmatpush1.msra.mxu0 %v568
    %4130 = vmatprep.subr.mxu0 %v573
    %4131 = vmatpush1.msra.mxu0 %v572
    %4132 = vmatprep.subr.mxu0 %v577
    %4133 = vmatpush1.msra.mxu0 %v576
    %4134 = vmatprep.subr.mxu0 %v581
    %4135 = vmatpush1.msra.mxu0 %v580
    %4136 = vmatprep.subr.mxu0 %v585
    %4137 = vmatpush1.msra.mxu0 %v584
    %4138 = vmatprep.subr.mxu0 %v589
    %4139 = vmatpush1.msra.mxu0 %v588
    %4140 = vmatprep.subr.mxu0 %v593
    %4141 = vmatpush1.msra.mxu0 %v592
    %4142 = vmatprep.subr.mxu0 %v597
    %4143 = vmatpush1.msra.mxu0 %v596
    %4144 = vmatprep.subr.mxu0 %v601
    %4145 = vmatpush1.msra.mxu0 %v600
    %4146 = vmatprep.subr.mxu0 %v605
    %4147 = vmatpush1.msra.mxu0 %v604
    %4148 = vmatprep.subr.mxu0 0.0
    %4149 = vmatpush1.msra.mxu0 0.0
    %4150 = vmatprep.subr.mxu0 0.0
    %4151 = vmatpush1.msra.mxu0 0.0
    %4152 = vmatprep.subr.mxu0 0.0
    %4153 = vmatpush1.msra.mxu0 0.0
    %4154 = vmatprep.subr.mxu0 0.0
    %4155 = vmatpush1.msra.mxu0 0.0
    %4156 = vmatprep.subr.mxu0 0.0
    %4157 = vmatpush1.msra.mxu0 0.0
    %4158 = vmatprep.subr.mxu0 0.0
    %4159 = vmatpush1.msra.mxu0 0.0
    %4160 = vmatprep.subr.mxu0 0.0
    %4161 = vmatpush1.msra.mxu0 0.0
    %4162 = vmatprep.subr.mxu0 0.0
    %4163 = vmatpush1.msra.mxu0 0.0
    %4164 = vmatprep.subr.mxu0 0.0
    %4165 = vmatpush1.msra.mxu0 0.0
    %4166 = vmatprep.subr.mxu0 0.0
    %4167 = vmatpush1.msra.mxu0 0.0
    %4168 = vmatprep.subr.mxu0 0.0
    %4169 = vmatpush1.msra.mxu0 0.0
    %4170 = vmatprep.subr.mxu0 0.0
    %4171 = vmatpush1.msra.mxu0 0.0
    %4172 = vmatprep.subr.mxu0 0.0
    %4173 = vmatpush1.msra.mxu0 0.0
    %4174 = vmatprep.subr.mxu0 0.0
    %4175 = vmatpush1.msra.mxu0 0.0
    %4176 = vmatprep.subr.mxu0 0.0
    %4177 = vmatpush1.msra.mxu0 0.0
    %4178 = vmatprep.subr.mxu0 0.0
    %4179 = vmatpush1.msra.mxu0 0.0
    %4180 = vmatprep.mubr.f32.mxu0 0.0
    %4181 = vmatmul.mubr.f32.gmra.mrb[0].mxu0 %v3947
    %v4182 = vpop.f32.mrb[0].mxu0
    %v4183 = vadd.f32 0.0, %v4182
    %v4184 = vpop.f32.mrb[0].mxu0
    %v4185 = vadd.f32 0.0, %v4184
    %4186 = vdwg.mxu0
    %4187 = vmatprep.subr.mxu0 %v547
    %4188 = vmatpush1.msra.mxu0 %v546
    %4189 = vmatprep.subr.mxu0 %v551
    %4190 = vmatpush1.msra.mxu0 %v550
    %4191 = vmatprep.subr.mxu0 %v555
    %4192 = vmatpush1.msra.mxu0 %v554
    %4193 = vmatprep.subr.mxu0 %v559
    %4194 = vmatpush1.msra.mxu0 %v558
    %4195 = vmatprep.subr.mxu0 %v563
    %4196 = vmatpush1.msra.mxu0 %v562
    %4197 = vmatprep.subr.mxu0 %v567
    %4198 = vmatpush1.msra.mxu0 %v566
    %4199 = vmatprep.subr.mxu0 %v571
    %4200 = vmatpush1.msra.mxu0 %v570
    %4201 = vmatprep.subr.mxu0 %v575
    %4202 = vmatpush1.msra.mxu0 %v574
    %4203 = vmatprep.subr.mxu0 %v579
    %4204 = vmatpush1.msra.mxu0 %v578
    %4205 = vmatprep.subr.mxu0 %v583
    %4206 = vmatpush1.msra.mxu0 %v582
    %4207 = vmatprep.subr.mxu0 %v587
    %4208 = vmatpush1.msra.mxu0 %v586
    %4209 = vmatprep.subr.mxu0 %v591
    %4210 = vmatpush1.msra.mxu0 %v590
    %4211 = vmatprep.subr.mxu0 %v595
    %4212 = vmatpush1.msra.mxu0 %v594
    %4213 = vmatprep.subr.mxu0 %v599
    %4214 = vmatpush1.msra.mxu0 %v598
    %4215 = vmatprep.subr.mxu0 %v603
    %4216 = vmatpush1.msra.mxu0 %v602
    %4217 = vmatprep.subr.mxu0 %v607
    %4218 = vmatpush1.msra.mxu0 %v606
    %4219 = vmatprep.subr.mxu0 0.0
    %4220 = vmatpush1.msra.mxu0 0.0
    %4221 = vmatprep.subr.mxu0 0.0
    %4222 = vmatpush1.msra.mxu0 0.0
    %4223 = vmatprep.subr.mxu0 0.0
    %4224 = vmatpush1.msra.mxu0 0.0
    %4225 = vmatprep.subr.mxu0 0.0
    %4226 = vmatpush1.msra.mxu0 0.0
    %4227 = vmatprep.subr.mxu0 0.0
    %4228 = vmatpush1.msra.mxu0 0.0
    %4229 = vmatprep.subr.mxu0 0.0
    %4230 = vmatpush1.msra.mxu0 0.0
    %4231 = vmatprep.subr.mxu0 0.0
    %4232 = vmatpush1.msra.mxu0 0.0
    %4233 = vmatprep.subr.mxu0 0.0
    %4234 = vmatpush1.msra.mxu0 0.0
    %4235 = vmatprep.subr.mxu0 0.0
    %4236 = vmatpush1.msra.mxu0 0.0
    %4237 = vmatprep.subr.mxu0 0.0
    %4238 = vmatpush1.msra.mxu0 0.0
    %4239 = vmatprep.subr.mxu0 0.0
    %4240 = vmatpush1.msra.mxu0 0.0
    %4241 = vmatprep.subr.mxu0 0.0
    %4242 = vmatpush1.msra.mxu0 0.0
    %4243 = vmatprep.subr.mxu0 0.0
    %4244 = vmatpush1.msra.mxu0 0.0
    %4245 = vmatprep.subr.mxu0 0.0
    %4246 = vmatpush1.msra.mxu0 0.0
    %4247 = vmatprep.subr.mxu0 0.0
    %4248 = vmatpush1.msra.mxu0 0.0
    %4249 = vmatprep.subr.mxu0 0.0
    %4250 = vmatpush1.msra.mxu0 0.0
    %4251 = vmatprep.mubr.f32.mxu0 0.0
    %4252 = vmatmul.mubr.f32.gmra.mrb[0].mxu0 %v3947
    %v4253 = vpop.f32.mrb[0].mxu0
    %v4254 = vadd.f32 0.0, %v4253
    %v4255 = vpop.f32.mrb[0].mxu0
    %v4256 = vadd.f32 0.0, %v4255
    %4257 = vdwg.mxu0
    %4258 = vmatprep.subr.mxu0 %v481
    %4259 = vmatpush1.msra.mxu0 %v480
    %4260 = vmatprep.subr.mxu0 %v485
    %4261 = vmatpush1.msra.mxu0 %v484
    %4262 = vmatprep.subr.mxu0 %v489
    %4263 = vmatpush1.msra.mxu0 %v488
    %4264 = vmatprep.subr.mxu0 %v493
    %4265 = vmatpush1.msra.mxu0 %v492
    %4266 = vmatprep.subr.mxu0 %v497
    %4267 = vmatpush1.msra.mxu0 %v496
    %4268 = vmatprep.subr.mxu0 %v501
    %4269 = vmatpush1.msra.mxu0 %v500
    %4270 = vmatprep.subr.mxu0 %v505
    %4271 = vmatpush1.msra.mxu0 %v504
    %4272 = vmatprep.subr.mxu0 %v509
    %4273 = vmatpush1.msra.mxu0 %v508
    %4274 = vmatprep.subr.mxu0 %v513
    %4275 = vmatpush1.msra.mxu0 %v512
    %4276 = vmatprep.subr.mxu0 %v517
    %4277 = vmatpush1.msra.mxu0 %v516
    %4278 = vmatprep.subr.mxu0 %v521
    %4279 = vmatpush1.msra.mxu0 %v520
    %4280 = vmatprep.subr.mxu0 %v525
    %4281 = vmatpush1.msra.mxu0 %v524
    %4282 = vmatprep.subr.mxu0 %v529
    %4283 = vmatpush1.msra.mxu0 %v528
    %4284 = vmatprep.subr.mxu0 %v533
    %4285 = vmatpush1.msra.mxu0 %v532
    %4286 = vmatprep.subr.mxu0 %v537
    %4287 = vmatpush1.msra.mxu0 %v536
    %4288 = vmatprep.subr.mxu0 %v541
    %4289 = vmatpush1.msra.mxu0 %v540
    %4290 = vmatprep.subr.mxu0 0.0
    %4291 = vmatpush1.msra.mxu0 0.0
    %4292 = vmatprep.subr.mxu0 0.0
    %4293 = vmatpush1.msra.mxu0 0.0
    %4294 = vmatprep.subr.mxu0 0.0
    %4295 = vmatpush1.msra.mxu0 0.0
    %4296 = vmatprep.subr.mxu0 0.0
    %4297 = vmatpush1.msra.mxu0 0.0
    %4298 = vmatprep.subr.mxu0 0.0
    %4299 = vmatpush1.msra.mxu0 0.0
    %4300 = vmatprep.subr.mxu0 0.0
    %4301 = vmatpush1.msra.mxu0 0.0
    %4302 = vmatprep.subr.mxu0 0.0
    %4303 = vmatpush1.msra.mxu0 0.0
    %4304 = vmatprep.subr.mxu0 0.0
    %4305 = vmatpush1.msra.mxu0 0.0
    %4306 = vmatprep.subr.mxu0 0.0
    %4307 = vmatpush1.msra.mxu0 0.0
    %4308 = vmatprep.subr.mxu0 0.0
    %4309 = vmatpush1.msra.mxu0 0.0
    %4310 = vmatprep.subr.mxu0 0.0
    %4311 = vmatpush1.msra.mxu0 0.0
    %4312 = vmatprep.subr.mxu0 0.0
    %4313 = vmatpush1.msra.mxu0 0.0
    %4314 = vmatprep.subr.mxu0 0.0
    %4315 = vmatpush1.msra.mxu0 0.0
    %4316 = vmatprep.subr.mxu0 0.0
    %4317 = vmatpush1.msra.mxu0 0.0
    %4318 = vmatprep.subr.mxu0 0.0
    %4319 = vmatpush1.msra.mxu0 0.0
    %4320 = vmatprep.subr.mxu0 0.0
    %4321 = vmatpush1.msra.mxu0 0.0
    %4322 = vmatprep.mubr.f32.mxu0 0.0
    %4323 = vmatmul.mubr.f32.gmra.mrb[0].mxu0 %v4115
    %v4324 = vpop.f32.mrb[0].mxu0
    %v4325 = vadd.f32 %v4183, %v4324
    %v4326 = vpop.f32.mrb[0].mxu0
    %v4327 = vadd.f32 %v4185, %v4326
    %4328 = vdwg.mxu0
    %4329 = vmatprep.subr.mxu0 %v483
    %4330 = vmatpush1.msra.mxu0 %v482
    %4331 = vmatprep.subr.mxu0 %v487
    %4332 = vmatpush1.msra.mxu0 %v486
    %4333 = vmatprep.subr.mxu0 %v491
    %4334 = vmatpush1.msra.mxu0 %v490
    %4335 = vmatprep.subr.mxu0 %v495
    %4336 = vmatpush1.msra.mxu0 %v494
    %4337 = vmatprep.subr.mxu0 %v499
    %4338 = vmatpush1.msra.mxu0 %v498
    %4339 = vmatprep.subr.mxu0 %v503
    %4340 = vmatpush1.msra.mxu0 %v502
    %4341 = vmatprep.subr.mxu0 %v507
    %4342 = vmatpush1.msra.mxu0 %v506
    %4343 = vmatprep.subr.mxu0 %v511
    %4344 = vmatpush1.msra.mxu0 %v510
    %4345 = vmatprep.subr.mxu0 %v515
    %4346 = vmatpush1.msra.mxu0 %v514
    %4347 = vmatprep.subr.mxu0 %v519
    %4348 = vmatpush1.msra.mxu0 %v518
    %4349 = vmatprep.subr.mxu0 %v523
    %4350 = vmatpush1.msra.mxu0 %v522
    %4351 = vmatprep.subr.mxu0 %v527
    %4352 = vmatpush1.msra.mxu0 %v526
    %4353 = vmatprep.subr.mxu0 %v531
    %4354 = vmatpush1.msra.mxu0 %v530
    %4355 = vmatprep.subr.mxu0 %v535
    %4356 = vmatpush1.msra.mxu0 %v534
    %4357 = vmatprep.subr.mxu0 %v539
    %4358 = vmatpush1.msra.mxu0 %v538
    %4359 = vmatprep.subr.mxu0 %v543
    %4360 = vmatpush1.msra.mxu0 %v542
    %4361 = vmatprep.subr.mxu0 0.0
    %4362 = vmatpush1.msra.mxu0 0.0
    %4363 = vmatprep.subr.mxu0 0.0
    %4364 = vmatpush1.msra.mxu0 0.0
    %4365 = vmatprep.subr.mxu0 0.0
    %4366 = vmatpush1.msra.mxu0 0.0
    %4367 = vmatprep.subr.mxu0 0.0
    %4368 = vmatpush1.msra.mxu0 0.0
    %4369 = vmatprep.subr.mxu0 0.0
    %4370 = vmatpush1.msra.mxu0 0.0
    %4371 = vmatprep.subr.mxu0 0.0
    %4372 = vmatpush1.msra.mxu0 0.0
    %4373 = vmatprep.subr.mxu0 0.0
    %4374 = vmatpush1.msra.mxu0 0.0
    %4375 = vmatprep.subr.mxu0 0.0
    %4376 = vmatpush1.msra.mxu0 0.0
    %4377 = vmatprep.subr.mxu0 0.0
    %4378 = vmatpush1.msra.mxu0 0.0
    %4379 = vmatprep.subr.mxu0 0.0
    %4380 = vmatpush1.msra.mxu0 0.0
    %4381 = vmatprep.subr.mxu0 0.0
    %4382 = vmatpush1.msra.mxu0 0.0
    %4383 = vmatprep.subr.mxu0 0.0
    %4384 = vmatpush1.msra.mxu0 0.0
    %4385 = vmatprep.subr.mxu0 0.0
    %4386 = vmatpush1.msra.mxu0 0.0
    %4387 = vmatprep.subr.mxu0 0.0
    %4388 = vmatpush1.msra.mxu0 0.0
    %4389 = vmatprep.subr.mxu0 0.0
    %4390 = vmatpush1.msra.mxu0 0.0
    %4391 = vmatprep.subr.mxu0 0.0
    %4392 = vmatpush1.msra.mxu0 0.0
    %4393 = vmatprep.mubr.f32.mxu0 0.0
    %4394 = vmatmul.mubr.f32.gmra.mrb[0].mxu0 %v4115
    %v4395 = vpop.f32.mrb[0].mxu0
    %v4396 = vadd.f32 %v4254, %v4395
    %v4397 = vpop.f32.mrb[0].mxu0
    %v4398 = vadd.f32 %v4256, %v4397
    %4399 = vdwg.mxu0
    %v4400 = vadd.f32 %v4325, %v1065
    %v4401 = vadd.f32 %v4327, %v1069
    %v4402 = vadd.f32 %v4396, %v1073
    %v4403 = vadd.f32 %v4398, %v1077
    %v4404 = vmul.f32 %v4400, 0.5
    %v4405 = vmul.f32 %v4401, 0.5
    %v4406 = vmul.f32 %v4402, 0.5
    %v4407 = vtanh.pop %v4404
    %v4408 = vtanh.pop %v4405
    %v4409 = vtanh.pop %v4406
    %v4410 = vmul.f32 %v4407, 0.5
    %v4411 = vmul.f32 %v4408, 0.5
    %v4412 = vmul.f32 %v4409, 0.5
    %v4413 = vadd.f32 %v4410, 0.5
    %v4414 = vadd.f32 %v4411, 0.5
    %v4415 = vadd.f32 %v4412, 0.5
    %v4416 = vtanh.pop %v4403
    %v4417 = vmul.f32 %v4414, %v3945
    %v4418 = vmul.f32 %v4413, %v4416
    %v4419 = vadd.f32 %v4417, %v4418
    %v4420 = vtanh.pop %v4419
    %v4421 = vmul.f32 %v4415, %v4420
    %v4422 = vld [vmem:[#allocation8] sm:$0xff]
    %v4423 = vld [vmem:[#allocation8 + $0x8] sm:$0xff]
    %v4424 = vld [vmem:[#allocation8 + $0x10] sm:$0xff]
    %v4425 = vld [vmem:[#allocation8 + $0x18] sm:$0xff]
    %v4426 = vld [vmem:[#allocation8 + $0x20] sm:$0xff]
    %v4427 = vld [vmem:[#allocation8 + $0x28] sm:$0xff]
    %v4428 = vld [vmem:[#allocation8 + $0x30] sm:$0xff]
    %v4429 = vld [vmem:[#allocation8 + $0x38] sm:$0xff]
    %v4430 = vld [vmem:[#allocation8 + $0x40] sm:$0xff]
    %v4431 = vld [vmem:[#allocation8 + $0x48] sm:$0xff]
    %v4432 = vld [vmem:[#allocation8 + $0x50] sm:$0xff]
    %v4433 = vld [vmem:[#allocation8 + $0x58] sm:$0xff]
    %v4434 = vld [vmem:[#allocation8 + $0x60] sm:$0xff]
    %v4435 = vld [vmem:[#allocation8 + $0x68] sm:$0xff]
    %v4436 = vld [vmem:[#allocation8 + $0x70] sm:$0xff]
    %v4437 = vld [vmem:[#allocation8 + $0x78] sm:$0xff]
    %v4438 = vld [vmem:[%s8] sm:$0x1]
    %v4440 = vlaneseq
    %v4441 = vshrl.u32 %v4440, 7
    %v4442 = vsub.s32 0, %v4441
    %v4443 = vrot.slane %v4438, %v4442
    %4445 = vmatprep.subr.mxu0 0.0
    %4446 = vmatpush1.msra.mxu0 %v4422
    %4447 = vmatprep.subr.mxu0 0.0
    %4448 = vmatpush1.msra.mxu0 %v4423
    %4449 = vmatprep.subr.mxu0 0.0
    %4450 = vmatpush1.msra.mxu0 %v4424
    %4451 = vmatprep.subr.mxu0 0.0
    %4452 = vmatpush1.msra.mxu0 %v4425
    %4453 = vmatprep.subr.mxu0 0.0
    %4454 = vmatpush1.msra.mxu0 %v4426
    %4455 = vmatprep.subr.mxu0 0.0
    %4456 = vmatpush1.msra.mxu0 %v4427
    %4457 = vmatprep.subr.mxu0 0.0
    %4458 = vmatpush1.msra.mxu0 %v4428
    %4459 = vmatprep.subr.mxu0 0.0
    %4460 = vmatpush1.msra.mxu0 %v4429
    %4461 = vmatprep.subr.mxu0 0.0
    %4462 = vmatpush1.msra.mxu0 %v4430
    %4463 = vmatprep.subr.mxu0 0.0
    %4464 = vmatpush1.msra.mxu0 %v4431
    %4465 = vmatprep.subr.mxu0 0.0
    %4466 = vmatpush1.msra.mxu0 %v4432
    %4467 = vmatprep.subr.mxu0 0.0
    %4468 = vmatpush1.msra.mxu0 %v4433
    %4469 = vmatprep.subr.mxu0 0.0
    %4470 = vmatpush1.msra.mxu0 %v4434
    %4471 = vmatprep.subr.mxu0 0.0
    %4472 = vmatpush1.msra.mxu0 %v4435
    %4473 = vmatprep.subr.mxu0 0.0
    %4474 = vmatpush1.msra.mxu0 %v4436
    %4475 = vmatprep.subr.mxu0 0.0
    %4476 = vmatpush1.msra.mxu0 %v4437
    %4477 = vmatprep.subr.mxu0 0.0
    %4478 = vmatpush1.msra.mxu0 0.0
    %4479 = vmatprep.subr.mxu0 0.0
    %4480 = vmatpush1.msra.mxu0 0.0
    %4481 = vmatprep.subr.mxu0 0.0
    %4482 = vmatpush1.msra.mxu0 0.0
    %4483 = vmatprep.subr.mxu0 0.0
    %4484 = vmatpush1.msra.mxu0 0.0
    %4485 = vmatprep.subr.mxu0 0.0
    %4486 = vmatpush1.msra.mxu0 0.0
    %4487 = vmatprep.subr.mxu0 0.0
    %4488 = vmatpush1.msra.mxu0 0.0
    %4489 = vmatprep.subr.mxu0 0.0
    %4490 = vmatpush1.msra.mxu0 0.0
    %4491 = vmatprep.subr.mxu0 0.0
    %4492 = vmatpush1.msra.mxu0 0.0
    %4493 = vmatprep.subr.mxu0 0.0
    %4494 = vmatpush1.msra.mxu0 0.0
    %4495 = vmatprep.subr.mxu0 0.0
    %4496 = vmatpush1.msra.mxu0 0.0
    %4497 = vmatprep.subr.mxu0 0.0
    %4498 = vmatpush1.msra.mxu0 0.0
    %4499 = vmatprep.subr.mxu0 0.0
    %4500 = vmatpush1.msra.mxu0 0.0
    %4501 = vmatprep.subr.mxu0 0.0
    %4502 = vmatpush1.msra.mxu0 0.0
    %4503 = vmatprep.subr.mxu0 0.0
    %4504 = vmatpush1.msra.mxu0 0.0
    %4505 = vmatprep.subr.mxu0 0.0
    %4506 = vmatpush1.msra.mxu0 0.0
    %4507 = vmatprep.subr.mxu0 0.0
    %4508 = vmatpush1.msra.mxu0 0.0
    %4509 = vmatprep.mubr.f32.mxu0 0.0
    %4510 = vmatmul.mubr.f32.gmra.mrb[0].mxu0 %v4421
    %v4511 = vpop.f32.mrb[0].mxu0
    %v4512 = vadd.f32 %v4443, %v4511
    %v4513 = vpop.f32.mrb[0].mxu0
    %4514 = vdwg.mxu0
    %4515 = vst [vmem:[%s9] sm:$0xff] %v4512
    // Predicated region
    $region54: #{eeg_lstm_forward.1} parent=1 // pred_check
      _
    $region55: #{eeg_lstm_forward.1} parent=1 // pred_check_branch
      %4517 = sbr.rel (0) target = $region57
    $region56: #{eeg_lstm_forward.1} parent=1 // pred_region
      _
    $region57: #{eeg_lstm_forward.1} parent=1 // pred_fallthru
      _
    // Predicated region
    $region58: #{eeg_lstm_forward.1} parent=1 // pred_check
      _
    $region59: #{eeg_lstm_forward.1} parent=1 // pred_check_branch
      %4519 = sbr.rel (0) target = $region61
    $region60: #{eeg_lstm_forward.1} parent=1 // pred_region
      _
    $region61: #{eeg_lstm_forward.1} parent=1 // pred_fallthru
      _
    %4520 = vsyncpa [#allocation4], 1
    %4521 = vsyncpa [#allocation6], 1
    %4522 = vsyncpa [#allocation9], 1

</llo_original>
